<compile_context>
chip_gen: v6e
topology: v6e:2x2x1
jax: 0.10.0
libtpu: 0.0.40
codegen_flags: <defaults>
</compile_context>

<pallas_src>
import math

import jax
import jax.numpy as jnp
from jax.experimental import pallas as pl
from jax.experimental.pallas import tpu as pltpu  # noqa: F401  (TPU backend assumed)

# ---------------- config (scaled-down ViT-base) ----------------
B = 2                               # batch
C_IN = 3                            # RGB
IMG = 32                            # image size
PATCH = 16                          # patch size (same as vit-base-patch16)
N_PATCH = (IMG // PATCH) ** 2       # 4 patches
SEQ = N_PATCH + 1                   # 5 real tokens (CLS + patches)
SEQ_PAD = 8                         # padded to the 8-sublane tile
BS = B * SEQ_PAD                    # 16 flattened token rows
HID = 128                           # hidden size (one full 128-lane vreg row)
HEADS = 4
HEAD_DIM = HID // HEADS             # 32
MLP = 256                           # intermediate size
LAYERS = 2
N_CLASSES = 16
LN_EPS = 1e-12                      # HF ViT layer_norm_eps
PATCH_DIM = C_IN * PATCH * PATCH    # 768
NEG_INF = -1e30
SCALE = 1.0 / math.sqrt(HEAD_DIM)


# ---------------- shared math helpers (used by kernel AND reference) ----------------
def _layer_norm(x, g, b):
    # x: (M, H), g/b: (1, H)  -- 2-D lane-major params, no per-use broadcast relayout.
    mu = jnp.mean(x, axis=-1, keepdims=True)
    var = jnp.mean((x - mu) ** 2, axis=-1, keepdims=True)
    return (x - mu) * jax.lax.rsqrt(var + LN_EPS) * g + b


def _gelu(x):
    # TODO(synk): HF ViT uses exact (erf) GELU; tanh approximation used here for
    # Mosaic-safe lowering (difference is ~1e-3 relative).
    c = math.sqrt(2.0 / math.pi)
    return 0.5 * x * (1.0 + jnp.tanh(c * (x + 0.044715 * x * x * x)))


# ---------------- fused forward kernel ----------------
def vit_fused_kernel(
    patches_ref, wp_ref, tokadd_ref, bias_ref,
    ln1g_ref, ln1b_ref,
    wq_ref, bq_ref, wk_ref, bk_ref, wv_ref, bv_ref, wo_ref, bo_ref,
    ln2g_ref, ln2b_ref,
    w1_ref, b1_ref, w2_ref, b2_ref,
    lnfg_ref, lnfb_ref, wh_ref, bh_ref,
    o_ref,
):
    # ---- patch embedding directly in padded token layout ----
    # patches_ref: (BS, PATCH_DIM) with CLS / pad rows zeroed on host.
    # tokadd_ref : (BS, HID) = cls+pos[0] on CLS rows, b_patch+pos[i] on patch rows, 0 on pads.
    x = (
        jnp.dot(patches_ref[...], wp_ref[...], preferred_element_type=jnp.float32)
        + tokadd_ref[...]
    )                                                       # (BS, HID) = (16, 128)

    # Additive attention bias (host-built): 0 for same-batch valid keys, -1e30 otherwise.
    # Hoisted broadcast (JAX does not CSE broadcast_in_dim inside the layer loop).
    attn_bias = jnp.broadcast_to(bias_ref[...][None], (HEADS, BS, BS))

    for li in range(LAYERS):                                # static unroll (LAYERS=2)
        # --- multi-head self-attention (pre-LN) ---
        h = _layer_norm(x, ln1g_ref[li], ln1b_ref[li])
        q = (jnp.dot(h, wq_ref[li], preferred_element_type=jnp.float32) + bq_ref[li]) * SCALE
        k = jnp.dot(h, wk_ref[li], preferred_element_type=jnp.float32) + bk_ref[li]
        v = jnp.dot(h, wv_ref[li], preferred_element_type=jnp.float32) + bv_ref[li]

        # Head-batched attention: gather heads once onto a leading batch axis and run a
        # single pair of batched einsums + one softmax for all heads and both batch
        # items (cross-batch / pad-key interactions are removed by attn_bias).
        qh = jnp.stack([q[:, hd * HEAD_DIM:(hd + 1) * HEAD_DIM] for hd in range(HEADS)], axis=0)
        kh = jnp.stack([k[:, hd * HEAD_DIM:(hd + 1) * HEAD_DIM] for hd in range(HEADS)], axis=0)
        vh = jnp.stack([v[:, hd * HEAD_DIM:(hd + 1) * HEAD_DIM] for hd in range(HEADS)], axis=0)

        s = jnp.einsum("hqd,hkd->hqk", qh, kh, preferred_element_type=jnp.float32)
        s = s + attn_bias
        s = s - jnp.max(s, axis=-1, keepdims=True)
        e = jnp.exp(s)
        p = e / jnp.sum(e, axis=-1, keepdims=True)
        ctx = jnp.einsum("hqk,hkd->hqd", p, vh, preferred_element_type=jnp.float32)

        ctx2 = jnp.concatenate([ctx[hd] for hd in range(HEADS)], axis=-1)   # (BS, HID)
        attn_out = (
            jnp.dot(ctx2, wo_ref[li], preferred_element_type=jnp.float32) + bo_ref[li]
        )
        x = x + attn_out                                    # residual

        # --- MLP (pre-LN) ---
        h2 = _layer_norm(x, ln2g_ref[li], ln2b_ref[li])
        inter = _gelu(
            jnp.dot(h2, w1_ref[li], preferred_element_type=jnp.float32) + b1_ref[li]
        )
        mlp_out = (
            jnp.dot(inter, w2_ref[li], preferred_element_type=jnp.float32) + b2_ref[li]
        )
        x = x + mlp_out                                     # residual

    # ---- final LN + classifier head on CLS tokens (row 0 of each padded sequence) ----
    cls_rows = jnp.concatenate(
        [x[b * SEQ_PAD:b * SEQ_PAD + 1, :] for b in range(B)], axis=0
    )                                                       # (B, HID)
    hc = _layer_norm(cls_rows, lnfg_ref[...], lnfb_ref[...])
    o_ref[...] = (
        jnp.dot(hc, wh_ref[...], preferred_element_type=jnp.float32) + bh_ref[...]
    )


# ---------------- host-side layout helpers ----------------
def _extract_patches(pixel_values):
    # non-overlapping 16x16 conv == patch extraction + matmul (extraction is host glue)
    b, c, h, w = pixel_values.shape
    hp, wp = h // PATCH, w // PATCH
    p = pixel_values.reshape(b, c, hp, PATCH, wp, PATCH)
    return p.transpose(0, 2, 4, 1, 3, 5).reshape(b, hp * wp, c * PATCH * PATCH)


# ---------------- wrapper: single fused pallas_call ----------------
def vit_forward(pixel_values, params):
    patches = _extract_patches(pixel_values)                     # (B, N_PATCH, PATCH_DIM)

    # padded token-layout patch pixels: CLS row + pad rows are zero
    patches_padded = jnp.zeros((B, SEQ_PAD, PATCH_DIM), jnp.float32)
    patches_padded = patches_padded.at[:, 1:1 + N_PATCH, :].set(patches)
    patches_padded = patches_padded.reshape(BS, PATCH_DIM)

    # additive token term: folds CLS token, positional embedding and patch-embed bias
    tok_add = jnp.zeros((SEQ_PAD, HID), jnp.float32)
    tok_add = tok_add.at[0, :].set(params["cls_token"][0] + params["pos_emb"][0])
    tok_add = tok_add.at[1:1 + N_PATCH, :].set(
        params["pos_emb"][1:SEQ] + params["b_patch"][0]
    )
    tok_add = jnp.tile(tok_add, (B, 1))                          # (BS, HID)

    # attention bias: block-diagonal across batches, pad keys masked everywhere
    tok_batch = jnp.arange(BS) // SEQ_PAD
    tok_pos = jnp.arange(BS) % SEQ_PAD
    valid_key = tok_pos < SEQ
    attn_bias = jnp.where(
        (tok_batch[:, None] == tok_batch[None, :]) & valid_key[None, :],
        0.0, NEG_INF,
    ).astype(jnp.float32)                                        # (BS, BS)

    L = params["layers"]
    # Everything (weights ~1.5 MiB + tiny activations) fits default scoped VMEM on
    # v5e/v6e/v7x; single grid step, no BlockSpec tiling or vmem_limit override needed.
    return pl.pallas_call(
        vit_fused_kernel,
        out_shape=jax.ShapeDtypeStruct((B, N_CLASSES), jnp.float32),
    )(
        patches_padded, params["w_patch"], tok_add, attn_bias,
        L["ln1_g"], L["ln1_b"],
        L["wq"], L["bq"], L["wk"], L["bk"], L["wv"], L["bv"], L["wo"], L["bo"],
        L["ln2_g"], L["ln2_b"],
        L["w1"], L["b1"], L["w2"], L["b2"],
        params["ln_g"], params["ln_b"], params["w_head"], params["b_head"],
    )


# ---------------- pure-JAX reference (same math, unpadded) ----------------
def vit_reference(pixel_values, params):
    hp = jax.lax.Precision.HIGHEST
    patches = _extract_patches(pixel_values)                     # (B, N_PATCH, PATCH_DIM)
    emb = jnp.matmul(patches, params["w_patch"], precision=hp) + params["b_patch"]
    cls = jnp.broadcast_to(params["cls_token"], (B, 1, HID))
    x = jnp.concatenate([cls, emb], axis=1) + params["pos_emb"][None]   # (B, SEQ, HID)

    L = params["layers"]
    for li in range(LAYERS):
        h = _layer_norm(x, L["ln1_g"][li], L["ln1_b"][li])
        q = jnp.matmul(h, L["wq"][li], precision=hp) + L["bq"][li]
        k = jnp.matmul(h, L["wk"][li], precision=hp) + L["bk"][li]
        v = jnp.matmul(h, L["wv"][li], precision=hp) + L["bv"][li]
        q = q.reshape(B, SEQ, HEADS, HEAD_DIM).transpose(0, 2, 1, 3)
        k = k.reshape(B, SEQ, HEADS, HEAD_DIM).transpose(0, 2, 1, 3)
        v = v.reshape(B, SEQ, HEADS, HEAD_DIM).transpose(0, 2, 1, 3)
        s = jnp.einsum("bhqd,bhkd->bhqk", q, k, precision=hp) * SCALE
        p = jax.nn.softmax(s, axis=-1)
        ctx = jnp.einsum("bhqk,bhkd->bhqd", p, v, precision=hp)
        ctx = ctx.transpose(0, 2, 1, 3).reshape(B, SEQ, HID)
        x = x + jnp.matmul(ctx, L["wo"][li], precision=hp) + L["bo"][li]
        h2 = _layer_norm(x, L["ln2_g"][li], L["ln2_b"][li])
        inter = _gelu(jnp.matmul(h2, L["w1"][li], precision=hp) + L["b1"][li])
        x = x + jnp.matmul(inter, L["w2"][li], precision=hp) + L["b2"][li]

    cls_out = _layer_norm(x[:, 0, :], params["ln_g"], params["ln_b"])
    return jnp.matmul(cls_out, params["w_head"], precision=hp) + params["b_head"]


# ---------------- deterministic parameter init ----------------
def init_params(key):
    std = 0.02

    def dense(k, shape):
        return jax.random.normal(k, shape, jnp.float32) * std

    keys = jax.random.split(key, 4 + LAYERS)
    params = {
        "w_patch": dense(keys[0], (PATCH_DIM, HID)),
        "b_patch": jnp.zeros((1, HID), jnp.float32),
        "cls_token": dense(keys[1], (1, HID)),
        "pos_emb": dense(keys[2], (SEQ, HID)),
        "ln_g": jnp.ones((1, HID), jnp.float32),
        "ln_b": jnp.zeros((1, HID), jnp.float32),
        "w_head": dense(keys[3], (HID, N_CLASSES)),
        "b_head": jnp.zeros((1, N_CLASSES), jnp.float32),
    }

    wq, wk, wv, wo, w1, w2 = [], [], [], [], [], []
    for li in range(LAYERS):
        lk = jax.random.split(keys[4 + li], 6)
        wq.append(dense(lk[0], (HID, HID)))
        wk.append(dense(lk[1], (HID, HID)))
        wv.append(dense(lk[2], (HID, HID)))
        wo.append(dense(lk[3], (HID, HID)))
        w1.append(dense(lk[4], (HID, MLP)))
        w2.append(dense(lk[5], (MLP, HID)))

    params["layers"] = {
        "ln1_g": jnp.ones((LAYERS, 1, HID), jnp.float32),
        "ln1_b": jnp.zeros((LAYERS, 1, HID), jnp.float32),
        "wq": jnp.stack(wq), "bq": jnp.zeros((LAYERS, 1, HID), jnp.float32),
        "wk": jnp.stack(wk), "bk": jnp.zeros((LAYERS, 1, HID), jnp.float32),
        "wv": jnp.stack(wv), "bv": jnp.zeros((LAYERS, 1, HID), jnp.float32),
        "wo": jnp.stack(wo), "bo": jnp.zeros((LAYERS, 1, HID), jnp.float32),
        "ln2_g": jnp.ones((LAYERS, 1, HID), jnp.float32),
        "ln2_b": jnp.zeros((LAYERS, 1, HID), jnp.float32),
        "w1": jnp.stack(w1), "b1": jnp.zeros((LAYERS, 1, MLP), jnp.float32),
        "w2": jnp.stack(w2), "b2": jnp.zeros((LAYERS, 1, HID), jnp.float32),
    }
    return params


if __name__ == "__main__":
    key = jax.random.PRNGKey(0)
    pkey, xkey = jax.random.split(key)
    params = init_params(pkey)

    x = jax.random.normal(xkey, (B, C_IN, IMG, IMG), jnp.float32)  # NCHW pixels

    logits = vit_forward(x, params)
    jax.block_until_ready(logits)

    assert logits.shape == (B, N_CLASSES), logits.shape
    assert bool(jnp.all(jnp.isfinite(logits)))

    # correctness check vs pure-JAX reference (same math, unpadded layout)
    ref = vit_reference(x, params)
    assert bool(jnp.allclose(logits, ref, atol=2e-2, rtol=2e-2)), (
        float(jnp.max(jnp.abs(logits - ref)))
    )

    print("KERNEL_OK")
</pallas_src>

<mosaic_0001>
module attributes {stable_mosaic.version = 11 : i64} {
  func.func @vit_fused_kernel(%arg0: memref<16x768xf32, #tpu.memory_space<vmem>>, %arg1: memref<768x128xf32, #tpu.memory_space<vmem>>, %arg2: memref<16x128xf32, #tpu.memory_space<vmem>>, %arg3: memref<16x16xf32, #tpu.memory_space<vmem>>, %arg4: memref<2x1x128xf32, #tpu.memory_space<vmem>>, %arg5: memref<2x1x128xf32, #tpu.memory_space<vmem>>, %arg6: memref<2x128x128xf32, #tpu.memory_space<vmem>>, %arg7: memref<2x1x128xf32, #tpu.memory_space<vmem>>, %arg8: memref<2x128x128xf32, #tpu.memory_space<vmem>>, %arg9: memref<2x1x128xf32, #tpu.memory_space<vmem>>, %arg10: memref<2x128x128xf32, #tpu.memory_space<vmem>>, %arg11: memref<2x1x128xf32, #tpu.memory_space<vmem>>, %arg12: memref<2x128x128xf32, #tpu.memory_space<vmem>>, %arg13: memref<2x1x128xf32, #tpu.memory_space<vmem>>, %arg14: memref<2x1x128xf32, #tpu.memory_space<vmem>>, %arg15: memref<2x1x128xf32, #tpu.memory_space<vmem>>, %arg16: memref<2x128x256xf32, #tpu.memory_space<vmem>>, %arg17: memref<2x1x256xf32, #tpu.memory_space<vmem>>, %arg18: memref<2x256x128xf32, #tpu.memory_space<vmem>>, %arg19: memref<2x1x128xf32, #tpu.memory_space<vmem>>, %arg20: memref<1x128xf32, #tpu.memory_space<vmem>>, %arg21: memref<1x128xf32, #tpu.memory_space<vmem>>, %arg22: memref<128x16xf32, #tpu.memory_space<vmem>>, %arg23: memref<1x16xf32, #tpu.memory_space<vmem>>, %arg24: memref<2x16xf32, #tpu.memory_space<vmem>>) attributes {dimension_semantics = [], scalar_prefetch = 0 : i64, scratch_operands = 0 : i64, tpu.core_type = #tpu.core_type<tc>} {
    %c0 = arith.constant 0 : index
    %c0_0 = arith.constant 0 : index
    %0 = vector.load %arg0[%c0, %c0_0] : memref<16x768xf32, #tpu.memory_space<vmem>>, vector<16x768xf32>
    %c0_1 = arith.constant 0 : index
    %c0_2 = arith.constant 0 : index
    %1 = vector.load %arg1[%c0_1, %c0_2] : memref<768x128xf32, #tpu.memory_space<vmem>>, vector<768x128xf32>
    %cst = arith.constant dense<0.000000e+00> : vector<16x128xf32>
    %2 = tpu.matmul %0, %1, %cst {dimension_numbers = #tpu.dot_dimension_numbers<[1], [0], [0], [1], [0, 0, 1, 1], [], []>} : vector<16x768xf32>, vector<768x128xf32>, vector<16x128xf32> -> vector<16x128xf32>
    %c0_3 = arith.constant 0 : index
    %c0_4 = arith.constant 0 : index
    %3 = vector.load %arg2[%c0_3, %c0_4] : memref<16x128xf32, #tpu.memory_space<vmem>>, vector<16x128xf32>
    %4 = arith.addf %2, %3 : vector<16x128xf32>
    %c0_5 = arith.constant 0 : index
    %c0_6 = arith.constant 0 : index
    %5 = vector.load %arg3[%c0_5, %c0_6] : memref<16x16xf32, #tpu.memory_space<vmem>>, vector<16x16xf32>
    %6 = vector.shape_cast %5 : vector<16x16xf32> to vector<1x16x16xf32>
    %7 = vector.shape_cast %6 : vector<1x16x16xf32> to vector<1x16x16xf32>
    %8 = vector.broadcast %7 : vector<1x16x16xf32> to vector<4x16x16xf32>
    %c0_7 = arith.constant 0 : index
    %c0_8 = arith.constant 0 : index
    %c0_9 = arith.constant 0 : index
    %9 = vector.load %arg4[%c0_7, %c0_8, %c0_9] : memref<2x1x128xf32, #tpu.memory_space<vmem>>, vector<1x1x128xf32>
    %10 = vector.shape_cast %9 : vector<1x1x128xf32> to vector<1x128xf32>
    %c0_10 = arith.constant 0 : index
    %c0_11 = arith.constant 0 : index
    %c0_12 = arith.constant 0 : index
    %11 = vector.load %arg5[%c0_10, %c0_11, %c0_12] : memref<2x1x128xf32, #tpu.memory_space<vmem>>, vector<1x1x128xf32>
    %12 = vector.shape_cast %11 : vector<1x1x128xf32> to vector<1x128xf32>
    %cst_13 = arith.constant dense<0.000000e+00> : vector<16xf32>
    %13 = vector.multi_reduction <add>, %4, %cst_13 [1] : vector<16x128xf32> to vector<16xf32>
    %14 = vector.shape_cast %13 : vector<16xf32> to vector<16x1xf32>
    %cst_14 = arith.constant 1.280000e+02 : f32
    %15 = vector.broadcast %cst_14 : f32 to vector<16x1xf32>
    %16 = arith.divf %14, %15 : vector<16x1xf32>
    %17 = vector.broadcast %16 : vector<16x1xf32> to vector<16x128xf32>
    %18 = arith.subf %4, %17 : vector<16x128xf32>
    %19 = arith.mulf %18, %18 : vector<16x128xf32>
    %cst_15 = arith.constant dense<0.000000e+00> : vector<16xf32>
    %20 = vector.multi_reduction <add>, %19, %cst_15 [1] : vector<16x128xf32> to vector<16xf32>
    %21 = vector.shape_cast %20 : vector<16xf32> to vector<16x1xf32>
    %cst_16 = arith.constant 1.280000e+02 : f32
    %22 = vector.broadcast %cst_16 : f32 to vector<16x1xf32>
    %23 = arith.divf %21, %22 : vector<16x1xf32>
    %24 = vector.broadcast %16 : vector<16x1xf32> to vector<16x128xf32>
    %25 = arith.subf %4, %24 : vector<16x128xf32>
    %cst_17 = arith.constant 9.99999996E-13 : f32
    %26 = vector.broadcast %cst_17 : f32 to vector<16x1xf32>
    %27 = arith.addf %23, %26 : vector<16x1xf32>
    %28 = math.rsqrt %27 : vector<16x1xf32>
    %29 = vector.broadcast %28 : vector<16x1xf32> to vector<16x128xf32>
    %30 = arith.mulf %25, %29 : vector<16x128xf32>
    %31 = vector.broadcast %10 : vector<1x128xf32> to vector<16x128xf32>
    %32 = arith.mulf %30, %31 : vector<16x128xf32>
    %33 = vector.broadcast %12 : vector<1x128xf32> to vector<16x128xf32>
    %34 = arith.addf %32, %33 : vector<16x128xf32>
    %c0_18 = arith.constant 0 : index
    %c0_19 = arith.constant 0 : index
    %c0_20 = arith.constant 0 : index
    %35 = vector.load %arg6[%c0_18, %c0_19, %c0_20] : memref<2x128x128xf32, #tpu.memory_space<vmem>>, vector<1x128x128xf32>
    %36 = vector.shape_cast %35 : vector<1x128x128xf32> to vector<128x128xf32>
    %cst_21 = arith.constant dense<0.000000e+00> : vector<16x128xf32>
    %37 = tpu.matmul %34, %36, %cst_21 {dimension_numbers = #tpu.dot_dimension_numbers<[1], [0], [0], [1], [0, 0, 1, 1], [], []>} : vector<16x128xf32>, vector<128x128xf32>, vector<16x128xf32> -> vector<16x128xf32>
    %c0_22 = arith.constant 0 : index
    %c0_23 = arith.constant 0 : index
    %c0_24 = arith.constant 0 : index
    %38 = vector.load %arg7[%c0_22, %c0_23, %c0_24] : memref<2x1x128xf32, #tpu.memory_space<vmem>>, vector<1x1x128xf32>
    %39 = vector.shape_cast %38 : vector<1x1x128xf32> to vector<1x128xf32>
    %40 = vector.broadcast %39 : vector<1x128xf32> to vector<16x128xf32>
    %41 = arith.addf %37, %40 : vector<16x128xf32>
    %cst_25 = arith.constant 0.176776692 : f32
    %42 = vector.broadcast %cst_25 : f32 to vector<16x128xf32>
    %43 = arith.mulf %41, %42 : vector<16x128xf32>
    %c0_26 = arith.constant 0 : index
    %c0_27 = arith.constant 0 : index
    %c0_28 = arith.constant 0 : index
    %44 = vector.load %arg8[%c0_26, %c0_27, %c0_28] : memref<2x128x128xf32, #tpu.memory_space<vmem>>, vector<1x128x128xf32>
    %45 = vector.shape_cast %44 : vector<1x128x128xf32> to vector<128x128xf32>
    %cst_29 = arith.constant dense<0.000000e+00> : vector<16x128xf32>
    %46 = tpu.matmul %34, %45, %cst_29 {dimension_numbers = #tpu.dot_dimension_numbers<[1], [0], [0], [1], [0, 0, 1, 1], [], []>} : vector<16x128xf32>, vector<128x128xf32>, vector<16x128xf32> -> vector<16x128xf32>
    %c0_30 = arith.constant 0 : index
    %c0_31 = arith.constant 0 : index
    %c0_32 = arith.constant 0 : index
    %47 = vector.load %arg9[%c0_30, %c0_31, %c0_32] : memref<2x1x128xf32, #tpu.memory_space<vmem>>, vector<1x1x128xf32>
    %48 = vector.shape_cast %47 : vector<1x1x128xf32> to vector<1x128xf32>
    %49 = vector.broadcast %48 : vector<1x128xf32> to vector<16x128xf32>
    %50 = arith.addf %46, %49 : vector<16x128xf32>
    %c0_33 = arith.constant 0 : index
    %c0_34 = arith.constant 0 : index
    %c0_35 = arith.constant 0 : index
    %51 = vector.load %arg10[%c0_33, %c0_34, %c0_35] : memref<2x128x128xf32, #tpu.memory_space<vmem>>, vector<1x128x128xf32>
    %52 = vector.shape_cast %51 : vector<1x128x128xf32> to vector<128x128xf32>
    %cst_36 = arith.constant dense<0.000000e+00> : vector<16x128xf32>
    %53 = tpu.matmul %34, %52, %cst_36 {dimension_numbers = #tpu.dot_dimension_numbers<[1], [0], [0], [1], [0, 0, 1, 1], [], []>} : vector<16x128xf32>, vector<128x128xf32>, vector<16x128xf32> -> vector<16x128xf32>
    %c0_37 = arith.constant 0 : index
    %c0_38 = arith.constant 0 : index
    %c0_39 = arith.constant 0 : index
    %54 = vector.load %arg11[%c0_37, %c0_38, %c0_39] : memref<2x1x128xf32, #tpu.memory_space<vmem>>, vector<1x1x128xf32>
    %55 = vector.shape_cast %54 : vector<1x1x128xf32> to vector<1x128xf32>
    %56 = vector.broadcast %55 : vector<1x128xf32> to vector<16x128xf32>
    %57 = arith.addf %53, %56 : vector<16x128xf32>
    %58 = vector.extract_strided_slice %43 {offsets = [0, 0], sizes = [16, 32], strides = [1, 1]} : vector<16x128xf32> to vector<16x32xf32>
    %59 = vector.extract_strided_slice %43 {offsets = [0, 32], sizes = [16, 32], strides = [1, 1]} : vector<16x128xf32> to vector<16x32xf32>
    %60 = vector.extract_strided_slice %43 {offsets = [0, 64], sizes = [16, 32], strides = [1, 1]} : vector<16x128xf32> to vector<16x32xf32>
    %61 = vector.extract_strided_slice %43 {offsets = [0, 96], sizes = [16, 32], strides = [1, 1]} : vector<16x128xf32> to vector<16x32xf32>
    %62 = vector.shape_cast %58 : vector<16x32xf32> to vector<1x16x32xf32>
    %63 = vector.shape_cast %59 : vector<16x32xf32> to vector<1x16x32xf32>
    %64 = vector.shape_cast %60 : vector<16x32xf32> to vector<1x16x32xf32>
    %65 = vector.shape_cast %61 : vector<16x32xf32> to vector<1x16x32xf32>
    %66 = tpu.concatenate %62, %63, %64, %65 in 0 : vector<1x16x32xf32>, vector<1x16x32xf32>, vector<1x16x32xf32>, vector<1x16x32xf32> -> vector<4x16x32xf32>
    %67 = vector.extract_strided_slice %50 {offsets = [0, 0], sizes = [16, 32], strides = [1, 1]} : vector<16x128xf32> to vector<16x32xf32>
    %68 = vector.extract_strided_slice %50 {offsets = [0, 32], sizes = [16, 32], strides = [1, 1]} : vector<16x128xf32> to vector<16x32xf32>
    %69 = vector.extract_strided_slice %50 {offsets = [0, 64], sizes = [16, 32], strides = [1, 1]} : vector<16x128xf32> to vector<16x32xf32>
    %70 = vector.extract_strided_slice %50 {offsets = [0, 96], sizes = [16, 32], strides = [1, 1]} : vector<16x128xf32> to vector<16x32xf32>
    %71 = vector.shape_cast %67 : vector<16x32xf32> to vector<1x16x32xf32>
    %72 = vector.shape_cast %68 : vector<16x32xf32> to vector<1x16x32xf32>
    %73 = vector.shape_cast %69 : vector<16x32xf32> to vector<1x16x32xf32>
    %74 = vector.shape_cast %70 : vector<16x32xf32> to vector<1x16x32xf32>
    %75 = tpu.concatenate %71, %72, %73, %74 in 0 : vector<1x16x32xf32>, vector<1x16x32xf32>, vector<1x16x32xf32>, vector<1x16x32xf32> -> vector<4x16x32xf32>
    %76 = vector.extract_strided_slice %57 {offsets = [0, 0], sizes = [16, 32], strides = [1, 1]} : vector<16x128xf32> to vector<16x32xf32>
    %77 = vector.extract_strided_slice %57 {offsets = [0, 32], sizes = [16, 32], strides = [1, 1]} : vector<16x128xf32> to vector<16x32xf32>
    %78 = vector.extract_strided_slice %57 {offsets = [0, 64], sizes = [16, 32], strides = [1, 1]} : vector<16x128xf32> to vector<16x32xf32>
    %79 = vector.extract_strided_slice %57 {offsets = [0, 96], sizes = [16, 32], strides = [1, 1]} : vector<16x128xf32> to vector<16x32xf32>
    %80 = vector.shape_cast %76 : vector<16x32xf32> to vector<1x16x32xf32>
    %81 = vector.shape_cast %77 : vector<16x32xf32> to vector<1x16x32xf32>
    %82 = vector.shape_cast %78 : vector<16x32xf32> to vector<1x16x32xf32>
    %83 = vector.shape_cast %79 : vector<16x32xf32> to vector<1x16x32xf32>
    %84 = tpu.concatenate %80, %81, %82, %83 in 0 : vector<1x16x32xf32>, vector<1x16x32xf32>, vector<1x16x32xf32>, vector<1x16x32xf32> -> vector<4x16x32xf32>
    "tpu.trace_start"() <{level = 10 : i32, message = "hqd,hkd->hqk"}> : () -> ()
    %cst_40 = arith.constant dense<0.000000e+00> : vector<4x16x16xf32>
    %85 = tpu.matmul %66, %75, %cst_40 {dimension_numbers = #tpu.dot_dimension_numbers<[2], [2], [1], [1], [0, 0, 0, 1, 1, 1], [0], [0]>} : vector<4x16x32xf32>, vector<4x16x32xf32>, vector<4x16x16xf32> -> vector<4x16x16xf32>
    "tpu.trace_stop"() : () -> ()
    %86 = arith.addf %85, %8 : vector<4x16x16xf32>
    %cst_41 = arith.constant dense<0xFF800000> : vector<4x16xf32>
    %87 = vector.multi_reduction <maximumf>, %86, %cst_41 [2] : vector<4x16x16xf32> to vector<4x16xf32>
    %88 = vector.shape_cast %87 : vector<4x16xf32> to vector<4x16x1xf32>
    %89 = vector.broadcast %88 : vector<4x16x1xf32> to vector<4x16x16xf32>
    %90 = arith.subf %86, %89 : vector<4x16x16xf32>
    %91 = math.exp %90 : vector<4x16x16xf32>
    %cst_42 = arith.constant dense<0.000000e+00> : vector<4x16xf32>
    %92 = vector.multi_reduction <add>, %91, %cst_42 [2] : vector<4x16x16xf32> to vector<4x16xf32>
    %93 = vector.shape_cast %92 : vector<4x16xf32> to vector<4x16x1xf32>
    %94 = vector.broadcast %93 : vector<4x16x1xf32> to vector<4x16x16xf32>
    %95 = arith.divf %91, %94 : vector<4x16x16xf32>
    "tpu.trace_start"() <{level = 10 : i32, message = "hqk,hkd->hqd"}> : () -> ()
    %cst_43 = arith.constant dense<0.000000e+00> : vector<4x16x32xf32>
    %96 = tpu.matmul %95, %84, %cst_43 {dimension_numbers = #tpu.dot_dimension_numbers<[2], [1], [1], [2], [0, 0, 0, 1, 1, 2], [0], [0]>} : vector<4x16x16xf32>, vector<4x16x32xf32>, vector<4x16x32xf32> -> vector<4x16x32xf32>
    "tpu.trace_stop"() : () -> ()
    %97 = vector.extract_strided_slice %96 {offsets = [0, 0, 0], sizes = [1, 16, 32], strides = [1, 1, 1]} : vector<4x16x32xf32> to vector<1x16x32xf32>
    %98 = vector.shape_cast %97 : vector<1x16x32xf32> to vector<16x32xf32>
    %99 = vector.extract_strided_slice %96 {offsets = [1, 0, 0], sizes = [1, 16, 32], strides = [1, 1, 1]} : vector<4x16x32xf32> to vector<1x16x32xf32>
    %100 = vector.shape_cast %99 : vector<1x16x32xf32> to vector<16x32xf32>
    %101 = vector.extract_strided_slice %96 {offsets = [2, 0, 0], sizes = [1, 16, 32], strides = [1, 1, 1]} : vector<4x16x32xf32> to vector<1x16x32xf32>
    %102 = vector.shape_cast %101 : vector<1x16x32xf32> to vector<16x32xf32>
    %103 = vector.extract_strided_slice %96 {offsets = [3, 0, 0], sizes = [1, 16, 32], strides = [1, 1, 1]} : vector<4x16x32xf32> to vector<1x16x32xf32>
    %104 = vector.shape_cast %103 : vector<1x16x32xf32> to vector<16x32xf32>
    %105 = tpu.concatenate %98, %100, %102, %104 in 1 : vector<16x32xf32>, vector<16x32xf32>, vector<16x32xf32>, vector<16x32xf32> -> vector<16x128xf32>
    %c0_44 = arith.constant 0 : index
    %c0_45 = arith.constant 0 : index
    %c0_46 = arith.constant 0 : index
    %106 = vector.load %arg12[%c0_44, %c0_45, %c0_46] : memref<2x128x128xf32, #tpu.memory_space<vmem>>, vector<1x128x128xf32>
    %107 = vector.shape_cast %106 : vector<1x128x128xf32> to vector<128x128xf32>
    %cst_47 = arith.constant dense<0.000000e+00> : vector<16x128xf32>
    %108 = tpu.matmul %105, %107, %cst_47 {dimension_numbers = #tpu.dot_dimension_numbers<[1], [0], [0], [1], [0, 0, 1, 1], [], []>} : vector<16x128xf32>, vector<128x128xf32>, vector<16x128xf32> -> vector<16x128xf32>
    %c0_48 = arith.constant 0 : index
    %c0_49 = arith.constant 0 : index
    %c0_50 = arith.constant 0 : index
    %109 = vector.load %arg13[%c0_48, %c0_49, %c0_50] : memref<2x1x128xf32, #tpu.memory_space<vmem>>, vector<1x1x128xf32>
    %110 = vector.shape_cast %109 : vector<1x1x128xf32> to vector<1x128xf32>
    %111 = vector.broadcast %110 : vector<1x128xf32> to vector<16x128xf32>
    %112 = arith.addf %108, %111 : vector<16x128xf32>
    %113 = arith.addf %4, %112 : vector<16x128xf32>
    %c0_51 = arith.constant 0 : index
    %c0_52 = arith.constant 0 : index
    %c0_53 = arith.constant 0 : index
    %114 = vector.load %arg14[%c0_51, %c0_52, %c0_53] : memref<2x1x128xf32, #tpu.memory_space<vmem>>, vector<1x1x128xf32>
    %115 = vector.shape_cast %114 : vector<1x1x128xf32> to vector<1x128xf32>
    %c0_54 = arith.constant 0 : index
    %c0_55 = arith.constant 0 : index
    %c0_56 = arith.constant 0 : index
    %116 = vector.load %arg15[%c0_54, %c0_55, %c0_56] : memref<2x1x128xf32, #tpu.memory_space<vmem>>, vector<1x1x128xf32>
    %117 = vector.shape_cast %116 : vector<1x1x128xf32> to vector<1x128xf32>
    %cst_57 = arith.constant dense<0.000000e+00> : vector<16xf32>
    %118 = vector.multi_reduction <add>, %113, %cst_57 [1] : vector<16x128xf32> to vector<16xf32>
    %119 = vector.shape_cast %118 : vector<16xf32> to vector<16x1xf32>
    %cst_58 = arith.constant 1.280000e+02 : f32
    %120 = vector.broadcast %cst_58 : f32 to vector<16x1xf32>
    %121 = arith.divf %119, %120 : vector<16x1xf32>
    %122 = vector.broadcast %121 : vector<16x1xf32> to vector<16x128xf32>
    %123 = arith.subf %113, %122 : vector<16x128xf32>
    %124 = arith.mulf %123, %123 : vector<16x128xf32>
    %cst_59 = arith.constant dense<0.000000e+00> : vector<16xf32>
    %125 = vector.multi_reduction <add>, %124, %cst_59 [1] : vector<16x128xf32> to vector<16xf32>
    %126 = vector.shape_cast %125 : vector<16xf32> to vector<16x1xf32>
    %cst_60 = arith.constant 1.280000e+02 : f32
    %127 = vector.broadcast %cst_60 : f32 to vector<16x1xf32>
    %128 = arith.divf %126, %127 : vector<16x1xf32>
    %129 = vector.broadcast %121 : vector<16x1xf32> to vector<16x128xf32>
    %130 = arith.subf %113, %129 : vector<16x128xf32>
    %cst_61 = arith.constant 9.99999996E-13 : f32
    %131 = vector.broadcast %cst_61 : f32 to vector<16x1xf32>
    %132 = arith.addf %128, %131 : vector<16x1xf32>
    %133 = math.rsqrt %132 : vector<16x1xf32>
    %134 = vector.broadcast %133 : vector<16x1xf32> to vector<16x128xf32>
    %135 = arith.mulf %130, %134 : vector<16x128xf32>
    %136 = vector.broadcast %115 : vector<1x128xf32> to vector<16x128xf32>
    %137 = arith.mulf %135, %136 : vector<16x128xf32>
    %138 = vector.broadcast %117 : vector<1x128xf32> to vector<16x128xf32>
    %139 = arith.addf %137, %138 : vector<16x128xf32>
    %c0_62 = arith.constant 0 : index
    %c0_63 = arith.constant 0 : index
    %c0_64 = arith.constant 0 : index
    %140 = vector.load %arg16[%c0_62, %c0_63, %c0_64] : memref<2x128x256xf32, #tpu.memory_space<vmem>>, vector<1x128x256xf32>
    %141 = vector.shape_cast %140 : vector<1x128x256xf32> to vector<128x256xf32>
    %cst_65 = arith.constant dense<0.000000e+00> : vector<16x256xf32>
    %142 = tpu.matmul %139, %141, %cst_65 {dimension_numbers = #tpu.dot_dimension_numbers<[1], [0], [0], [1], [0, 0, 1, 1], [], []>} : vector<16x128xf32>, vector<128x256xf32>, vector<16x256xf32> -> vector<16x256xf32>
    %c0_66 = arith.constant 0 : index
    %c0_67 = arith.constant 0 : index
    %c0_68 = arith.constant 0 : index
    %143 = vector.load %arg17[%c0_66, %c0_67, %c0_68] : memref<2x1x256xf32, #tpu.memory_space<vmem>>, vector<1x1x256xf32>
    %144 = vector.shape_cast %143 : vector<1x1x256xf32> to vector<1x256xf32>
    %145 = vector.broadcast %144 : vector<1x256xf32> to vector<16x256xf32>
    %146 = arith.addf %142, %145 : vector<16x256xf32>
    %cst_69 = arith.constant 5.000000e-01 : f32
    %147 = vector.broadcast %cst_69 : f32 to vector<16x256xf32>
    %148 = arith.mulf %147, %146 : vector<16x256xf32>
    %cst_70 = arith.constant 4.471500e-02 : f32
    %149 = vector.broadcast %cst_70 : f32 to vector<16x256xf32>
    %150 = arith.mulf %149, %146 : vector<16x256xf32>
    %151 = arith.mulf %150, %146 : vector<16x256xf32>
    %152 = arith.mulf %151, %146 : vector<16x256xf32>
    %153 = arith.addf %146, %152 : vector<16x256xf32>
    %cst_71 = arith.constant 0.797884583 : f32
    %154 = vector.broadcast %cst_71 : f32 to vector<16x256xf32>
    %155 = arith.mulf %154, %153 : vector<16x256xf32>
    %156 = math.tanh %155 : vector<16x256xf32>
    %cst_72 = arith.constant 1.000000e+00 : f32
    %157 = vector.broadcast %cst_72 : f32 to vector<16x256xf32>
    %158 = arith.addf %157, %156 : vector<16x256xf32>
    %159 = arith.mulf %148, %158 : vector<16x256xf32>
    %c0_73 = arith.constant 0 : index
    %c0_74 = arith.constant 0 : index
    %c0_75 = arith.constant 0 : index
    %160 = vector.load %arg18[%c0_73, %c0_74, %c0_75] : memref<2x256x128xf32, #tpu.memory_space<vmem>>, vector<1x256x128xf32>
    %161 = vector.shape_cast %160 : vector<1x256x128xf32> to vector<256x128xf32>
    %cst_76 = arith.constant dense<0.000000e+00> : vector<16x128xf32>
    %162 = tpu.matmul %159, %161, %cst_76 {dimension_numbers = #tpu.dot_dimension_numbers<[1], [0], [0], [1], [0, 0, 1, 1], [], []>} : vector<16x256xf32>, vector<256x128xf32>, vector<16x128xf32> -> vector<16x128xf32>
    %c0_77 = arith.constant 0 : index
    %c0_78 = arith.constant 0 : index
    %c0_79 = arith.constant 0 : index
    %163 = vector.load %arg19[%c0_77, %c0_78, %c0_79] : memref<2x1x128xf32, #tpu.memory_space<vmem>>, vector<1x1x128xf32>
    %164 = vector.shape_cast %163 : vector<1x1x128xf32> to vector<1x128xf32>
    %165 = vector.broadcast %164 : vector<1x128xf32> to vector<16x128xf32>
    %166 = arith.addf %162, %165 : vector<16x128xf32>
    %167 = arith.addf %113, %166 : vector<16x128xf32>
    %c1 = arith.constant 1 : index
    %c0_80 = arith.constant 0 : index
    %c0_81 = arith.constant 0 : index
    %168 = vector.load %arg4[%c1, %c0_80, %c0_81] : memref<2x1x128xf32, #tpu.memory_space<vmem>>, vector<1x1x128xf32>
    %169 = vector.shape_cast %168 : vector<1x1x128xf32> to vector<1x128xf32>
    %c1_82 = arith.constant 1 : index
    %c0_83 = arith.constant 0 : index
    %c0_84 = arith.constant 0 : index
    %170 = vector.load %arg5[%c1_82, %c0_83, %c0_84] : memref<2x1x128xf32, #tpu.memory_space<vmem>>, vector<1x1x128xf32>
    %171 = vector.shape_cast %170 : vector<1x1x128xf32> to vector<1x128xf32>
    %cst_85 = arith.constant dense<0.000000e+00> : vector<16xf32>
    %172 = vector.multi_reduction <add>, %167, %cst_85 [1] : vector<16x128xf32> to vector<16xf32>
    %173 = vector.shape_cast %172 : vector<16xf32> to vector<16x1xf32>
    %cst_86 = arith.constant 1.280000e+02 : f32
    %174 = vector.broadcast %cst_86 : f32 to vector<16x1xf32>
    %175 = arith.divf %173, %174 : vector<16x1xf32>
    %176 = vector.broadcast %175 : vector<16x1xf32> to vector<16x128xf32>
    %177 = arith.subf %167, %176 : vector<16x128xf32>
    %178 = arith.mulf %177, %177 : vector<16x128xf32>
    %cst_87 = arith.constant dense<0.000000e+00> : vector<16xf32>
    %179 = vector.multi_reduction <add>, %178, %cst_87 [1] : vector<16x128xf32> to vector<16xf32>
    %180 = vector.shape_cast %179 : vector<16xf32> to vector<16x1xf32>
    %cst_88 = arith.constant 1.280000e+02 : f32
    %181 = vector.broadcast %cst_88 : f32 to vector<16x1xf32>
    %182 = arith.divf %180, %181 : vector<16x1xf32>
    %183 = vector.broadcast %175 : vector<16x1xf32> to vector<16x128xf32>
    %184 = arith.subf %167, %183 : vector<16x128xf32>
    %cst_89 = arith.constant 9.99999996E-13 : f32
    %185 = vector.broadcast %cst_89 : f32 to vector<16x1xf32>
    %186 = arith.addf %182, %185 : vector<16x1xf32>
    %187 = math.rsqrt %186 : vector<16x1xf32>
    %188 = vector.broadcast %187 : vector<16x1xf32> to vector<16x128xf32>
    %189 = arith.mulf %184, %188 : vector<16x128xf32>
    %190 = vector.broadcast %169 : vector<1x128xf32> to vector<16x128xf32>
    %191 = arith.mulf %189, %190 : vector<16x128xf32>
    %192 = vector.broadcast %171 : vector<1x128xf32> to vector<16x128xf32>
    %193 = arith.addf %191, %192 : vector<16x128xf32>
    %c1_90 = arith.constant 1 : index
    %c0_91 = arith.constant 0 : index
    %c0_92 = arith.constant 0 : index
    %194 = vector.load %arg6[%c1_90, %c0_91, %c0_92] : memref<2x128x128xf32, #tpu.memory_space<vmem>>, vector<1x128x128xf32>
    %195 = vector.shape_cast %194 : vector<1x128x128xf32> to vector<128x128xf32>
    %cst_93 = arith.constant dense<0.000000e+00> : vector<16x128xf32>
    %196 = tpu.matmul %193, %195, %cst_93 {dimension_numbers = #tpu.dot_dimension_numbers<[1], [0], [0], [1], [0, 0, 1, 1], [], []>} : vector<16x128xf32>, vector<128x128xf32>, vector<16x128xf32> -> vector<16x128xf32>
    %c1_94 = arith.constant 1 : index
    %c0_95 = arith.constant 0 : index
    %c0_96 = arith.constant 0 : index
    %197 = vector.load %arg7[%c1_94, %c0_95, %c0_96] : memref<2x1x128xf32, #tpu.memory_space<vmem>>, vector<1x1x128xf32>
    %198 = vector.shape_cast %197 : vector<1x1x128xf32> to vector<1x128xf32>
    %199 = vector.broadcast %198 : vector<1x128xf32> to vector<16x128xf32>
    %200 = arith.addf %196, %199 : vector<16x128xf32>
    %cst_97 = arith.constant 0.176776692 : f32
    %201 = vector.broadcast %cst_97 : f32 to vector<16x128xf32>
    %202 = arith.mulf %200, %201 : vector<16x128xf32>
    %c1_98 = arith.constant 1 : index
    %c0_99 = arith.constant 0 : index
    %c0_100 = arith.constant 0 : index
    %203 = vector.load %arg8[%c1_98, %c0_99, %c0_100] : memref<2x128x128xf32, #tpu.memory_space<vmem>>, vector<1x128x128xf32>
    %204 = vector.shape_cast %203 : vector<1x128x128xf32> to vector<128x128xf32>
    %cst_101 = arith.constant dense<0.000000e+00> : vector<16x128xf32>
    %205 = tpu.matmul %193, %204, %cst_101 {dimension_numbers = #tpu.dot_dimension_numbers<[1], [0], [0], [1], [0, 0, 1, 1], [], []>} : vector<16x128xf32>, vector<128x128xf32>, vector<16x128xf32> -> vector<16x128xf32>
    %c1_102 = arith.constant 1 : index
    %c0_103 = arith.constant 0 : index
    %c0_104 = arith.constant 0 : index
    %206 = vector.load %arg9[%c1_102, %c0_103, %c0_104] : memref<2x1x128xf32, #tpu.memory_space<vmem>>, vector<1x1x128xf32>
    %207 = vector.shape_cast %206 : vector<1x1x128xf32> to vector<1x128xf32>
    %208 = vector.broadcast %207 : vector<1x128xf32> to vector<16x128xf32>
    %209 = arith.addf %205, %208 : vector<16x128xf32>
    %c1_105 = arith.constant 1 : index
    %c0_106 = arith.constant 0 : index
    %c0_107 = arith.constant 0 : index
    %210 = vector.load %arg10[%c1_105, %c0_106, %c0_107] : memref<2x128x128xf32, #tpu.memory_space<vmem>>, vector<1x128x128xf32>
    %211 = vector.shape_cast %210 : vector<1x128x128xf32> to vector<128x128xf32>
    %cst_108 = arith.constant dense<0.000000e+00> : vector<16x128xf32>
    %212 = tpu.matmul %193, %211, %cst_108 {dimension_numbers = #tpu.dot_dimension_numbers<[1], [0], [0], [1], [0, 0, 1, 1], [], []>} : vector<16x128xf32>, vector<128x128xf32>, vector<16x128xf32> -> vector<16x128xf32>
    %c1_109 = arith.constant 1 : index
    %c0_110 = arith.constant 0 : index
    %c0_111 = arith.constant 0 : index
    %213 = vector.load %arg11[%c1_109, %c0_110, %c0_111] : memref<2x1x128xf32, #tpu.memory_space<vmem>>, vector<1x1x128xf32>
    %214 = vector.shape_cast %213 : vector<1x1x128xf32> to vector<1x128xf32>
    %215 = vector.broadcast %214 : vector<1x128xf32> to vector<16x128xf32>
    %216 = arith.addf %212, %215 : vector<16x128xf32>
    %217 = vector.extract_strided_slice %202 {offsets = [0, 0], sizes = [16, 32], strides = [1, 1]} : vector<16x128xf32> to vector<16x32xf32>
    %218 = vector.extract_strided_slice %202 {offsets = [0, 32], sizes = [16, 32], strides = [1, 1]} : vector<16x128xf32> to vector<16x32xf32>
    %219 = vector.extract_strided_slice %202 {offsets = [0, 64], sizes = [16, 32], strides = [1, 1]} : vector<16x128xf32> to vector<16x32xf32>
    %220 = vector.extract_strided_slice %202 {offsets = [0, 96], sizes = [16, 32], strides = [1, 1]} : vector<16x128xf32> to vector<16x32xf32>
    %221 = vector.shape_cast %217 : vector<16x32xf32> to vector<1x16x32xf32>
    %222 = vector.shape_cast %218 : vector<16x32xf32> to vector<1x16x32xf32>
    %223 = vector.shape_cast %219 : vector<16x32xf32> to vector<1x16x32xf32>
    %224 = vector.shape_cast %220 : vector<16x32xf32> to vector<1x16x32xf32>
    %225 = tpu.concatenate %221, %222, %223, %224 in 0 : vector<1x16x32xf32>, vector<1x16x32xf32>, vector<1x16x32xf32>, vector<1x16x32xf32> -> vector<4x16x32xf32>
    %226 = vector.extract_strided_slice %209 {offsets = [0, 0], sizes = [16, 32], strides = [1, 1]} : vector<16x128xf32> to vector<16x32xf32>
    %227 = vector.extract_strided_slice %209 {offsets = [0, 32], sizes = [16, 32], strides = [1, 1]} : vector<16x128xf32> to vector<16x32xf32>
    %228 = vector.extract_strided_slice %209 {offsets = [0, 64], sizes = [16, 32], strides = [1, 1]} : vector<16x128xf32> to vector<16x32xf32>
    %229 = vector.extract_strided_slice %209 {offsets = [0, 96], sizes = [16, 32], strides = [1, 1]} : vector<16x128xf32> to vector<16x32xf32>
    %230 = vector.shape_cast %226 : vector<16x32xf32> to vector<1x16x32xf32>
    %231 = vector.shape_cast %227 : vector<16x32xf32> to vector<1x16x32xf32>
    %232 = vector.shape_cast %228 : vector<16x32xf32> to vector<1x16x32xf32>
    %233 = vector.shape_cast %229 : vector<16x32xf32> to vector<1x16x32xf32>
    %234 = tpu.concatenate %230, %231, %232, %233 in 0 : vector<1x16x32xf32>, vector<1x16x32xf32>, vector<1x16x32xf32>, vector<1x16x32xf32> -> vector<4x16x32xf32>
    %235 = vector.extract_strided_slice %216 {offsets = [0, 0], sizes = [16, 32], strides = [1, 1]} : vector<16x128xf32> to vector<16x32xf32>
    %236 = vector.extract_strided_slice %216 {offsets = [0, 32], sizes = [16, 32], strides = [1, 1]} : vector<16x128xf32> to vector<16x32xf32>
    %237 = vector.extract_strided_slice %216 {offsets = [0, 64], sizes = [16, 32], strides = [1, 1]} : vector<16x128xf32> to vector<16x32xf32>
    %238 = vector.extract_strided_slice %216 {offsets = [0, 96], sizes = [16, 32], strides = [1, 1]} : vector<16x128xf32> to vector<16x32xf32>
    %239 = vector.shape_cast %235 : vector<16x32xf32> to vector<1x16x32xf32>
    %240 = vector.shape_cast %236 : vector<16x32xf32> to vector<1x16x32xf32>
    %241 = vector.shape_cast %237 : vector<16x32xf32> to vector<1x16x32xf32>
    %242 = vector.shape_cast %238 : vector<16x32xf32> to vector<1x16x32xf32>
    %243 = tpu.concatenate %239, %240, %241, %242 in 0 : vector<1x16x32xf32>, vector<1x16x32xf32>, vector<1x16x32xf32>, vector<1x16x32xf32> -> vector<4x16x32xf32>
    "tpu.trace_start"() <{level = 10 : i32, message = "hqd,hkd->hqk"}> : () -> ()
    %cst_112 = arith.constant dense<0.000000e+00> : vector<4x16x16xf32>
    %244 = tpu.matmul %225, %234, %cst_112 {dimension_numbers = #tpu.dot_dimension_numbers<[2], [2], [1], [1], [0, 0, 0, 1, 1, 1], [0], [0]>} : vector<4x16x32xf32>, vector<4x16x32xf32>, vector<4x16x16xf32> -> vector<4x16x16xf32>
    "tpu.trace_stop"() : () -> ()
    %245 = arith.addf %244, %8 : vector<4x16x16xf32>
    %cst_113 = arith.constant dense<0xFF800000> : vector<4x16xf32>
    %246 = vector.multi_reduction <maximumf>, %245, %cst_113 [2] : vector<4x16x16xf32> to vector<4x16xf32>
    %247 = vector.shape_cast %246 : vector<4x16xf32> to vector<4x16x1xf32>
    %248 = vector.broadcast %247 : vector<4x16x1xf32> to vector<4x16x16xf32>
    %249 = arith.subf %245, %248 : vector<4x16x16xf32>
    %250 = math.exp %249 : vector<4x16x16xf32>
    %cst_114 = arith.constant dense<0.000000e+00> : vector<4x16xf32>
    %251 = vector.multi_reduction <add>, %250, %cst_114 [2] : vector<4x16x16xf32> to vector<4x16xf32>
    %252 = vector.shape_cast %251 : vector<4x16xf32> to vector<4x16x1xf32>
    %253 = vector.broadcast %252 : vector<4x16x1xf32> to vector<4x16x16xf32>
    %254 = arith.divf %250, %253 : vector<4x16x16xf32>
    "tpu.trace_start"() <{level = 10 : i32, message = "hqk,hkd->hqd"}> : () -> ()
    %cst_115 = arith.constant dense<0.000000e+00> : vector<4x16x32xf32>
    %255 = tpu.matmul %254, %243, %cst_115 {dimension_numbers = #tpu.dot_dimension_numbers<[2], [1], [1], [2], [0, 0, 0, 1, 1, 2], [0], [0]>} : vector<4x16x16xf32>, vector<4x16x32xf32>, vector<4x16x32xf32> -> vector<4x16x32xf32>
    "tpu.trace_stop"() : () -> ()
    %256 = vector.extract_strided_slice %255 {offsets = [0, 0, 0], sizes = [1, 16, 32], strides = [1, 1, 1]} : vector<4x16x32xf32> to vector<1x16x32xf32>
    %257 = vector.shape_cast %256 : vector<1x16x32xf32> to vector<16x32xf32>
    %258 = vector.extract_strided_slice %255 {offsets = [1, 0, 0], sizes = [1, 16, 32], strides = [1, 1, 1]} : vector<4x16x32xf32> to vector<1x16x32xf32>
    %259 = vector.shape_cast %258 : vector<1x16x32xf32> to vector<16x32xf32>
    %260 = vector.extract_strided_slice %255 {offsets = [2, 0, 0], sizes = [1, 16, 32], strides = [1, 1, 1]} : vector<4x16x32xf32> to vector<1x16x32xf32>
    %261 = vector.shape_cast %260 : vector<1x16x32xf32> to vector<16x32xf32>
    %262 = vector.extract_strided_slice %255 {offsets = [3, 0, 0], sizes = [1, 16, 32], strides = [1, 1, 1]} : vector<4x16x32xf32> to vector<1x16x32xf32>
    %263 = vector.shape_cast %262 : vector<1x16x32xf32> to vector<16x32xf32>
    %264 = tpu.concatenate %257, %259, %261, %263 in 1 : vector<16x32xf32>, vector<16x32xf32>, vector<16x32xf32>, vector<16x32xf32> -> vector<16x128xf32>
    %c1_116 = arith.constant 1 : index
    %c0_117 = arith.constant 0 : index
    %c0_118 = arith.constant 0 : index
    %265 = vector.load %arg12[%c1_116, %c0_117, %c0_118] : memref<2x128x128xf32, #tpu.memory_space<vmem>>, vector<1x128x128xf32>
    %266 = vector.shape_cast %265 : vector<1x128x128xf32> to vector<128x128xf32>
    %cst_119 = arith.constant dense<0.000000e+00> : vector<16x128xf32>
    %267 = tpu.matmul %264, %266, %cst_119 {dimension_numbers = #tpu.dot_dimension_numbers<[1], [0], [0], [1], [0, 0, 1, 1], [], []>} : vector<16x128xf32>, vector<128x128xf32>, vector<16x128xf32> -> vector<16x128xf32>
    %c1_120 = arith.constant 1 : index
    %c0_121 = arith.constant 0 : index
    %c0_122 = arith.constant 0 : index
    %268 = vector.load %arg13[%c1_120, %c0_121, %c0_122] : memref<2x1x128xf32, #tpu.memory_space<vmem>>, vector<1x1x128xf32>
    %269 = vector.shape_cast %268 : vector<1x1x128xf32> to vector<1x128xf32>
    %270 = vector.broadcast %269 : vector<1x128xf32> to vector<16x128xf32>
    %271 = arith.addf %267, %270 : vector<16x128xf32>
    %272 = arith.addf %167, %271 : vector<16x128xf32>
    %c1_123 = arith.constant 1 : index
    %c0_124 = arith.constant 0 : index
    %c0_125 = arith.constant 0 : index
    %273 = vector.load %arg14[%c1_123, %c0_124, %c0_125] : memref<2x1x128xf32, #tpu.memory_space<vmem>>, vector<1x1x128xf32>
    %274 = vector.shape_cast %273 : vector<1x1x128xf32> to vector<1x128xf32>
    %c1_126 = arith.constant 1 : index
    %c0_127 = arith.constant 0 : index
    %c0_128 = arith.constant 0 : index
    %275 = vector.load %arg15[%c1_126, %c0_127, %c0_128] : memref<2x1x128xf32, #tpu.memory_space<vmem>>, vector<1x1x128xf32>
    %276 = vector.shape_cast %275 : vector<1x1x128xf32> to vector<1x128xf32>
    %cst_129 = arith.constant dense<0.000000e+00> : vector<16xf32>
    %277 = vector.multi_reduction <add>, %272, %cst_129 [1] : vector<16x128xf32> to vector<16xf32>
    %278 = vector.shape_cast %277 : vector<16xf32> to vector<16x1xf32>
    %cst_130 = arith.constant 1.280000e+02 : f32
    %279 = vector.broadcast %cst_130 : f32 to vector<16x1xf32>
    %280 = arith.divf %278, %279 : vector<16x1xf32>
    %281 = vector.broadcast %280 : vector<16x1xf32> to vector<16x128xf32>
    %282 = arith.subf %272, %281 : vector<16x128xf32>
    %283 = arith.mulf %282, %282 : vector<16x128xf32>
    %cst_131 = arith.constant dense<0.000000e+00> : vector<16xf32>
    %284 = vector.multi_reduction <add>, %283, %cst_131 [1] : vector<16x128xf32> to vector<16xf32>
    %285 = vector.shape_cast %284 : vector<16xf32> to vector<16x1xf32>
    %cst_132 = arith.constant 1.280000e+02 : f32
    %286 = vector.broadcast %cst_132 : f32 to vector<16x1xf32>
    %287 = arith.divf %285, %286 : vector<16x1xf32>
    %288 = vector.broadcast %280 : vector<16x1xf32> to vector<16x128xf32>
    %289 = arith.subf %272, %288 : vector<16x128xf32>
    %cst_133 = arith.constant 9.99999996E-13 : f32
    %290 = vector.broadcast %cst_133 : f32 to vector<16x1xf32>
    %291 = arith.addf %287, %290 : vector<16x1xf32>
    %292 = math.rsqrt %291 : vector<16x1xf32>
    %293 = vector.broadcast %292 : vector<16x1xf32> to vector<16x128xf32>
    %294 = arith.mulf %289, %293 : vector<16x128xf32>
    %295 = vector.broadcast %274 : vector<1x128xf32> to vector<16x128xf32>
    %296 = arith.mulf %294, %295 : vector<16x128xf32>
    %297 = vector.broadcast %276 : vector<1x128xf32> to vector<16x128xf32>
    %298 = arith.addf %296, %297 : vector<16x128xf32>
    %c1_134 = arith.constant 1 : index
    %c0_135 = arith.constant 0 : index
    %c0_136 = arith.constant 0 : index
    %299 = vector.load %arg16[%c1_134, %c0_135, %c0_136] : memref<2x128x256xf32, #tpu.memory_space<vmem>>, vector<1x128x256xf32>
    %300 = vector.shape_cast %299 : vector<1x128x256xf32> to vector<128x256xf32>
    %cst_137 = arith.constant dense<0.000000e+00> : vector<16x256xf32>
    %301 = tpu.matmul %298, %300, %cst_137 {dimension_numbers = #tpu.dot_dimension_numbers<[1], [0], [0], [1], [0, 0, 1, 1], [], []>} : vector<16x128xf32>, vector<128x256xf32>, vector<16x256xf32> -> vector<16x256xf32>
    %c1_138 = arith.constant 1 : index
    %c0_139 = arith.constant 0 : index
    %c0_140 = arith.constant 0 : index
    %302 = vector.load %arg17[%c1_138, %c0_139, %c0_140] : memref<2x1x256xf32, #tpu.memory_space<vmem>>, vector<1x1x256xf32>
    %303 = vector.shape_cast %302 : vector<1x1x256xf32> to vector<1x256xf32>
    %304 = vector.broadcast %303 : vector<1x256xf32> to vector<16x256xf32>
    %305 = arith.addf %301, %304 : vector<16x256xf32>
    %cst_141 = arith.constant 5.000000e-01 : f32
    %306 = vector.broadcast %cst_141 : f32 to vector<16x256xf32>
    %307 = arith.mulf %306, %305 : vector<16x256xf32>
    %cst_142 = arith.constant 4.471500e-02 : f32
    %308 = vector.broadcast %cst_142 : f32 to vector<16x256xf32>
    %309 = arith.mulf %308, %305 : vector<16x256xf32>
    %310 = arith.mulf %309, %305 : vector<16x256xf32>
    %311 = arith.mulf %310, %305 : vector<16x256xf32>
    %312 = arith.addf %305, %311 : vector<16x256xf32>
    %cst_143 = arith.constant 0.797884583 : f32
    %313 = vector.broadcast %cst_143 : f32 to vector<16x256xf32>
    %314 = arith.mulf %313, %312 : vector<16x256xf32>
    %315 = math.tanh %314 : vector<16x256xf32>
    %cst_144 = arith.constant 1.000000e+00 : f32
    %316 = vector.broadcast %cst_144 : f32 to vector<16x256xf32>
    %317 = arith.addf %316, %315 : vector<16x256xf32>
    %318 = arith.mulf %307, %317 : vector<16x256xf32>
    %c1_145 = arith.constant 1 : index
    %c0_146 = arith.constant 0 : index
    %c0_147 = arith.constant 0 : index
    %319 = vector.load %arg18[%c1_145, %c0_146, %c0_147] : memref<2x256x128xf32, #tpu.memory_space<vmem>>, vector<1x256x128xf32>
    %320 = vector.shape_cast %319 : vector<1x256x128xf32> to vector<256x128xf32>
    %cst_148 = arith.constant dense<0.000000e+00> : vector<16x128xf32>
    %321 = tpu.matmul %318, %320, %cst_148 {dimension_numbers = #tpu.dot_dimension_numbers<[1], [0], [0], [1], [0, 0, 1, 1], [], []>} : vector<16x256xf32>, vector<256x128xf32>, vector<16x128xf32> -> vector<16x128xf32>
    %c1_149 = arith.constant 1 : index
    %c0_150 = arith.constant 0 : index
    %c0_151 = arith.constant 0 : index
    %322 = vector.load %arg19[%c1_149, %c0_150, %c0_151] : memref<2x1x128xf32, #tpu.memory_space<vmem>>, vector<1x1x128xf32>
    %323 = vector.shape_cast %322 : vector<1x1x128xf32> to vector<1x128xf32>
    %324 = vector.broadcast %323 : vector<1x128xf32> to vector<16x128xf32>
    %325 = arith.addf %321, %324 : vector<16x128xf32>
    %326 = arith.addf %272, %325 : vector<16x128xf32>
    %327 = vector.extract_strided_slice %326 {offsets = [0, 0], sizes = [1, 128], strides = [1, 1]} : vector<16x128xf32> to vector<1x128xf32>
    %328 = vector.extract_strided_slice %326 {offsets = [8, 0], sizes = [1, 128], strides = [1, 1]} : vector<16x128xf32> to vector<1x128xf32>
    %329 = tpu.concatenate %327, %328 in 0 : vector<1x128xf32>, vector<1x128xf32> -> vector<2x128xf32>
    %c0_152 = arith.constant 0 : index
    %c0_153 = arith.constant 0 : index
    %330 = vector.load %arg20[%c0_152, %c0_153] : memref<1x128xf32, #tpu.memory_space<vmem>>, vector<1x128xf32>
    %c0_154 = arith.constant 0 : index
    %c0_155 = arith.constant 0 : index
    %331 = vector.load %arg21[%c0_154, %c0_155] : memref<1x128xf32, #tpu.memory_space<vmem>>, vector<1x128xf32>
    %cst_156 = arith.constant dense<0.000000e+00> : vector<2xf32>
    %332 = vector.multi_reduction <add>, %329, %cst_156 [1] : vector<2x128xf32> to vector<2xf32>
    %333 = vector.shape_cast %332 : vector<2xf32> to vector<2x1xf32>
    %cst_157 = arith.constant 1.280000e+02 : f32
    %334 = vector.broadcast %cst_157 : f32 to vector<2x1xf32>
    %335 = arith.divf %333, %334 : vector<2x1xf32>
    %336 = vector.broadcast %335 : vector<2x1xf32> to vector<2x128xf32>
    %337 = arith.subf %329, %336 : vector<2x128xf32>
    %338 = arith.mulf %337, %337 : vector<2x128xf32>
    %cst_158 = arith.constant dense<0.000000e+00> : vector<2xf32>
    %339 = vector.multi_reduction <add>, %338, %cst_158 [1] : vector<2x128xf32> to vector<2xf32>
    %340 = vector.shape_cast %339 : vector<2xf32> to vector<2x1xf32>
    %cst_159 = arith.constant 1.280000e+02 : f32
    %341 = vector.broadcast %cst_159 : f32 to vector<2x1xf32>
    %342 = arith.divf %340, %341 : vector<2x1xf32>
    %343 = vector.broadcast %335 : vector<2x1xf32> to vector<2x128xf32>
    %344 = arith.subf %329, %343 : vector<2x128xf32>
    %cst_160 = arith.constant 9.99999996E-13 : f32
    %345 = vector.broadcast %cst_160 : f32 to vector<2x1xf32>
    %346 = arith.addf %342, %345 : vector<2x1xf32>
    %347 = math.rsqrt %346 : vector<2x1xf32>
    %348 = vector.broadcast %347 : vector<2x1xf32> to vector<2x128xf32>
    %349 = arith.mulf %344, %348 : vector<2x128xf32>
    %350 = vector.broadcast %330 : vector<1x128xf32> to vector<2x128xf32>
    %351 = arith.mulf %349, %350 : vector<2x128xf32>
    %352 = vector.broadcast %331 : vector<1x128xf32> to vector<2x128xf32>
    %353 = arith.addf %351, %352 : vector<2x128xf32>
    %c0_161 = arith.constant 0 : index
    %c0_162 = arith.constant 0 : index
    %354 = vector.load %arg22[%c0_161, %c0_162] : memref<128x16xf32, #tpu.memory_space<vmem>>, vector<128x16xf32>
    %cst_163 = arith.constant dense<0.000000e+00> : vector<2x16xf32>
    %355 = tpu.matmul %353, %354, %cst_163 {dimension_numbers = #tpu.dot_dimension_numbers<[1], [0], [0], [1], [0, 0, 1, 1], [], []>} : vector<2x128xf32>, vector<128x16xf32>, vector<2x16xf32> -> vector<2x16xf32>
    %c0_164 = arith.constant 0 : index
    %c0_165 = arith.constant 0 : index
    %356 = vector.load %arg23[%c0_164, %c0_165] : memref<1x16xf32, #tpu.memory_space<vmem>>, vector<1x16xf32>
    %357 = vector.broadcast %356 : vector<1x16xf32> to vector<2x16xf32>
    %358 = arith.addf %355, %357 : vector<2x16xf32>
    %c0_166 = arith.constant 0 : index
    %c0_167 = arith.constant 0 : index
    %359 = vector.load %arg24[%c0_166, %c0_167] : memref<2x16xf32, #tpu.memory_space<vmem>>, vector<2x16xf32>
    tpu.vector_store %arg24[%c0_166, %c0_167], %358 {strides = array<i32>} : memref<2x16xf32, #tpu.memory_space<vmem>>, vector<2x16xf32>,
    return
  }
}

</mosaic_0001>

<llo_original>
// kernel: tpu_custom_call.1
$region0: #{tpu_custom_call.1}
  #allocation0 [shape = 'u32[]', space=smem, size = 0x4, offset = 0x4, fixed_abs, tag = 'smem constant byte address 0x4 - core index']
  #allocation1 [shape = 'u32[144,128]{1,0:T(1,128)}', space=vmem, size = 0x12000, scoped, tag = 'internal scratch']
  %s0 = inlined_call_operand.vmem [shape: f32[16,768], index: 0, kind: input, shape index: {}]
  %s1 = inlined_call_operand.hbm [shape: f32[768,128], index: 1, kind: input, shape index: {}]
  %s2 = inlined_call_operand.vmem [shape: f32[16,128], index: 2, kind: input, shape index: {}]
  %s3 = inlined_call_operand.vmem [shape: f32[16,16], index: 3, kind: input, shape index: {}]
  %s4 = inlined_call_operand.vmem [shape: f32[2,1,128], index: 4, kind: input, shape index: {}]
  %s5 = inlined_call_operand.vmem [shape: f32[2,1,128], index: 5, kind: input, shape index: {}]
  %s6 = inlined_call_operand.hbm [shape: f32[2,128,128], index: 6, kind: input, shape index: {}]
  %s7 = inlined_call_operand.vmem [shape: f32[2,1,128], index: 7, kind: input, shape index: {}]
  %s8 = inlined_call_operand.hbm [shape: f32[2,128,128], index: 8, kind: input, shape index: {}]
  %s9 = inlined_call_operand.vmem [shape: f32[2,1,128], index: 9, kind: input, shape index: {}]
  %s10 = inlined_call_operand.hbm [shape: f32[2,128,128], index: 10, kind: input, shape index: {}]
  %s11 = inlined_call_operand.vmem [shape: f32[2,1,128], index: 11, kind: input, shape index: {}]
  %s12 = inlined_call_operand.hbm [shape: f32[2,128,128], index: 12, kind: input, shape index: {}]
  %s13 = inlined_call_operand.vmem [shape: f32[2,1,128], index: 13, kind: input, shape index: {}]
  %s14 = inlined_call_operand.vmem [shape: f32[2,1,128], index: 14, kind: input, shape index: {}]
  %s15 = inlined_call_operand.vmem [shape: f32[2,1,128], index: 15, kind: input, shape index: {}]
  %s16 = inlined_call_operand.hbm [shape: f32[2,128,256], index: 16, kind: input, shape index: {}]
  %s17 = inlined_call_operand.vmem [shape: f32[2,1,256], index: 17, kind: input, shape index: {}]
  %s18 = inlined_call_operand.hbm [shape: f32[2,256,128], index: 18, kind: input, shape index: {}]
  %s19 = inlined_call_operand.vmem [shape: f32[2,1,128], index: 19, kind: input, shape index: {}]
  %s20 = inlined_call_operand.vmem [shape: f32[1,128], index: 20, kind: input, shape index: {}]
  %s21 = inlined_call_operand.vmem [shape: f32[1,128], index: 21, kind: input, shape index: {}]
  %s22 = inlined_call_operand.vmem [shape: f32[128,16], index: 22, kind: input, shape index: {}]
  %s23 = inlined_call_operand.vmem [shape: f32[1,16], index: 23, kind: input, shape index: {}]
  %s24 = inlined_call_operand.hbm [shape: f32[2,16], index: 24, kind: output, shape index: {}]
  %s25 = sld [smem:[#allocation0]]
  $region134: #{tpu_custom_call.1} parent=0
    _
  %s27 = ssub.s32 1, %s25
  %s28 = scalar_select 0, %s27, %s25
  $region1: #{tpu_custom_call.1} parent=0
    #allocation2 [shape = 'u8[393216]{0}', space=vmem, size = 0x60000, scoped, tag = 'input window, operand 1, single buffered']
    #allocation3 [shape = 's32[1]{0}', space=sflag, size = 0x4, scoped, tag = 'scoped memory for tpu_custom_call.1']
    #allocation4 [shape = 's32[1]{0}', space=sflag, size = 0x4, scoped, tag = 'scoped memory for tpu_custom_call.1']
    #allocation5 [shape = 'u8[131072]{0}', space=vmem, size = 0x20000, scoped, tag = 'input window, operand 6, single buffered']
    #allocation6 [shape = 's32[1]{0}', space=sflag, size = 0x4, scoped, tag = 'scoped memory for tpu_custom_call.1']
    #allocation7 [shape = 'u8[131072]{0}', space=vmem, size = 0x20000, scoped, tag = 'input window, operand 8, single buffered']
    #allocation8 [shape = 'u8[131072]{0}', space=vmem, size = 0x20000, scoped, tag = 'input window, operand 10, single buffered']
    #allocation9 [shape = 's32[1]{0}', space=sflag, size = 0x4, scoped, tag = 'scoped memory for tpu_custom_call.1']
    #allocation10 [shape = 'u8[131072]{0}', space=vmem, size = 0x20000, scoped, tag = 'input window, operand 12, single buffered']
    #allocation11 [shape = 'u8[262144]{0}', space=vmem, size = 0x40000, scoped, tag = 'input window, operand 16, single buffered']
    #allocation12 [shape = 's32[1]{0}', space=sflag, size = 0x4, scoped, tag = 'scoped memory for tpu_custom_call.1']
    #allocation13 [shape = 'u8[262144]{0}', space=vmem, size = 0x40000, scoped, tag = 'input window, operand 18, single buffered']
    #allocation14 [shape = 'u8[1024]{0}', space=vmem, size = 0x400, scoped, tag = 'output window, operand 0, single buffered']
    %29 = vsyncpa [#allocation3], 0
    %30 = vsyncpa [#allocation6], 0
    %31 = vsyncpa [#allocation9], 0
    %32 = vsyncpa [#allocation12], 0
    %33 = vsyncpa [#allocation4], 0
    // Predicated region
    $region2: #{tpu_custom_call.1} parent=1 // pred_check
      _
    $region3: #{tpu_custom_call.1} parent=1 // pred_check_branch
      %35 = sbr.rel (0) target = $region5
    $region4: #{tpu_custom_call.1} parent=1 // pred_region
      _
    $region5: #{tpu_custom_call.1} parent=1 // pred_fallthru
      _
    // Predicated region
    $region6: #{tpu_custom_call.1} parent=1 // pred_check
      _
    $region7: #{tpu_custom_call.1} parent=1 // pred_check_branch
      %37 = sbr.rel (0) target = $region9
    $region8: #{tpu_custom_call.1} parent=1 // pred_region
      %s39 = ssub.s32 12288, 12288
      %40 = vsyncadd [#allocation3], %s39
      %s41 = sshll.u32 [#allocation2], 4
      %s42 = int_to_ptr.vmem [resolvable:$true] %s41
      %47 = dma.hbm_to_vmem [thread:$0]  %s1, 12288, %s42, [#allocation3], 128, 128, 8
    $region9: #{tpu_custom_call.1} parent=1 // pred_fallthru
      _
    // Predicated region
    $region10: #{tpu_custom_call.1} parent=1 // pred_check
      _
    $region11: #{tpu_custom_call.1} parent=1 // pred_check_branch
      %49 = sbr.rel (0) target = $region13
    $region12: #{tpu_custom_call.1} parent=1 // pred_region
      _
    $region13: #{tpu_custom_call.1} parent=1 // pred_fallthru
      _
    // Predicated region
    $region14: #{tpu_custom_call.1} parent=1 // pred_check
      _
    $region15: #{tpu_custom_call.1} parent=1 // pred_check_branch
      %51 = sbr.rel (0) target = $region17
    $region16: #{tpu_custom_call.1} parent=1 // pred_region
      _
    $region17: #{tpu_custom_call.1} parent=1 // pred_fallthru
      _
    // Predicated region
    $region18: #{tpu_custom_call.1} parent=1 // pred_check
      _
    $region19: #{tpu_custom_call.1} parent=1 // pred_check_branch
      %53 = sbr.rel (0) target = $region21
    $region20: #{tpu_custom_call.1} parent=1 // pred_region
      _
    $region21: #{tpu_custom_call.1} parent=1 // pred_fallthru
      _
    // Predicated region
    $region22: #{tpu_custom_call.1} parent=1 // pred_check
      _
    $region23: #{tpu_custom_call.1} parent=1 // pred_check_branch
      %55 = sbr.rel (0) target = $region25
    $region24: #{tpu_custom_call.1} parent=1 // pred_region
      _
    $region25: #{tpu_custom_call.1} parent=1 // pred_fallthru
      _
    // Predicated region
    $region26: #{tpu_custom_call.1} parent=1 // pred_check
      _
    $region27: #{tpu_custom_call.1} parent=1 // pred_check_branch
      %57 = sbr.rel (0) target = $region29
    $region28: #{tpu_custom_call.1} parent=1 // pred_region
      %s59 = ssub.s32 4096, 4096
      %60 = vsyncadd [#allocation6], %s59
      %s61 = sshll.u32 [#allocation5], 4
      %s62 = int_to_ptr.vmem [resolvable:$true] %s61
      %67 = dma.hbm_to_vmem [thread:$0]  %s6, 4096, %s62, [#allocation6], 128, 128, 8
    $region29: #{tpu_custom_call.1} parent=1 // pred_fallthru
      _
    // Predicated region
    $region30: #{tpu_custom_call.1} parent=1 // pred_check
      _
    $region31: #{tpu_custom_call.1} parent=1 // pred_check_branch
      %69 = sbr.rel (0) target = $region33
    $region32: #{tpu_custom_call.1} parent=1 // pred_region
      _
    $region33: #{tpu_custom_call.1} parent=1 // pred_fallthru
      _
    // Predicated region
    $region34: #{tpu_custom_call.1} parent=1 // pred_check
      _
    $region35: #{tpu_custom_call.1} parent=1 // pred_check_branch
      %71 = sbr.rel (0) target = $region37
    $region36: #{tpu_custom_call.1} parent=1 // pred_region
      %s73 = ssub.s32 4096, 4096
      %74 = vsyncadd [#allocation6], %s73
      %s75 = sshll.u32 [#allocation7], 4
      %s76 = int_to_ptr.vmem [resolvable:$true] %s75
      %81 = dma.hbm_to_vmem [thread:$0]  %s8, 4096, %s76, [#allocation6], 128, 128, 8
    $region37: #{tpu_custom_call.1} parent=1 // pred_fallthru
      _
    // Predicated region
    $region38: #{tpu_custom_call.1} parent=1 // pred_check
      _
    $region39: #{tpu_custom_call.1} parent=1 // pred_check_branch
      %83 = sbr.rel (0) target = $region41
    $region40: #{tpu_custom_call.1} parent=1 // pred_region
      _
    $region41: #{tpu_custom_call.1} parent=1 // pred_fallthru
      _
    // Predicated region
    $region42: #{tpu_custom_call.1} parent=1 // pred_check
      _
    $region43: #{tpu_custom_call.1} parent=1 // pred_check_branch
      %85 = sbr.rel (0) target = $region45
    $region44: #{tpu_custom_call.1} parent=1 // pred_region
      %s87 = ssub.s32 4096, 4096
      %88 = vsyncadd [#allocation9], %s87
      %s89 = sshll.u32 [#allocation8], 4
      %s90 = int_to_ptr.vmem [resolvable:$true] %s89
      %95 = dma.hbm_to_vmem [thread:$0]  %s10, 4096, %s90, [#allocation9], 128, 128, 8
    $region45: #{tpu_custom_call.1} parent=1 // pred_fallthru
      _
    // Predicated region
    $region46: #{tpu_custom_call.1} parent=1 // pred_check
      _
    $region47: #{tpu_custom_call.1} parent=1 // pred_check_branch
      %97 = sbr.rel (0) target = $region49
    $region48: #{tpu_custom_call.1} parent=1 // pred_region
      _
    $region49: #{tpu_custom_call.1} parent=1 // pred_fallthru
      _
    // Predicated region
    $region50: #{tpu_custom_call.1} parent=1 // pred_check
      _
    $region51: #{tpu_custom_call.1} parent=1 // pred_check_branch
      %99 = sbr.rel (0) target = $region53
    $region52: #{tpu_custom_call.1} parent=1 // pred_region
      %s101 = ssub.s32 4096, 4096
      %102 = vsyncadd [#allocation9], %s101
      %s103 = sshll.u32 [#allocation10], 4
      %s104 = int_to_ptr.vmem [resolvable:$true] %s103
      %109 = dma.hbm_to_vmem [thread:$0]  %s12, 4096, %s104, [#allocation9], 128, 128, 8
    $region53: #{tpu_custom_call.1} parent=1 // pred_fallthru
      _
    // Predicated region
    $region54: #{tpu_custom_call.1} parent=1 // pred_check
      _
    $region55: #{tpu_custom_call.1} parent=1 // pred_check_branch
      %111 = sbr.rel (0) target = $region57
    $region56: #{tpu_custom_call.1} parent=1 // pred_region
      _
    $region57: #{tpu_custom_call.1} parent=1 // pred_fallthru
      _
    // Predicated region
    $region58: #{tpu_custom_call.1} parent=1 // pred_check
      _
    $region59: #{tpu_custom_call.1} parent=1 // pred_check_branch
      %113 = sbr.rel (0) target = $region61
    $region60: #{tpu_custom_call.1} parent=1 // pred_region
      _
    $region61: #{tpu_custom_call.1} parent=1 // pred_fallthru
      _
    // Predicated region
    $region62: #{tpu_custom_call.1} parent=1 // pred_check
      _
    $region63: #{tpu_custom_call.1} parent=1 // pred_check_branch
      %115 = sbr.rel (0) target = $region65
    $region64: #{tpu_custom_call.1} parent=1 // pred_region
      _
    $region65: #{tpu_custom_call.1} parent=1 // pred_fallthru
      _
    // Predicated region
    $region66: #{tpu_custom_call.1} parent=1 // pred_check
      _
    $region67: #{tpu_custom_call.1} parent=1 // pred_check_branch
      %117 = sbr.rel (0) target = $region69
    $region68: #{tpu_custom_call.1} parent=1 // pred_region
      %s119 = ssub.s32 8192, 8192
      %120 = vsyncadd [#allocation12], %s119
      %s121 = sshll.u32 [#allocation11], 4
      %s122 = int_to_ptr.vmem [resolvable:$true] %s121
      %127 = dma.hbm_to_vmem [thread:$0]  %s16, 8192, %s122, [#allocation12], 256, 256, 16
    $region69: #{tpu_custom_call.1} parent=1 // pred_fallthru
      _
    // Predicated region
    $region70: #{tpu_custom_call.1} parent=1 // pred_check
      _
    $region71: #{tpu_custom_call.1} parent=1 // pred_check_branch
      %129 = sbr.rel (0) target = $region73
    $region72: #{tpu_custom_call.1} parent=1 // pred_region
      _
    $region73: #{tpu_custom_call.1} parent=1 // pred_fallthru
      _
    // Predicated region
    $region74: #{tpu_custom_call.1} parent=1 // pred_check
      _
    $region75: #{tpu_custom_call.1} parent=1 // pred_check_branch
      %131 = sbr.rel (0) target = $region77
    $region76: #{tpu_custom_call.1} parent=1 // pred_region
      %s133 = ssub.s32 8192, 8192
      %134 = vsyncadd [#allocation12], %s133
      %s135 = sshll.u32 [#allocation13], 4
      %s136 = int_to_ptr.vmem [resolvable:$true] %s135
      %141 = dma.hbm_to_vmem [thread:$0]  %s18, 8192, %s136, [#allocation12], 128, 128, 8
    $region77: #{tpu_custom_call.1} parent=1 // pred_fallthru
      _
    // Predicated region
    $region78: #{tpu_custom_call.1} parent=1 // pred_check
      _
    $region79: #{tpu_custom_call.1} parent=1 // pred_check_branch
      %143 = sbr.rel (0) target = $region81
    $region80: #{tpu_custom_call.1} parent=1 // pred_region
      _
    $region81: #{tpu_custom_call.1} parent=1 // pred_fallthru
      _
    // Predicated region
    $region82: #{tpu_custom_call.1} parent=1 // pred_check
      _
    $region83: #{tpu_custom_call.1} parent=1 // pred_check_branch
      %145 = sbr.rel (0) target = $region85
    $region84: #{tpu_custom_call.1} parent=1 // pred_region
      _
    $region85: #{tpu_custom_call.1} parent=1 // pred_fallthru
      _
    // Predicated region
    $region86: #{tpu_custom_call.1} parent=1 // pred_check
      _
    $region87: #{tpu_custom_call.1} parent=1 // pred_check_branch
      %147 = sbr.rel (0) target = $region89
    $region88: #{tpu_custom_call.1} parent=1 // pred_region
      _
    $region89: #{tpu_custom_call.1} parent=1 // pred_fallthru
      _
    // Predicated region
    $region90: #{tpu_custom_call.1} parent=1 // pred_check
      _
    $region91: #{tpu_custom_call.1} parent=1 // pred_check_branch
      %149 = sbr.rel (0) target = $region93
    $region92: #{tpu_custom_call.1} parent=1 // pred_region
      _
    $region93: #{tpu_custom_call.1} parent=1 // pred_fallthru
      _
    // Predicated region
    $region94: #{tpu_custom_call.1} parent=1 // pred_check
      _
    $region95: #{tpu_custom_call.1} parent=1 // pred_check_branch
      %151 = sbr.rel (0) target = $region97
    $region96: #{tpu_custom_call.1} parent=1 // pred_region
      _
    $region97: #{tpu_custom_call.1} parent=1 // pred_fallthru
      _
    // Predicated region
    $region98: #{tpu_custom_call.1} parent=1 // pred_check
      _
    $region99: #{tpu_custom_call.1} parent=1 // pred_check_branch
      %153 = sbr.rel (0) target = $region101
    $region100: #{tpu_custom_call.1} parent=1 // pred_region
      %154 = dma.done [#allocation3], 12288
    $region101: #{tpu_custom_call.1} parent=1 // pred_fallthru
      _
    // Predicated region
    $region102: #{tpu_custom_call.1} parent=1 // pred_check
      _
    $region103: #{tpu_custom_call.1} parent=1 // pred_check_branch
      %156 = sbr.rel (0) target = $region105
    $region104: #{tpu_custom_call.1} parent=1 // pred_region
      %157 = dma.done [#allocation6], 4096
    $region105: #{tpu_custom_call.1} parent=1 // pred_fallthru
      _
    // Predicated region
    $region106: #{tpu_custom_call.1} parent=1 // pred_check
      _
    $region107: #{tpu_custom_call.1} parent=1 // pred_check_branch
      %159 = sbr.rel (0) target = $region109
    $region108: #{tpu_custom_call.1} parent=1 // pred_region
      %160 = dma.done [#allocation6], 4096
    $region109: #{tpu_custom_call.1} parent=1 // pred_fallthru
      _
    // Predicated region
    $region110: #{tpu_custom_call.1} parent=1 // pred_check
      _
    $region111: #{tpu_custom_call.1} parent=1 // pred_check_branch
      %162 = sbr.rel (0) target = $region113
    $region112: #{tpu_custom_call.1} parent=1 // pred_region
      %163 = dma.done [#allocation9], 4096
    $region113: #{tpu_custom_call.1} parent=1 // pred_fallthru
      _
    // Predicated region
    $region114: #{tpu_custom_call.1} parent=1 // pred_check
      _
    $region115: #{tpu_custom_call.1} parent=1 // pred_check_branch
      %165 = sbr.rel (0) target = $region117
    $region116: #{tpu_custom_call.1} parent=1 // pred_region
      %166 = dma.done [#allocation9], 4096
    $region117: #{tpu_custom_call.1} parent=1 // pred_fallthru
      _
    // Predicated region
    $region118: #{tpu_custom_call.1} parent=1 // pred_check
      _
    $region119: #{tpu_custom_call.1} parent=1 // pred_check_branch
      %168 = sbr.rel (0) target = $region121
    $region120: #{tpu_custom_call.1} parent=1 // pred_region
      %169 = dma.done [#allocation12], 8192
    $region121: #{tpu_custom_call.1} parent=1 // pred_fallthru
      _
    // Predicated region
    $region122: #{tpu_custom_call.1} parent=1 // pred_check
      _
    $region123: #{tpu_custom_call.1} parent=1 // pred_check_branch
      %171 = sbr.rel (0) target = $region125
    $region124: #{tpu_custom_call.1} parent=1 // pred_region
      %172 = dma.done [#allocation12], 8192
    $region125: #{tpu_custom_call.1} parent=1 // pred_fallthru
      _
    %v173 = vld [vmem:[%s0] sm:$0xff]
    %v174 = vld [vmem:[%s0 + $0x8] sm:$0xff]
    %v175 = vld [vmem:[%s0 + $0x10] sm:$0xff]
    %v176 = vld [vmem:[%s0 + $0x18] sm:$0xff]
    %v177 = vld [vmem:[%s0 + $0x20] sm:$0xff]
    %v178 = vld [vmem:[%s0 + $0x28] sm:$0xff]
    %v179 = vld [vmem:[%s0 + $0x30] sm:$0xff]
    %v180 = vld [vmem:[%s0 + $0x38] sm:$0xff]
    %v181 = vld [vmem:[%s0 + $0x40] sm:$0xff]
    %v182 = vld [vmem:[%s0 + $0x48] sm:$0xff]
    %v183 = vld [vmem:[%s0 + $0x50] sm:$0xff]
    %v184 = vld [vmem:[%s0 + $0x58] sm:$0xff]
    %v185 = vld [vmem:[#allocation2] sm:$0xff]
    %v186 = vld [vmem:[#allocation2 + $0x8] sm:$0xff]
    %v187 = vld [vmem:[#allocation2 + $0x10] sm:$0xff]
    %v188 = vld [vmem:[#allocation2 + $0x18] sm:$0xff]
    %v189 = vld [vmem:[#allocation2 + $0x20] sm:$0xff]
    %v190 = vld [vmem:[#allocation2 + $0x28] sm:$0xff]
    %v191 = vld [vmem:[#allocation2 + $0x30] sm:$0xff]
    %v192 = vld [vmem:[#allocation2 + $0x38] sm:$0xff]
    %v193 = vld [vmem:[#allocation2 + $0x40] sm:$0xff]
    %v194 = vld [vmem:[#allocation2 + $0x48] sm:$0xff]
    %v195 = vld [vmem:[#allocation2 + $0x50] sm:$0xff]
    %v196 = vld [vmem:[#allocation2 + $0x58] sm:$0xff]
    %v197 = vld [vmem:[#allocation2 + $0x60] sm:$0xff]
    %v198 = vld [vmem:[#allocation2 + $0x68] sm:$0xff]
    %v199 = vld [vmem:[#allocation2 + $0x70] sm:$0xff]
    %v200 = vld [vmem:[#allocation2 + $0x78] sm:$0xff]
    %v201 = vld [vmem:[#allocation2 + $0x80] sm:$0xff]
    %v202 = vld [vmem:[#allocation2 + $0x88] sm:$0xff]
    %v203 = vld [vmem:[#allocation2 + $0x90] sm:$0xff]
    %v204 = vld [vmem:[#allocation2 + $0x98] sm:$0xff]
    %v205 = vld [vmem:[#allocation2 + $0xa0] sm:$0xff]
    %v206 = vld [vmem:[#allocation2 + $0xa8] sm:$0xff]
    %v207 = vld [vmem:[#allocation2 + $0xb0] sm:$0xff]
    %v208 = vld [vmem:[#allocation2 + $0xb8] sm:$0xff]
    %v209 = vld [vmem:[#allocation2 + $0xc0] sm:$0xff]
    %v210 = vld [vmem:[#allocation2 + $0xc8] sm:$0xff]
    %v211 = vld [vmem:[#allocation2 + $0xd0] sm:$0xff]
    %v212 = vld [vmem:[#allocation2 + $0xd8] sm:$0xff]
    %v213 = vld [vmem:[#allocation2 + $0xe0] sm:$0xff]
    %v214 = vld [vmem:[#allocation2 + $0xe8] sm:$0xff]
    %v215 = vld [vmem:[#allocation2 + $0xf0] sm:$0xff]
    %v216 = vld [vmem:[#allocation2 + $0xf8] sm:$0xff]
    %v217 = vld [vmem:[#allocation2 + $0x100] sm:$0xff]
    %v218 = vld [vmem:[#allocation2 + $0x108] sm:$0xff]
    %v219 = vld [vmem:[#allocation2 + $0x110] sm:$0xff]
    %v220 = vld [vmem:[#allocation2 + $0x118] sm:$0xff]
    %v221 = vld [vmem:[#allocation2 + $0x120] sm:$0xff]
    %v222 = vld [vmem:[#allocation2 + $0x128] sm:$0xff]
    %v223 = vld [vmem:[#allocation2 + $0x130] sm:$0xff]
    %v224 = vld [vmem:[#allocation2 + $0x138] sm:$0xff]
    %v225 = vld [vmem:[#allocation2 + $0x140] sm:$0xff]
    %v226 = vld [vmem:[#allocation2 + $0x148] sm:$0xff]
    %v227 = vld [vmem:[#allocation2 + $0x150] sm:$0xff]
    %v228 = vld [vmem:[#allocation2 + $0x158] sm:$0xff]
    %v229 = vld [vmem:[#allocation2 + $0x160] sm:$0xff]
    %v230 = vld [vmem:[#allocation2 + $0x168] sm:$0xff]
    %v231 = vld [vmem:[#allocation2 + $0x170] sm:$0xff]
    %v232 = vld [vmem:[#allocation2 + $0x178] sm:$0xff]
    %v233 = vld [vmem:[#allocation2 + $0x180] sm:$0xff]
    %v234 = vld [vmem:[#allocation2 + $0x188] sm:$0xff]
    %v235 = vld [vmem:[#allocation2 + $0x190] sm:$0xff]
    %v236 = vld [vmem:[#allocation2 + $0x198] sm:$0xff]
    %v237 = vld [vmem:[#allocation2 + $0x1a0] sm:$0xff]
    %v238 = vld [vmem:[#allocation2 + $0x1a8] sm:$0xff]
    %v239 = vld [vmem:[#allocation2 + $0x1b0] sm:$0xff]
    %v240 = vld [vmem:[#allocation2 + $0x1b8] sm:$0xff]
    %v241 = vld [vmem:[#allocation2 + $0x1c0] sm:$0xff]
    %v242 = vld [vmem:[#allocation2 + $0x1c8] sm:$0xff]
    %v243 = vld [vmem:[#allocation2 + $0x1d0] sm:$0xff]
    %v244 = vld [vmem:[#allocation2 + $0x1d8] sm:$0xff]
    %v245 = vld [vmem:[#allocation2 + $0x1e0] sm:$0xff]
    %v246 = vld [vmem:[#allocation2 + $0x1e8] sm:$0xff]
    %v247 = vld [vmem:[#allocation2 + $0x1f0] sm:$0xff]
    %v248 = vld [vmem:[#allocation2 + $0x1f8] sm:$0xff]
    %v249 = vld [vmem:[#allocation2 + $0x200] sm:$0xff]
    %v250 = vld [vmem:[#allocation2 + $0x208] sm:$0xff]
    %v251 = vld [vmem:[#allocation2 + $0x210] sm:$0xff]
    %v252 = vld [vmem:[#allocation2 + $0x218] sm:$0xff]
    %v253 = vld [vmem:[#allocation2 + $0x220] sm:$0xff]
    %v254 = vld [vmem:[#allocation2 + $0x228] sm:$0xff]
    %v255 = vld [vmem:[#allocation2 + $0x230] sm:$0xff]
    %v256 = vld [vmem:[#allocation2 + $0x238] sm:$0xff]
    %v257 = vld [vmem:[#allocation2 + $0x240] sm:$0xff]
    %v258 = vld [vmem:[#allocation2 + $0x248] sm:$0xff]
    %v259 = vld [vmem:[#allocation2 + $0x250] sm:$0xff]
    %v260 = vld [vmem:[#allocation2 + $0x258] sm:$0xff]
    %v261 = vld [vmem:[#allocation2 + $0x260] sm:$0xff]
    %v262 = vld [vmem:[#allocation2 + $0x268] sm:$0xff]
    %v263 = vld [vmem:[#allocation2 + $0x270] sm:$0xff]
    %v264 = vld [vmem:[#allocation2 + $0x278] sm:$0xff]
    %v265 = vld [vmem:[#allocation2 + $0x280] sm:$0xff]
    %v266 = vld [vmem:[#allocation2 + $0x288] sm:$0xff]
    %v267 = vld [vmem:[#allocation2 + $0x290] sm:$0xff]
    %v268 = vld [vmem:[#allocation2 + $0x298] sm:$0xff]
    %v269 = vld [vmem:[#allocation2 + $0x2a0] sm:$0xff]
    %v270 = vld [vmem:[#allocation2 + $0x2a8] sm:$0xff]
    %v271 = vld [vmem:[#allocation2 + $0x2b0] sm:$0xff]
    %v272 = vld [vmem:[#allocation2 + $0x2b8] sm:$0xff]
    %v273 = vld [vmem:[#allocation2 + $0x2c0] sm:$0xff]
    %v274 = vld [vmem:[#allocation2 + $0x2c8] sm:$0xff]
    %v275 = vld [vmem:[#allocation2 + $0x2d0] sm:$0xff]
    %v276 = vld [vmem:[#allocation2 + $0x2d8] sm:$0xff]
    %v277 = vld [vmem:[#allocation2 + $0x2e0] sm:$0xff]
    %v278 = vld [vmem:[#allocation2 + $0x2e8] sm:$0xff]
    %v279 = vld [vmem:[#allocation2 + $0x2f0] sm:$0xff]
    %v280 = vld [vmem:[#allocation2 + $0x2f8] sm:$0xff]
    %v281 = vld [vmem:[%s2] sm:$0xff]
    %v282 = vld [vmem:[%s2 + $0x8] sm:$0xff]
    %283 = vmatprep.subr.mxu0 0.0
    %284 = vmatpush1.msra.mxu0 %v200
    %285 = vmatprep.subr.mxu0 0.0
    %286 = vmatpush1.msra.mxu0 %v199
    %287 = vmatprep.subr.mxu0 0.0
    %288 = vmatpush1.msra.mxu0 %v198
    %289 = vmatprep.subr.mxu0 0.0
    %290 = vmatpush1.msra.mxu0 %v197
    %291 = vmatprep.subr.mxu0 0.0
    %292 = vmatpush1.msra.mxu0 %v196
    %293 = vmatprep.subr.mxu0 0.0
    %294 = vmatpush1.msra.mxu0 %v195
    %295 = vmatprep.subr.mxu0 0.0
    %296 = vmatpush1.msra.mxu0 %v194
    %297 = vmatprep.subr.mxu0 0.0
    %298 = vmatpush1.msra.mxu0 %v193
    %299 = vmatprep.subr.mxu0 0.0
    %300 = vmatpush1.msra.mxu0 %v192
    %301 = vmatprep.subr.mxu0 0.0
    %302 = vmatpush1.msra.mxu0 %v191
    %303 = vmatprep.subr.mxu0 0.0
    %304 = vmatpush1.msra.mxu0 %v190
    %305 = vmatprep.subr.mxu0 0.0
    %306 = vmatpush1.msra.mxu0 %v189
    %307 = vmatprep.subr.mxu0 0.0
    %308 = vmatpush1.msra.mxu0 %v188
    %309 = vmatprep.subr.mxu0 0.0
    %310 = vmatpush1.msra.mxu0 %v187
    %311 = vmatprep.subr.mxu0 0.0
    %312 = vmatpush1.msra.mxu0 %v186
    %313 = vmatprep.subr.mxu0 0.0
    %314 = vmatpush1.msra.mxu0 %v185
    %315 = vmatprep.subr.mxu0 0.0
    %316 = vmatpush2.msra.mxu0 %v216
    %317 = vmatprep.subr.mxu0 0.0
    %318 = vmatpush2.msra.mxu0 %v215
    %319 = vmatprep.subr.mxu0 0.0
    %320 = vmatpush2.msra.mxu0 %v214
    %321 = vmatprep.subr.mxu0 0.0
    %322 = vmatpush2.msra.mxu0 %v213
    %323 = vmatprep.subr.mxu0 0.0
    %324 = vmatpush2.msra.mxu0 %v212
    %325 = vmatprep.subr.mxu0 0.0
    %326 = vmatpush2.msra.mxu0 %v211
    %327 = vmatprep.subr.mxu0 0.0
    %328 = vmatpush2.msra.mxu0 %v210
    %329 = vmatprep.subr.mxu0 0.0
    %330 = vmatpush2.msra.mxu0 %v209
    %331 = vmatprep.subr.mxu0 0.0
    %332 = vmatpush2.msra.mxu0 %v208
    %333 = vmatprep.subr.mxu0 0.0
    %334 = vmatpush2.msra.mxu0 %v207
    %335 = vmatprep.subr.mxu0 0.0
    %336 = vmatpush2.msra.mxu0 %v206
    %337 = vmatprep.subr.mxu0 0.0
    %338 = vmatpush2.msra.mxu0 %v205
    %339 = vmatprep.subr.mxu0 0.0
    %340 = vmatpush2.msra.mxu0 %v204
    %341 = vmatprep.subr.mxu0 0.0
    %342 = vmatpush2.msra.mxu0 %v203
    %343 = vmatprep.subr.mxu0 0.0
    %344 = vmatpush2.msra.mxu0 %v202
    %345 = vmatprep.subr.mxu0 0.0
    %346 = vmatpush2.msra.mxu0 %v201
    %347 = vmatprep.mubr.f32.mxu0 %v174
    %348 = vmatmul.mubr.f32.gmra.mxu0 %v173
    %v349 = vpop.f32.mrf.mxu0
    %v350 = vadd.f32 %v281, %v349
    %v351 = vpop.f32.mrf.mxu0
    %352 = vmatprep.mubr.f32.mxu0 %v180
    %353 = vmatmul.mubr.f32.gmra.mxu0 %v179
    %v354 = vpop.f32.mrf.mxu0
    %v355 = vadd.f32 %v282, %v354
    %v356 = vpop.f32.mrf.mxu0
    %357 = vdwg.mxu0
    %358 = vmatprep.subr.mxu0 0.0
    %359 = vmatpush1.msra.mxu0 %v232
    %360 = vmatprep.subr.mxu0 0.0
    %361 = vmatpush1.msra.mxu0 %v231
    %362 = vmatprep.subr.mxu0 0.0
    %363 = vmatpush1.msra.mxu0 %v230
    %364 = vmatprep.subr.mxu0 0.0
    %365 = vmatpush1.msra.mxu0 %v229
    %366 = vmatprep.subr.mxu0 0.0
    %367 = vmatpush1.msra.mxu0 %v228
    %368 = vmatprep.subr.mxu0 0.0
    %369 = vmatpush1.msra.mxu0 %v227
    %370 = vmatprep.subr.mxu0 0.0
    %371 = vmatpush1.msra.mxu0 %v226
    %372 = vmatprep.subr.mxu0 0.0
    %373 = vmatpush1.msra.mxu0 %v225
    %374 = vmatprep.subr.mxu0 0.0
    %375 = vmatpush1.msra.mxu0 %v224
    %376 = vmatprep.subr.mxu0 0.0
    %377 = vmatpush1.msra.mxu0 %v223
    %378 = vmatprep.subr.mxu0 0.0
    %379 = vmatpush1.msra.mxu0 %v222
    %380 = vmatprep.subr.mxu0 0.0
    %381 = vmatpush1.msra.mxu0 %v221
    %382 = vmatprep.subr.mxu0 0.0
    %383 = vmatpush1.msra.mxu0 %v220
    %384 = vmatprep.subr.mxu0 0.0
    %385 = vmatpush1.msra.mxu0 %v219
    %386 = vmatprep.subr.mxu0 0.0
    %387 = vmatpush1.msra.mxu0 %v218
    %388 = vmatprep.subr.mxu0 0.0
    %389 = vmatpush1.msra.mxu0 %v217
    %390 = vmatprep.subr.mxu0 0.0
    %391 = vmatpush2.msra.mxu0 %v248
    %392 = vmatprep.subr.mxu0 0.0
    %393 = vmatpush2.msra.mxu0 %v247
    %394 = vmatprep.subr.mxu0 0.0
    %395 = vmatpush2.msra.mxu0 %v246
    %396 = vmatprep.subr.mxu0 0.0
    %397 = vmatpush2.msra.mxu0 %v245
    %398 = vmatprep.subr.mxu0 0.0
    %399 = vmatpush2.msra.mxu0 %v244
    %400 = vmatprep.subr.mxu0 0.0
    %401 = vmatpush2.msra.mxu0 %v243
    %402 = vmatprep.subr.mxu0 0.0
    %403 = vmatpush2.msra.mxu0 %v242
    %404 = vmatprep.subr.mxu0 0.0
    %405 = vmatpush2.msra.mxu0 %v241
    %406 = vmatprep.subr.mxu0 0.0
    %407 = vmatpush2.msra.mxu0 %v240
    %408 = vmatprep.subr.mxu0 0.0
    %409 = vmatpush2.msra.mxu0 %v239
    %410 = vmatprep.subr.mxu0 0.0
    %411 = vmatpush2.msra.mxu0 %v238
    %412 = vmatprep.subr.mxu0 0.0
    %413 = vmatpush2.msra.mxu0 %v237
    %414 = vmatprep.subr.mxu0 0.0
    %415 = vmatpush2.msra.mxu0 %v236
    %416 = vmatprep.subr.mxu0 0.0
    %417 = vmatpush2.msra.mxu0 %v235
    %418 = vmatprep.subr.mxu0 0.0
    %419 = vmatpush2.msra.mxu0 %v234
    %420 = vmatprep.subr.mxu0 0.0
    %421 = vmatpush2.msra.mxu0 %v233
    %422 = vmatprep.mubr.f32.mxu0 %v176
    %423 = vmatmul.mubr.f32.gmra.mxu0 %v175
    %v424 = vpop.f32.mrf.mxu0
    %v425 = vadd.f32 %v350, %v424
    %v426 = vpop.f32.mrf.mxu0
    %427 = vmatprep.mubr.f32.mxu0 %v182
    %428 = vmatmul.mubr.f32.gmra.mxu0 %v181
    %v429 = vpop.f32.mrf.mxu0
    %v430 = vadd.f32 %v355, %v429
    %v431 = vpop.f32.mrf.mxu0
    %432 = vdwg.mxu0
    %433 = vmatprep.subr.mxu0 0.0
    %434 = vmatpush1.msra.mxu0 %v264
    %435 = vmatprep.subr.mxu0 0.0
    %436 = vmatpush1.msra.mxu0 %v263
    %437 = vmatprep.subr.mxu0 0.0
    %438 = vmatpush1.msra.mxu0 %v262
    %439 = vmatprep.subr.mxu0 0.0
    %440 = vmatpush1.msra.mxu0 %v261
    %441 = vmatprep.subr.mxu0 0.0
    %442 = vmatpush1.msra.mxu0 %v260
    %443 = vmatprep.subr.mxu0 0.0
    %444 = vmatpush1.msra.mxu0 %v259
    %445 = vmatprep.subr.mxu0 0.0
    %446 = vmatpush1.msra.mxu0 %v258
    %447 = vmatprep.subr.mxu0 0.0
    %448 = vmatpush1.msra.mxu0 %v257
    %449 = vmatprep.subr.mxu0 0.0
    %450 = vmatpush1.msra.mxu0 %v256
    %451 = vmatprep.subr.mxu0 0.0
    %452 = vmatpush1.msra.mxu0 %v255
    %453 = vmatprep.subr.mxu0 0.0
    %454 = vmatpush1.msra.mxu0 %v254
    %455 = vmatprep.subr.mxu0 0.0
    %456 = vmatpush1.msra.mxu0 %v253
    %457 = vmatprep.subr.mxu0 0.0
    %458 = vmatpush1.msra.mxu0 %v252
    %459 = vmatprep.subr.mxu0 0.0
    %460 = vmatpush1.msra.mxu0 %v251
    %461 = vmatprep.subr.mxu0 0.0
    %462 = vmatpush1.msra.mxu0 %v250
    %463 = vmatprep.subr.mxu0 0.0
    %464 = vmatpush1.msra.mxu0 %v249
    %465 = vmatprep.subr.mxu0 0.0
    %466 = vmatpush2.msra.mxu0 %v280
    %467 = vmatprep.subr.mxu0 0.0
    %468 = vmatpush2.msra.mxu0 %v279
    %469 = vmatprep.subr.mxu0 0.0
    %470 = vmatpush2.msra.mxu0 %v278
    %471 = vmatprep.subr.mxu0 0.0
    %472 = vmatpush2.msra.mxu0 %v277
    %473 = vmatprep.subr.mxu0 0.0
    %474 = vmatpush2.msra.mxu0 %v276
    %475 = vmatprep.subr.mxu0 0.0
    %476 = vmatpush2.msra.mxu0 %v275
    %477 = vmatprep.subr.mxu0 0.0
    %478 = vmatpush2.msra.mxu0 %v274
    %479 = vmatprep.subr.mxu0 0.0
    %480 = vmatpush2.msra.mxu0 %v273
    %481 = vmatprep.subr.mxu0 0.0
    %482 = vmatpush2.msra.mxu0 %v272
    %483 = vmatprep.subr.mxu0 0.0
    %484 = vmatpush2.msra.mxu0 %v271
    %485 = vmatprep.subr.mxu0 0.0
    %486 = vmatpush2.msra.mxu0 %v270
    %487 = vmatprep.subr.mxu0 0.0
    %488 = vmatpush2.msra.mxu0 %v269
    %489 = vmatprep.subr.mxu0 0.0
    %490 = vmatpush2.msra.mxu0 %v268
    %491 = vmatprep.subr.mxu0 0.0
    %492 = vmatpush2.msra.mxu0 %v267
    %493 = vmatprep.subr.mxu0 0.0
    %494 = vmatpush2.msra.mxu0 %v266
    %495 = vmatprep.subr.mxu0 0.0
    %496 = vmatpush2.msra.mxu0 %v265
    %497 = vmatprep.mubr.f32.mxu0 %v178
    %498 = vmatmul.mubr.f32.gmra.mxu0 %v177
    %v499 = vpop.f32.mrf.mxu0
    %v500 = vadd.f32 %v425, %v499
    %v501 = vpop.f32.mrf.mxu0
    %502 = vmatprep.mubr.f32.mxu0 %v184
    %503 = vmatmul.mubr.f32.gmra.mxu0 %v183
    %v504 = vpop.f32.mrf.mxu0
    %v505 = vadd.f32 %v430, %v504
    %v506 = vpop.f32.mrf.mxu0
    %507 = vdwg.mxu0
    %v508 = vld [vmem:[%s3] sm:$0xff]
    %v509 = vld [vmem:[%s3 + $0x8] sm:$0xff]
    %v510 = vld [vmem:[%s4] sm:$0x1]
    %v511 = vld [vmem:[%s5] sm:$0x1]
    %512 = vadd.xlane.f32.xlu0 %v500
    %v513 = vpop.xlane.xlu0 %512
    %514 = vadd.xlane.f32.xlu0 %v505
    %v515 = vpop.xlane.xlu0 %514
    %v516 = vrcp.pop 128.0
    %v517 = vmul.f32 %v513, %v516
    %v518 = vmul.f32 %v515, %v516
    %v519 = vsub.f32 %v500, %v517
    %v520 = vsub.f32 %v505, %v518
    %v521 = vmul.f32 %v519, %v519
    %v522 = vmul.f32 %v520, %v520
    %523 = vadd.xlane.f32.xlu0 %v521
    %v524 = vpop.xlane.xlu0 %523
    %525 = vadd.xlane.f32.xlu0 %v522
    %v526 = vpop.xlane.xlu0 %525
    %v527 = vmul.f32 %v524, %v516
    %v528 = vmul.f32 %v526, %v516
    %v529 = vadd.f32 %v527, 1e-12
    %v530 = vadd.f32 %v528, 1e-12
    %v531 = vrsqrt.pop %v529
    %v532 = vrsqrt.pop %v530
    %v533 = vmul.f32 %v519, %v531
    %v534 = vmul.f32 %v520, %v532
    %v536 = vlaneseq
    %v537 = vshrl.u32 %v536, 7
    %v538 = vsub.s32 0, %v537
    %v539 = vrot.slane %v510, %v538
    %v541 = vmul.f32 %v533, %v539
    %v542 = vmul.f32 %v534, %v539
    %v544 = vlaneseq
    %v545 = vshrl.u32 %v544, 7
    %v546 = vsub.s32 0, %v545
    %v547 = vrot.slane %v511, %v546
    %v549 = vadd.f32 %v541, %v547
    %v550 = vadd.f32 %v542, %v547
    %v551 = vld [vmem:[#allocation5] sm:$0xff]
    %v552 = vld [vmem:[#allocation5 + $0x8] sm:$0xff]
    %v553 = vld [vmem:[#allocation5 + $0x10] sm:$0xff]
    %v554 = vld [vmem:[#allocation5 + $0x18] sm:$0xff]
    %v555 = vld [vmem:[#allocation5 + $0x20] sm:$0xff]
    %v556 = vld [vmem:[#allocation5 + $0x28] sm:$0xff]
    %v557 = vld [vmem:[#allocation5 + $0x30] sm:$0xff]
    %v558 = vld [vmem:[#allocation5 + $0x38] sm:$0xff]
    %v559 = vld [vmem:[#allocation5 + $0x40] sm:$0xff]
    %v560 = vld [vmem:[#allocation5 + $0x48] sm:$0xff]
    %v561 = vld [vmem:[#allocation5 + $0x50] sm:$0xff]
    %v562 = vld [vmem:[#allocation5 + $0x58] sm:$0xff]
    %v563 = vld [vmem:[#allocation5 + $0x60] sm:$0xff]
    %v564 = vld [vmem:[#allocation5 + $0x68] sm:$0xff]
    %v565 = vld [vmem:[#allocation5 + $0x70] sm:$0xff]
    %v566 = vld [vmem:[#allocation5 + $0x78] sm:$0xff]
    %v567 = vld [vmem:[%s7] sm:$0x1]
    %v569 = vlaneseq
    %v570 = vshrl.u32 %v569, 7
    %v571 = vsub.s32 0, %v570
    %v572 = vrot.slane %v567, %v571
    %574 = vmatprep.subr.mxu0 0.0
    %575 = vmatpush1.msra.mxu0 %v566
    %576 = vmatprep.subr.mxu0 0.0
    %577 = vmatpush1.msra.mxu0 %v565
    %578 = vmatprep.subr.mxu0 0.0
    %579 = vmatpush1.msra.mxu0 %v564
    %580 = vmatprep.subr.mxu0 0.0
    %581 = vmatpush1.msra.mxu0 %v563
    %582 = vmatprep.subr.mxu0 0.0
    %583 = vmatpush1.msra.mxu0 %v562
    %584 = vmatprep.subr.mxu0 0.0
    %585 = vmatpush1.msra.mxu0 %v561
    %586 = vmatprep.subr.mxu0 0.0
    %587 = vmatpush1.msra.mxu0 %v560
    %588 = vmatprep.subr.mxu0 0.0
    %589 = vmatpush1.msra.mxu0 %v559
    %590 = vmatprep.subr.mxu0 0.0
    %591 = vmatpush1.msra.mxu0 %v558
    %592 = vmatprep.subr.mxu0 0.0
    %593 = vmatpush1.msra.mxu0 %v557
    %594 = vmatprep.subr.mxu0 0.0
    %595 = vmatpush1.msra.mxu0 %v556
    %596 = vmatprep.subr.mxu0 0.0
    %597 = vmatpush1.msra.mxu0 %v555
    %598 = vmatprep.subr.mxu0 0.0
    %599 = vmatpush1.msra.mxu0 %v554
    %600 = vmatprep.subr.mxu0 0.0
    %601 = vmatpush1.msra.mxu0 %v553
    %602 = vmatprep.subr.mxu0 0.0
    %603 = vmatpush1.msra.mxu0 %v552
    %604 = vmatprep.subr.mxu0 0.0
    %605 = vmatpush1.msra.mxu0 %v551
    %606 = vmatprep.subr.mxu0 0.0
    %607 = vmatpush2.msra.mxu0 0.0
    %608 = vmatprep.subr.mxu0 0.0
    %609 = vmatpush2.msra.mxu0 0.0
    %610 = vmatprep.subr.mxu0 0.0
    %611 = vmatpush2.msra.mxu0 0.0
    %612 = vmatprep.subr.mxu0 0.0
    %613 = vmatpush2.msra.mxu0 0.0
    %614 = vmatprep.subr.mxu0 0.0
    %615 = vmatpush2.msra.mxu0 0.0
    %616 = vmatprep.subr.mxu0 0.0
    %617 = vmatpush2.msra.mxu0 0.0
    %618 = vmatprep.subr.mxu0 0.0
    %619 = vmatpush2.msra.mxu0 0.0
    %620 = vmatprep.subr.mxu0 0.0
    %621 = vmatpush2.msra.mxu0 0.0
    %622 = vmatprep.subr.mxu0 0.0
    %623 = vmatpush2.msra.mxu0 0.0
    %624 = vmatprep.subr.mxu0 0.0
    %625 = vmatpush2.msra.mxu0 0.0
    %626 = vmatprep.subr.mxu0 0.0
    %627 = vmatpush2.msra.mxu0 0.0
    %628 = vmatprep.subr.mxu0 0.0
    %629 = vmatpush2.msra.mxu0 0.0
    %630 = vmatprep.subr.mxu0 0.0
    %631 = vmatpush2.msra.mxu0 0.0
    %632 = vmatprep.subr.mxu0 0.0
    %633 = vmatpush2.msra.mxu0 0.0
    %634 = vmatprep.subr.mxu0 0.0
    %635 = vmatpush2.msra.mxu0 0.0
    %636 = vmatprep.subr.mxu0 0.0
    %637 = vmatpush2.msra.mxu0 0.0
    %638 = vmatprep.mubr.f32.mxu0 0.0
    %639 = vmatmul.mubr.f32.gmra.mxu0 %v549
    %v640 = vpop.f32.mrf.mxu0
    %v641 = vadd.f32 %v572, %v640
    %v642 = vpop.f32.mrf.mxu0
    %643 = vmatprep.mubr.f32.mxu0 0.0
    %644 = vmatmul.mubr.f32.gmra.mxu0 %v550
    %v645 = vpop.f32.mrf.mxu0
    %v646 = vadd.f32 %v572, %v645
    %v647 = vpop.f32.mrf.mxu0
    %648 = vdwg.mxu0
    %v649 = vmul.f32 %v641, 0.17677669
    %v650 = vmul.f32 %v646, 0.17677669
    %v651 = vld [vmem:[#allocation7] sm:$0xff]
    %v652 = vld [vmem:[#allocation7 + $0x8] sm:$0xff]
    %v653 = vld [vmem:[#allocation7 + $0x10] sm:$0xff]
    %v654 = vld [vmem:[#allocation7 + $0x18] sm:$0xff]
    %v655 = vld [vmem:[#allocation7 + $0x20] sm:$0xff]
    %v656 = vld [vmem:[#allocation7 + $0x28] sm:$0xff]
    %v657 = vld [vmem:[#allocation7 + $0x30] sm:$0xff]
    %v658 = vld [vmem:[#allocation7 + $0x38] sm:$0xff]
    %v659 = vld [vmem:[#allocation7 + $0x40] sm:$0xff]
    %v660 = vld [vmem:[#allocation7 + $0x48] sm:$0xff]
    %v661 = vld [vmem:[#allocation7 + $0x50] sm:$0xff]
    %v662 = vld [vmem:[#allocation7 + $0x58] sm:$0xff]
    %v663 = vld [vmem:[#allocation7 + $0x60] sm:$0xff]
    %v664 = vld [vmem:[#allocation7 + $0x68] sm:$0xff]
    %v665 = vld [vmem:[#allocation7 + $0x70] sm:$0xff]
    %v666 = vld [vmem:[#allocation7 + $0x78] sm:$0xff]
    %v667 = vld [vmem:[%s9] sm:$0x1]
    %v669 = vlaneseq
    %v670 = vshrl.u32 %v669, 7
    %v671 = vsub.s32 0, %v670
    %v672 = vrot.slane %v667, %v671
    %674 = vmatprep.subr.mxu0 0.0
    %675 = vmatpush1.msra.mxu0 %v666
    %676 = vmatprep.subr.mxu0 0.0
    %677 = vmatpush1.msra.mxu0 %v665
    %678 = vmatprep.subr.mxu0 0.0
    %679 = vmatpush1.msra.mxu0 %v664
    %680 = vmatprep.subr.mxu0 0.0
    %681 = vmatpush1.msra.mxu0 %v663
    %682 = vmatprep.subr.mxu0 0.0
    %683 = vmatpush1.msra.mxu0 %v662
    %684 = vmatprep.subr.mxu0 0.0
    %685 = vmatpush1.msra.mxu0 %v661
    %686 = vmatprep.subr.mxu0 0.0
    %687 = vmatpush1.msra.mxu0 %v660
    %688 = vmatprep.subr.mxu0 0.0
    %689 = vmatpush1.msra.mxu0 %v659
    %690 = vmatprep.subr.mxu0 0.0
    %691 = vmatpush1.msra.mxu0 %v658
    %692 = vmatprep.subr.mxu0 0.0
    %693 = vmatpush1.msra.mxu0 %v657
    %694 = vmatprep.subr.mxu0 0.0
    %695 = vmatpush1.msra.mxu0 %v656
    %696 = vmatprep.subr.mxu0 0.0
    %697 = vmatpush1.msra.mxu0 %v655
    %698 = vmatprep.subr.mxu0 0.0
    %699 = vmatpush1.msra.mxu0 %v654
    %700 = vmatprep.subr.mxu0 0.0
    %701 = vmatpush1.msra.mxu0 %v653
    %702 = vmatprep.subr.mxu0 0.0
    %703 = vmatpush1.msra.mxu0 %v652
    %704 = vmatprep.subr.mxu0 0.0
    %705 = vmatpush1.msra.mxu0 %v651
    %706 = vmatprep.subr.mxu0 0.0
    %707 = vmatpush2.msra.mxu0 0.0
    %708 = vmatprep.subr.mxu0 0.0
    %709 = vmatpush2.msra.mxu0 0.0
    %710 = vmatprep.subr.mxu0 0.0
    %711 = vmatpush2.msra.mxu0 0.0
    %712 = vmatprep.subr.mxu0 0.0
    %713 = vmatpush2.msra.mxu0 0.0
    %714 = vmatprep.subr.mxu0 0.0
    %715 = vmatpush2.msra.mxu0 0.0
    %716 = vmatprep.subr.mxu0 0.0
    %717 = vmatpush2.msra.mxu0 0.0
    %718 = vmatprep.subr.mxu0 0.0
    %719 = vmatpush2.msra.mxu0 0.0
    %720 = vmatprep.subr.mxu0 0.0
    %721 = vmatpush2.msra.mxu0 0.0
    %722 = vmatprep.subr.mxu0 0.0
    %723 = vmatpush2.msra.mxu0 0.0
    %724 = vmatprep.subr.mxu0 0.0
    %725 = vmatpush2.msra.mxu0 0.0
    %726 = vmatprep.subr.mxu0 0.0
    %727 = vmatpush2.msra.mxu0 0.0
    %728 = vmatprep.subr.mxu0 0.0
    %729 = vmatpush2.msra.mxu0 0.0
    %730 = vmatprep.subr.mxu0 0.0
    %731 = vmatpush2.msra.mxu0 0.0
    %732 = vmatprep.subr.mxu0 0.0
    %733 = vmatpush2.msra.mxu0 0.0
    %734 = vmatprep.subr.mxu0 0.0
    %735 = vmatpush2.msra.mxu0 0.0
    %736 = vmatprep.subr.mxu0 0.0
    %737 = vmatpush2.msra.mxu0 0.0
    %738 = vmatprep.mubr.f32.mxu0 0.0
    %739 = vmatmul.mubr.f32.gmra.mxu0 %v549
    %v740 = vpop.f32.mrf.mxu0
    %v741 = vadd.f32 %v672, %v740
    %v742 = vpop.f32.mrf.mxu0
    %743 = vmatprep.mubr.f32.mxu0 0.0
    %744 = vmatmul.mubr.f32.gmra.mxu0 %v550
    %v745 = vpop.f32.mrf.mxu0
    %v746 = vadd.f32 %v672, %v745
    %v747 = vpop.f32.mrf.mxu0
    %748 = vdwg.mxu0
    %v749 = vld [vmem:[#allocation8] sm:$0xff]
    %v750 = vld [vmem:[#allocation8 + $0x8] sm:$0xff]
    %v751 = vld [vmem:[#allocation8 + $0x10] sm:$0xff]
    %v752 = vld [vmem:[#allocation8 + $0x18] sm:$0xff]
    %v753 = vld [vmem:[#allocation8 + $0x20] sm:$0xff]
    %v754 = vld [vmem:[#allocation8 + $0x28] sm:$0xff]
    %v755 = vld [vmem:[#allocation8 + $0x30] sm:$0xff]
    %v756 = vld [vmem:[#allocation8 + $0x38] sm:$0xff]
    %v757 = vld [vmem:[#allocation8 + $0x40] sm:$0xff]
    %v758 = vld [vmem:[#allocation8 + $0x48] sm:$0xff]
    %v759 = vld [vmem:[#allocation8 + $0x50] sm:$0xff]
    %v760 = vld [vmem:[#allocation8 + $0x58] sm:$0xff]
    %v761 = vld [vmem:[#allocation8 + $0x60] sm:$0xff]
    %v762 = vld [vmem:[#allocation8 + $0x68] sm:$0xff]
    %v763 = vld [vmem:[#allocation8 + $0x70] sm:$0xff]
    %v764 = vld [vmem:[#allocation8 + $0x78] sm:$0xff]
    %v765 = vld [vmem:[%s11] sm:$0x1]
    %v767 = vlaneseq
    %v768 = vshrl.u32 %v767, 7
    %v769 = vsub.s32 0, %v768
    %v770 = vrot.slane %v765, %v769
    %772 = vmatprep.subr.mxu0 0.0
    %773 = vmatpush1.msra.mxu0 %v764
    %774 = vmatprep.subr.mxu0 0.0
    %775 = vmatpush1.msra.mxu0 %v763
    %776 = vmatprep.subr.mxu0 0.0
    %777 = vmatpush1.msra.mxu0 %v762
    %778 = vmatprep.subr.mxu0 0.0
    %779 = vmatpush1.msra.mxu0 %v761
    %780 = vmatprep.subr.mxu0 0.0
    %781 = vmatpush1.msra.mxu0 %v760
    %782 = vmatprep.subr.mxu0 0.0
    %783 = vmatpush1.msra.mxu0 %v759
    %784 = vmatprep.subr.mxu0 0.0
    %785 = vmatpush1.msra.mxu0 %v758
    %786 = vmatprep.subr.mxu0 0.0
    %787 = vmatpush1.msra.mxu0 %v757
    %788 = vmatprep.subr.mxu0 0.0
    %789 = vmatpush1.msra.mxu0 %v756
    %790 = vmatprep.subr.mxu0 0.0
    %791 = vmatpush1.msra.mxu0 %v755
    %792 = vmatprep.subr.mxu0 0.0
    %793 = vmatpush1.msra.mxu0 %v754
    %794 = vmatprep.subr.mxu0 0.0
    %795 = vmatpush1.msra.mxu0 %v753
    %796 = vmatprep.subr.mxu0 0.0
    %797 = vmatpush1.msra.mxu0 %v752
    %798 = vmatprep.subr.mxu0 0.0
    %799 = vmatpush1.msra.mxu0 %v751
    %800 = vmatprep.subr.mxu0 0.0
    %801 = vmatpush1.msra.mxu0 %v750
    %802 = vmatprep.subr.mxu0 0.0
    %803 = vmatpush1.msra.mxu0 %v749
    %804 = vmatprep.subr.mxu0 0.0
    %805 = vmatpush2.msra.mxu0 0.0
    %806 = vmatprep.subr.mxu0 0.0
    %807 = vmatpush2.msra.mxu0 0.0
    %808 = vmatprep.subr.mxu0 0.0
    %809 = vmatpush2.msra.mxu0 0.0
    %810 = vmatprep.subr.mxu0 0.0
    %811 = vmatpush2.msra.mxu0 0.0
    %812 = vmatprep.subr.mxu0 0.0
    %813 = vmatpush2.msra.mxu0 0.0
    %814 = vmatprep.subr.mxu0 0.0
    %815 = vmatpush2.msra.mxu0 0.0
    %816 = vmatprep.subr.mxu0 0.0
    %817 = vmatpush2.msra.mxu0 0.0
    %818 = vmatprep.subr.mxu0 0.0
    %819 = vmatpush2.msra.mxu0 0.0
    %820 = vmatprep.subr.mxu0 0.0
    %821 = vmatpush2.msra.mxu0 0.0
    %822 = vmatprep.subr.mxu0 0.0
    %823 = vmatpush2.msra.mxu0 0.0
    %824 = vmatprep.subr.mxu0 0.0
    %825 = vmatpush2.msra.mxu0 0.0
    %826 = vmatprep.subr.mxu0 0.0
    %827 = vmatpush2.msra.mxu0 0.0
    %828 = vmatprep.subr.mxu0 0.0
    %829 = vmatpush2.msra.mxu0 0.0
    %830 = vmatprep.subr.mxu0 0.0
    %831 = vmatpush2.msra.mxu0 0.0
    %832 = vmatprep.subr.mxu0 0.0
    %833 = vmatpush2.msra.mxu0 0.0
    %834 = vmatprep.subr.mxu0 0.0
    %835 = vmatpush2.msra.mxu0 0.0
    %836 = vmatprep.mubr.f32.mxu0 0.0
    %837 = vmatmul.mubr.f32.gmra.mxu0 %v549
    %v838 = vpop.f32.mrf.mxu0
    %v839 = vadd.f32 %v770, %v838
    %v840 = vpop.f32.mrf.mxu0
    %841 = vmatprep.mubr.f32.mxu0 0.0
    %842 = vmatmul.mubr.f32.gmra.mxu0 %v550
    %v843 = vpop.f32.mrf.mxu0
    %v844 = vadd.f32 %v770, %v843
    %v845 = vpop.f32.mrf.mxu0
    %846 = vdwg.mxu0
    %849 = vrot.lane.b32.xlu0 %v649, 96
    %v850 = vpop.permute.xlu0 %849
    %851 = vrot.lane.b32.xlu0 %v650, 96
    %v852 = vpop.permute.xlu0 %851
    %853 = vrot.lane.b32.xlu0 %v649, 64
    %v854 = vpop.permute.xlu0 %853
    %855 = vrot.lane.b32.xlu0 %v650, 64
    %v856 = vpop.permute.xlu0 %855
    %857 = vrot.lane.b32.xlu0 %v649, 32
    %v858 = vpop.permute.xlu0 %857
    %859 = vrot.lane.b32.xlu0 %v650, 32
    %v860 = vpop.permute.xlu0 %859
    %863 = vrot.lane.b32.xlu0 %v741, 96
    %v864 = vpop.permute.xlu0 %863
    %865 = vrot.lane.b32.xlu0 %v746, 96
    %v866 = vpop.permute.xlu0 %865
    %867 = vrot.lane.b32.xlu0 %v741, 64
    %v868 = vpop.permute.xlu0 %867
    %869 = vrot.lane.b32.xlu0 %v746, 64
    %v870 = vpop.permute.xlu0 %869
    %871 = vrot.lane.b32.xlu0 %v741, 32
    %v872 = vpop.permute.xlu0 %871
    %873 = vrot.lane.b32.xlu0 %v746, 32
    %v874 = vpop.permute.xlu0 %873
    %877 = vrot.lane.b32.xlu0 %v839, 96
    %v878 = vpop.permute.xlu0 %877
    %879 = vrot.lane.b32.xlu0 %v844, 96
    %v880 = vpop.permute.xlu0 %879
    %883 = vrot.lane.b32.xlu0 %v839, 64
    %v884 = vpop.permute.xlu0 %883
    %885 = vrot.lane.b32.xlu0 %v844, 64
    %v886 = vpop.permute.xlu0 %885
    %889 = vrot.lane.b32.xlu0 %v839, 32
    %v890 = vpop.permute.xlu0 %889
    %891 = vrot.lane.b32.xlu0 %v844, 32
    %v892 = vpop.permute.xlu0 %891
    %vm895 = vcmask 261120
    %v896 = vsel %vm895, %v649, 0
    %v898 = vsel %vm895, %v650, 0
    %v900 = vsel %vm895, %v741, 0
    %v902 = vsel %vm895, %v746, 0
    %904 = vmatprep.subr.mxu0 0.0
    %905 = vmatpush1.xpose.msra.mxu0 0.0
    %906 = vmatprep.subr.mxu0 0.0
    %907 = vmatpush1.xpose.msra.mxu0 0.0
    %908 = vmatprep.subr.mxu0 0.0
    %909 = vmatpush1.xpose.msra.mxu0 0.0
    %910 = vmatprep.subr.mxu0 0.0
    %911 = vmatpush1.xpose.msra.mxu0 0.0
    %912 = vmatprep.subr.mxu0 0.0
    %913 = vmatpush1.xpose.msra.mxu0 0.0
    %914 = vmatprep.subr.mxu0 0.0
    %915 = vmatpush1.xpose.msra.mxu0 0.0
    %916 = vmatprep.subr.mxu0 0.0
    %917 = vmatpush1.xpose.msra.mxu0 0.0
    %918 = vmatprep.subr.mxu0 0.0
    %919 = vmatpush1.xpose.msra.mxu0 0.0
    %920 = vmatprep.subr.mxu0 0.0
    %921 = vmatpush1.xpose.msra.mxu0 0.0
    %922 = vmatprep.subr.mxu0 0.0
    %923 = vmatpush1.xpose.msra.mxu0 0.0
    %924 = vmatprep.subr.mxu0 0.0
    %925 = vmatpush1.xpose.msra.mxu0 0.0
    %926 = vmatprep.subr.mxu0 0.0
    %927 = vmatpush1.xpose.msra.mxu0 0.0
    %928 = vmatprep.subr.mxu0 0.0
    %929 = vmatpush1.xpose.msra.mxu0 0.0
    %930 = vmatprep.subr.mxu0 0.0
    %931 = vmatpush1.xpose.msra.mxu0 0.0
    %932 = vmatprep.subr.mxu0 0.0
    %933 = vmatpush1.xpose.msra.mxu0 %v902
    %934 = vmatprep.subr.mxu0 0.0
    %935 = vmatpush1.xpose.msra.mxu0 %v900
    %936 = vmatprep.subr.mxu0 0.0
    %937 = vmatpush2.xpose.msra.mxu0 0.0
    %938 = vmatprep.subr.mxu0 0.0
    %939 = vmatpush2.xpose.msra.mxu0 0.0
    %940 = vmatprep.subr.mxu0 0.0
    %941 = vmatpush2.xpose.msra.mxu0 0.0
    %942 = vmatprep.subr.mxu0 0.0
    %943 = vmatpush2.xpose.msra.mxu0 0.0
    %944 = vmatprep.subr.mxu0 0.0
    %945 = vmatpush2.xpose.msra.mxu0 0.0
    %946 = vmatprep.subr.mxu0 0.0
    %947 = vmatpush2.xpose.msra.mxu0 0.0
    %948 = vmatprep.subr.mxu0 0.0
    %949 = vmatpush2.xpose.msra.mxu0 0.0
    %950 = vmatprep.subr.mxu0 0.0
    %951 = vmatpush2.xpose.msra.mxu0 0.0
    %952 = vmatprep.subr.mxu0 0.0
    %953 = vmatpush2.xpose.msra.mxu0 0.0
    %954 = vmatprep.subr.mxu0 0.0
    %955 = vmatpush2.xpose.msra.mxu0 0.0
    %956 = vmatprep.subr.mxu0 0.0
    %957 = vmatpush2.xpose.msra.mxu0 0.0
    %958 = vmatprep.subr.mxu0 0.0
    %959 = vmatpush2.xpose.msra.mxu0 0.0
    %960 = vmatprep.subr.mxu0 0.0
    %961 = vmatpush2.xpose.msra.mxu0 0.0
    %962 = vmatprep.subr.mxu0 0.0
    %963 = vmatpush2.xpose.msra.mxu0 0.0
    %964 = vmatprep.subr.mxu0 0.0
    %965 = vmatpush2.xpose.msra.mxu0 0.0
    %966 = vmatprep.subr.mxu0 0.0
    %967 = vmatpush2.xpose.msra.mxu0 0.0
    %968 = vmatprep.mubr.f32.mxu0 0.0
    %969 = vmatmul.mubr.f32.gmra.mxu0 %v896
    %v970 = vpop.f32.mrf.mxu0
    %v971 = vadd.f32 %v508, %v970
    %v972 = vpop.f32.mrf.mxu0
    %973 = vmatprep.mubr.f32.mxu0 0.0
    %974 = vmatmul.mubr.f32.gmra.mxu0 %v898
    %v975 = vpop.f32.mrf.mxu0
    %v976 = vadd.f32 %v509, %v975
    %v977 = vpop.f32.mrf.mxu0
    %978 = vdwg.mxu0
    %v979 = vsel %vm895, %v850, 0
    %v981 = vsel %vm895, %v852, 0
    %v983 = vsel %vm895, %v864, 0
    %v985 = vsel %vm895, %v866, 0
    %987 = vmatprep.subr.mxu0 0.0
    %988 = vmatpush1.xpose.msra.mxu0 0.0
    %989 = vmatprep.subr.mxu0 0.0
    %990 = vmatpush1.xpose.msra.mxu0 0.0
    %991 = vmatprep.subr.mxu0 0.0
    %992 = vmatpush1.xpose.msra.mxu0 0.0
    %993 = vmatprep.subr.mxu0 0.0
    %994 = vmatpush1.xpose.msra.mxu0 0.0
    %995 = vmatprep.subr.mxu0 0.0
    %996 = vmatpush1.xpose.msra.mxu0 0.0
    %997 = vmatprep.subr.mxu0 0.0
    %998 = vmatpush1.xpose.msra.mxu0 0.0
    %999 = vmatprep.subr.mxu0 0.0
    %1000 = vmatpush1.xpose.msra.mxu0 0.0
    %1001 = vmatprep.subr.mxu0 0.0
    %1002 = vmatpush1.xpose.msra.mxu0 0.0
    %1003 = vmatprep.subr.mxu0 0.0
    %1004 = vmatpush1.xpose.msra.mxu0 0.0
    %1005 = vmatprep.subr.mxu0 0.0
    %1006 = vmatpush1.xpose.msra.mxu0 0.0
    %1007 = vmatprep.subr.mxu0 0.0
    %1008 = vmatpush1.xpose.msra.mxu0 0.0
    %1009 = vmatprep.subr.mxu0 0.0
    %1010 = vmatpush1.xpose.msra.mxu0 0.0
    %1011 = vmatprep.subr.mxu0 0.0
    %1012 = vmatpush1.xpose.msra.mxu0 0.0
    %1013 = vmatprep.subr.mxu0 0.0
    %1014 = vmatpush1.xpose.msra.mxu0 0.0
    %1015 = vmatprep.subr.mxu0 0.0
    %1016 = vmatpush1.xpose.msra.mxu0 %v985
    %1017 = vmatprep.subr.mxu0 0.0
    %1018 = vmatpush1.xpose.msra.mxu0 %v983
    %1019 = vmatprep.subr.mxu0 0.0
    %1020 = vmatpush2.xpose.msra.mxu0 0.0
    %1021 = vmatprep.subr.mxu0 0.0
    %1022 = vmatpush2.xpose.msra.mxu0 0.0
    %1023 = vmatprep.subr.mxu0 0.0
    %1024 = vmatpush2.xpose.msra.mxu0 0.0
    %1025 = vmatprep.subr.mxu0 0.0
    %1026 = vmatpush2.xpose.msra.mxu0 0.0
    %1027 = vmatprep.subr.mxu0 0.0
    %1028 = vmatpush2.xpose.msra.mxu0 0.0
    %1029 = vmatprep.subr.mxu0 0.0
    %1030 = vmatpush2.xpose.msra.mxu0 0.0
    %1031 = vmatprep.subr.mxu0 0.0
    %1032 = vmatpush2.xpose.msra.mxu0 0.0
    %1033 = vmatprep.subr.mxu0 0.0
    %1034 = vmatpush2.xpose.msra.mxu0 0.0
    %1035 = vmatprep.subr.mxu0 0.0
    %1036 = vmatpush2.xpose.msra.mxu0 0.0
    %1037 = vmatprep.subr.mxu0 0.0
    %1038 = vmatpush2.xpose.msra.mxu0 0.0
    %1039 = vmatprep.subr.mxu0 0.0
    %1040 = vmatpush2.xpose.msra.mxu0 0.0
    %1041 = vmatprep.subr.mxu0 0.0
    %1042 = vmatpush2.xpose.msra.mxu0 0.0
    %1043 = vmatprep.subr.mxu0 0.0
    %1044 = vmatpush2.xpose.msra.mxu0 0.0
    %1045 = vmatprep.subr.mxu0 0.0
    %1046 = vmatpush2.xpose.msra.mxu0 0.0
    %1047 = vmatprep.subr.mxu0 0.0
    %1048 = vmatpush2.xpose.msra.mxu0 0.0
    %1049 = vmatprep.subr.mxu0 0.0
    %1050 = vmatpush2.xpose.msra.mxu0 0.0
    %1051 = vmatprep.mubr.f32.mxu0 0.0
    %1052 = vmatmul.mubr.f32.gmra.mxu0 %v979
    %v1053 = vpop.f32.mrf.mxu0
    %v1054 = vadd.f32 %v508, %v1053
    %v1055 = vpop.f32.mrf.mxu0
    %1056 = vmatprep.mubr.f32.mxu0 0.0
    %1057 = vmatmul.mubr.f32.gmra.mxu0 %v981
    %v1058 = vpop.f32.mrf.mxu0
    %v1059 = vadd.f32 %v509, %v1058
    %v1060 = vpop.f32.mrf.mxu0
    %1061 = vdwg.mxu0
    %v1062 = vsel %vm895, %v854, 0
    %v1064 = vsel %vm895, %v856, 0
    %v1066 = vsel %vm895, %v868, 0
    %v1068 = vsel %vm895, %v870, 0
    %1070 = vmatprep.subr.mxu0 0.0
    %1071 = vmatpush1.xpose.msra.mxu0 0.0
    %1072 = vmatprep.subr.mxu0 0.0
    %1073 = vmatpush1.xpose.msra.mxu0 0.0
    %1074 = vmatprep.subr.mxu0 0.0
    %1075 = vmatpush1.xpose.msra.mxu0 0.0
    %1076 = vmatprep.subr.mxu0 0.0
    %1077 = vmatpush1.xpose.msra.mxu0 0.0
    %1078 = vmatprep.subr.mxu0 0.0
    %1079 = vmatpush1.xpose.msra.mxu0 0.0
    %1080 = vmatprep.subr.mxu0 0.0
    %1081 = vmatpush1.xpose.msra.mxu0 0.0
    %1082 = vmatprep.subr.mxu0 0.0
    %1083 = vmatpush1.xpose.msra.mxu0 0.0
    %1084 = vmatprep.subr.mxu0 0.0
    %1085 = vmatpush1.xpose.msra.mxu0 0.0
    %1086 = vmatprep.subr.mxu0 0.0
    %1087 = vmatpush1.xpose.msra.mxu0 0.0
    %1088 = vmatprep.subr.mxu0 0.0
    %1089 = vmatpush1.xpose.msra.mxu0 0.0
    %1090 = vmatprep.subr.mxu0 0.0
    %1091 = vmatpush1.xpose.msra.mxu0 0.0
    %1092 = vmatprep.subr.mxu0 0.0
    %1093 = vmatpush1.xpose.msra.mxu0 0.0
    %1094 = vmatprep.subr.mxu0 0.0
    %1095 = vmatpush1.xpose.msra.mxu0 0.0
    %1096 = vmatprep.subr.mxu0 0.0
    %1097 = vmatpush1.xpose.msra.mxu0 0.0
    %1098 = vmatprep.subr.mxu0 0.0
    %1099 = vmatpush1.xpose.msra.mxu0 %v1068
    %1100 = vmatprep.subr.mxu0 0.0
    %1101 = vmatpush1.xpose.msra.mxu0 %v1066
    %1102 = vmatprep.subr.mxu0 0.0
    %1103 = vmatpush2.xpose.msra.mxu0 0.0
    %1104 = vmatprep.subr.mxu0 0.0
    %1105 = vmatpush2.xpose.msra.mxu0 0.0
    %1106 = vmatprep.subr.mxu0 0.0
    %1107 = vmatpush2.xpose.msra.mxu0 0.0
    %1108 = vmatprep.subr.mxu0 0.0
    %1109 = vmatpush2.xpose.msra.mxu0 0.0
    %1110 = vmatprep.subr.mxu0 0.0
    %1111 = vmatpush2.xpose.msra.mxu0 0.0
    %1112 = vmatprep.subr.mxu0 0.0
    %1113 = vmatpush2.xpose.msra.mxu0 0.0
    %1114 = vmatprep.subr.mxu0 0.0
    %1115 = vmatpush2.xpose.msra.mxu0 0.0
    %1116 = vmatprep.subr.mxu0 0.0
    %1117 = vmatpush2.xpose.msra.mxu0 0.0
    %1118 = vmatprep.subr.mxu0 0.0
    %1119 = vmatpush2.xpose.msra.mxu0 0.0
    %1120 = vmatprep.subr.mxu0 0.0
    %1121 = vmatpush2.xpose.msra.mxu0 0.0
    %1122 = vmatprep.subr.mxu0 0.0
    %1123 = vmatpush2.xpose.msra.mxu0 0.0
    %1124 = vmatprep.subr.mxu0 0.0
    %1125 = vmatpush2.xpose.msra.mxu0 0.0
    %1126 = vmatprep.subr.mxu0 0.0
    %1127 = vmatpush2.xpose.msra.mxu0 0.0
    %1128 = vmatprep.subr.mxu0 0.0
    %1129 = vmatpush2.xpose.msra.mxu0 0.0
    %1130 = vmatprep.subr.mxu0 0.0
    %1131 = vmatpush2.xpose.msra.mxu0 0.0
    %1132 = vmatprep.subr.mxu0 0.0
    %1133 = vmatpush2.xpose.msra.mxu0 0.0
    %1134 = vmatprep.mubr.f32.mxu0 0.0
    %1135 = vmatmul.mubr.f32.gmra.mxu0 %v1062
    %v1136 = vpop.f32.mrf.mxu0
    %v1137 = vadd.f32 %v508, %v1136
    %v1138 = vpop.f32.mrf.mxu0
    %1139 = vmatprep.mubr.f32.mxu0 0.0
    %1140 = vmatmul.mubr.f32.gmra.mxu0 %v1064
    %v1141 = vpop.f32.mrf.mxu0
    %v1142 = vadd.f32 %v509, %v1141
    %v1143 = vpop.f32.mrf.mxu0
    %1144 = vdwg.mxu0
    %v1145 = vsel %vm895, %v858, 0
    %v1147 = vsel %vm895, %v860, 0
    %v1149 = vsel %vm895, %v872, 0
    %v1151 = vsel %vm895, %v874, 0
    %1153 = vmatprep.subr.mxu0 0.0
    %1154 = vmatpush1.xpose.msra.mxu0 0.0
    %1155 = vmatprep.subr.mxu0 0.0
    %1156 = vmatpush1.xpose.msra.mxu0 0.0
    %1157 = vmatprep.subr.mxu0 0.0
    %1158 = vmatpush1.xpose.msra.mxu0 0.0
    %1159 = vmatprep.subr.mxu0 0.0
    %1160 = vmatpush1.xpose.msra.mxu0 0.0
    %1161 = vmatprep.subr.mxu0 0.0
    %1162 = vmatpush1.xpose.msra.mxu0 0.0
    %1163 = vmatprep.subr.mxu0 0.0
    %1164 = vmatpush1.xpose.msra.mxu0 0.0
    %1165 = vmatprep.subr.mxu0 0.0
    %1166 = vmatpush1.xpose.msra.mxu0 0.0
    %1167 = vmatprep.subr.mxu0 0.0
    %1168 = vmatpush1.xpose.msra.mxu0 0.0
    %1169 = vmatprep.subr.mxu0 0.0
    %1170 = vmatpush1.xpose.msra.mxu0 0.0
    %1171 = vmatprep.subr.mxu0 0.0
    %1172 = vmatpush1.xpose.msra.mxu0 0.0
    %1173 = vmatprep.subr.mxu0 0.0
    %1174 = vmatpush1.xpose.msra.mxu0 0.0
    %1175 = vmatprep.subr.mxu0 0.0
    %1176 = vmatpush1.xpose.msra.mxu0 0.0
    %1177 = vmatprep.subr.mxu0 0.0
    %1178 = vmatpush1.xpose.msra.mxu0 0.0
    %1179 = vmatprep.subr.mxu0 0.0
    %1180 = vmatpush1.xpose.msra.mxu0 0.0
    %1181 = vmatprep.subr.mxu0 0.0
    %1182 = vmatpush1.xpose.msra.mxu0 %v1151
    %1183 = vmatprep.subr.mxu0 0.0
    %1184 = vmatpush1.xpose.msra.mxu0 %v1149
    %1185 = vmatprep.subr.mxu0 0.0
    %1186 = vmatpush2.xpose.msra.mxu0 0.0
    %1187 = vmatprep.subr.mxu0 0.0
    %1188 = vmatpush2.xpose.msra.mxu0 0.0
    %1189 = vmatprep.subr.mxu0 0.0
    %1190 = vmatpush2.xpose.msra.mxu0 0.0
    %1191 = vmatprep.subr.mxu0 0.0
    %1192 = vmatpush2.xpose.msra.mxu0 0.0
    %1193 = vmatprep.subr.mxu0 0.0
    %1194 = vmatpush2.xpose.msra.mxu0 0.0
    %1195 = vmatprep.subr.mxu0 0.0
    %1196 = vmatpush2.xpose.msra.mxu0 0.0
    %1197 = vmatprep.subr.mxu0 0.0
    %1198 = vmatpush2.xpose.msra.mxu0 0.0
    %1199 = vmatprep.subr.mxu0 0.0
    %1200 = vmatpush2.xpose.msra.mxu0 0.0
    %1201 = vmatprep.subr.mxu0 0.0
    %1202 = vmatpush2.xpose.msra.mxu0 0.0
    %1203 = vmatprep.subr.mxu0 0.0
    %1204 = vmatpush2.xpose.msra.mxu0 0.0
    %1205 = vmatprep.subr.mxu0 0.0
    %1206 = vmatpush2.xpose.msra.mxu0 0.0
    %1207 = vmatprep.subr.mxu0 0.0
    %1208 = vmatpush2.xpose.msra.mxu0 0.0
    %1209 = vmatprep.subr.mxu0 0.0
    %1210 = vmatpush2.xpose.msra.mxu0 0.0
    %1211 = vmatprep.subr.mxu0 0.0
    %1212 = vmatpush2.xpose.msra.mxu0 0.0
    %1213 = vmatprep.subr.mxu0 0.0
    %1214 = vmatpush2.xpose.msra.mxu0 0.0
    %1215 = vmatprep.subr.mxu0 0.0
    %1216 = vmatpush2.xpose.msra.mxu0 0.0
    %1217 = vmatprep.mubr.f32.mxu0 0.0
    %1218 = vmatmul.mubr.f32.gmra.mxu0 %v1145
    %v1219 = vpop.f32.mrf.mxu0
    %v1220 = vadd.f32 %v508, %v1219
    %v1221 = vpop.f32.mrf.mxu0
    %1222 = vmatprep.mubr.f32.mxu0 0.0
    %1223 = vmatmul.mubr.f32.gmra.mxu0 %v1147
    %v1224 = vpop.f32.mrf.mxu0
    %v1225 = vadd.f32 %v509, %v1224
    %v1226 = vpop.f32.mrf.mxu0
    %1227 = vdwg.mxu0
    %vm1228 = vcmask 130048
    %v1229 = vsel %vm1228, %v971, -inf
    %1230 = vmax.xlane.f32.xlu0 %v1229
    %v1231 = vpop.xlane.xlu0 %1230
    %v1232 = vsel %vm1228, %v976, -inf
    %1233 = vmax.xlane.f32.xlu0 %v1232
    %v1234 = vpop.xlane.xlu0 %1233
    %v1235 = vsel %vm1228, %v1054, -inf
    %1236 = vmax.xlane.f32.xlu0 %v1235
    %v1237 = vpop.xlane.xlu0 %1236
    %v1238 = vsel %vm1228, %v1059, -inf
    %1239 = vmax.xlane.f32.xlu0 %v1238
    %v1240 = vpop.xlane.xlu0 %1239
    %v1241 = vsel %vm1228, %v1137, -inf
    %1242 = vmax.xlane.f32.xlu0 %v1241
    %v1243 = vpop.xlane.xlu0 %1242
    %v1244 = vsel %vm1228, %v1142, -inf
    %1245 = vmax.xlane.f32.xlu0 %v1244
    %v1246 = vpop.xlane.xlu0 %1245
    %v1247 = vsel %vm1228, %v1220, -inf
    %1248 = vmax.xlane.f32.xlu0 %v1247
    %v1249 = vpop.xlane.xlu0 %1248
    %v1250 = vsel %vm1228, %v1225, -inf
    %1251 = vmax.xlane.f32.xlu0 %v1250
    %v1252 = vpop.xlane.xlu0 %1251
    %v1253 = vsub.f32 %v971, %v1231
    %v1254 = vsub.f32 %v976, %v1234
    %v1255 = vsub.f32 %v1054, %v1237
    %v1256 = vsub.f32 %v1059, %v1240
    %v1257 = vsub.f32 %v1137, %v1243
    %v1258 = vsub.f32 %v1142, %v1246
    %v1259 = vsub.f32 %v1220, %v1249
    %v1260 = vsub.f32 %v1225, %v1252
    %v1261 = vmul.f32 %v1253, 1.442695
    %v1262 = vpow.pop %v1261
    %v1263 = vmul.f32 %v1254, 1.442695
    %v1264 = vpow.pop %v1263
    %v1265 = vmul.f32 %v1255, 1.442695
    %v1266 = vpow.pop %v1265
    %v1267 = vmul.f32 %v1256, 1.442695
    %v1268 = vpow.pop %v1267
    %v1269 = vmul.f32 %v1257, 1.442695
    %v1270 = vpow.pop %v1269
    %v1271 = vmul.f32 %v1258, 1.442695
    %v1272 = vpow.pop %v1271
    %v1273 = vmul.f32 %v1259, 1.442695
    %v1274 = vpow.pop %v1273
    %v1275 = vmul.f32 %v1260, 1.442695
    %v1276 = vpow.pop %v1275
    %v1277 = vsel %vm1228, %v1262, 0.0
    %1278 = vadd.xlane.f32.xlu0 %v1277
    %v1279 = vpop.xlane.xlu0 %1278
    %v1280 = vsel %vm1228, %v1264, 0.0
    %1281 = vadd.xlane.f32.xlu0 %v1280
    %v1282 = vpop.xlane.xlu0 %1281
    %v1283 = vsel %vm1228, %v1266, 0.0
    %1284 = vadd.xlane.f32.xlu0 %v1283
    %v1285 = vpop.xlane.xlu0 %1284
    %v1286 = vsel %vm1228, %v1268, 0.0
    %1287 = vadd.xlane.f32.xlu0 %v1286
    %v1288 = vpop.xlane.xlu0 %1287
    %v1289 = vsel %vm1228, %v1270, 0.0
    %1290 = vadd.xlane.f32.xlu0 %v1289
    %v1291 = vpop.xlane.xlu0 %1290
    %v1292 = vsel %vm1228, %v1272, 0.0
    %1293 = vadd.xlane.f32.xlu0 %v1292
    %v1294 = vpop.xlane.xlu0 %1293
    %v1295 = vsel %vm1228, %v1274, 0.0
    %1296 = vadd.xlane.f32.xlu0 %v1295
    %v1297 = vpop.xlane.xlu0 %1296
    %v1298 = vsel %vm1228, %v1276, 0.0
    %1299 = vadd.xlane.f32.xlu0 %v1298
    %v1300 = vpop.xlane.xlu0 %1299
    %v1301 = vrcp.pop %v1279
    %v1302 = vmul.f32 %v1262, %v1301
    %v1303 = vrcp.pop %v1282
    %v1304 = vmul.f32 %v1264, %v1303
    %v1305 = vrcp.pop %v1285
    %v1306 = vmul.f32 %v1266, %v1305
    %v1307 = vrcp.pop %v1288
    %v1308 = vmul.f32 %v1268, %v1307
    %v1309 = vrcp.pop %v1291
    %v1310 = vmul.f32 %v1270, %v1309
    %v1311 = vrcp.pop %v1294
    %v1312 = vmul.f32 %v1272, %v1311
    %v1313 = vrcp.pop %v1297
    %v1314 = vmul.f32 %v1274, %v1313
    %v1315 = vrcp.pop %v1300
    %v1316 = vmul.f32 %v1276, %v1315
    %v1318 = vsel %vm1228, %v1302, 0
    %v1321 = vsel %vm1228, %v1304, 0
    %1323 = vmatprep.subr.mxu0 0.0
    %1324 = vmatpush1.msra.mxu0 0.0
    %1325 = vmatprep.subr.mxu0 0.0
    %1326 = vmatpush1.msra.mxu0 0.0
    %1327 = vmatprep.subr.mxu0 0.0
    %1328 = vmatpush1.msra.mxu0 0.0
    %1329 = vmatprep.subr.mxu0 0.0
    %1330 = vmatpush1.msra.mxu0 0.0
    %1331 = vmatprep.subr.mxu0 0.0
    %1332 = vmatpush1.msra.mxu0 0.0
    %1333 = vmatprep.subr.mxu0 0.0
    %1334 = vmatpush1.msra.mxu0 0.0
    %1335 = vmatprep.subr.mxu0 0.0
    %1336 = vmatpush1.msra.mxu0 0.0
    %1337 = vmatprep.subr.mxu0 0.0
    %1338 = vmatpush1.msra.mxu0 0.0
    %1339 = vmatprep.subr.mxu0 0.0
    %1340 = vmatpush1.msra.mxu0 0.0
    %1341 = vmatprep.subr.mxu0 0.0
    %1342 = vmatpush1.msra.mxu0 0.0
    %1343 = vmatprep.subr.mxu0 0.0
    %1344 = vmatpush1.msra.mxu0 0.0
    %1345 = vmatprep.subr.mxu0 0.0
    %1346 = vmatpush1.msra.mxu0 0.0
    %1347 = vmatprep.subr.mxu0 0.0
    %1348 = vmatpush1.msra.mxu0 0.0
    %1349 = vmatprep.subr.mxu0 0.0
    %1350 = vmatpush1.msra.mxu0 0.0
    %1351 = vmatprep.subr.mxu0 0.0
    %1352 = vmatpush1.msra.mxu0 %v844
    %1353 = vmatprep.subr.mxu0 0.0
    %1354 = vmatpush1.msra.mxu0 %v839
    %1355 = vmatprep.subr.mxu0 0.0
    %1356 = vmatpush2.msra.mxu0 0.0
    %1357 = vmatprep.subr.mxu0 0.0
    %1358 = vmatpush2.msra.mxu0 0.0
    %1359 = vmatprep.subr.mxu0 0.0
    %1360 = vmatpush2.msra.mxu0 0.0
    %1361 = vmatprep.subr.mxu0 0.0
    %1362 = vmatpush2.msra.mxu0 0.0
    %1363 = vmatprep.subr.mxu0 0.0
    %1364 = vmatpush2.msra.mxu0 0.0
    %1365 = vmatprep.subr.mxu0 0.0
    %1366 = vmatpush2.msra.mxu0 0.0
    %1367 = vmatprep.subr.mxu0 0.0
    %1368 = vmatpush2.msra.mxu0 0.0
    %1369 = vmatprep.subr.mxu0 0.0
    %1370 = vmatpush2.msra.mxu0 0.0
    %1371 = vmatprep.subr.mxu0 0.0
    %1372 = vmatpush2.msra.mxu0 0.0
    %1373 = vmatprep.subr.mxu0 0.0
    %1374 = vmatpush2.msra.mxu0 0.0
    %1375 = vmatprep.subr.mxu0 0.0
    %1376 = vmatpush2.msra.mxu0 0.0
    %1377 = vmatprep.subr.mxu0 0.0
    %1378 = vmatpush2.msra.mxu0 0.0
    %1379 = vmatprep.subr.mxu0 0.0
    %1380 = vmatpush2.msra.mxu0 0.0
    %1381 = vmatprep.subr.mxu0 0.0
    %1382 = vmatpush2.msra.mxu0 0.0
    %1383 = vmatprep.subr.mxu0 0.0
    %1384 = vmatpush2.msra.mxu0 0.0
    %1385 = vmatprep.subr.mxu0 0.0
    %1386 = vmatpush2.msra.mxu0 0.0
    %1387 = vmatprep.mubr.f32.mxu0 0.0
    %1388 = vmatmul.mubr.f32.gmra.mxu0 %v1318
    %v1389 = vpop.f32.mrf.mxu0
    %v1390 = vadd.f32 0.0, %v1389
    %v1391 = vpop.f32.mrf.mxu0
    %1392 = vmatprep.mubr.f32.mxu0 0.0
    %1393 = vmatmul.mubr.f32.gmra.mxu0 %v1321
    %v1394 = vpop.f32.mrf.mxu0
    %v1395 = vadd.f32 0.0, %v1394
    %v1396 = vpop.f32.mrf.mxu0
    %1397 = vdwg.mxu0
    %v1399 = vsel %vm1228, %v1306, 0
    %v1402 = vsel %vm1228, %v1308, 0
    %1404 = vmatprep.subr.mxu0 0.0
    %1405 = vmatpush1.msra.mxu0 0.0
    %1406 = vmatprep.subr.mxu0 0.0
    %1407 = vmatpush1.msra.mxu0 0.0
    %1408 = vmatprep.subr.mxu0 0.0
    %1409 = vmatpush1.msra.mxu0 0.0
    %1410 = vmatprep.subr.mxu0 0.0
    %1411 = vmatpush1.msra.mxu0 0.0
    %1412 = vmatprep.subr.mxu0 0.0
    %1413 = vmatpush1.msra.mxu0 0.0
    %1414 = vmatprep.subr.mxu0 0.0
    %1415 = vmatpush1.msra.mxu0 0.0
    %1416 = vmatprep.subr.mxu0 0.0
    %1417 = vmatpush1.msra.mxu0 0.0
    %1418 = vmatprep.subr.mxu0 0.0
    %1419 = vmatpush1.msra.mxu0 0.0
    %1420 = vmatprep.subr.mxu0 0.0
    %1421 = vmatpush1.msra.mxu0 0.0
    %1422 = vmatprep.subr.mxu0 0.0
    %1423 = vmatpush1.msra.mxu0 0.0
    %1424 = vmatprep.subr.mxu0 0.0
    %1425 = vmatpush1.msra.mxu0 0.0
    %1426 = vmatprep.subr.mxu0 0.0
    %1427 = vmatpush1.msra.mxu0 0.0
    %1428 = vmatprep.subr.mxu0 0.0
    %1429 = vmatpush1.msra.mxu0 0.0
    %1430 = vmatprep.subr.mxu0 0.0
    %1431 = vmatpush1.msra.mxu0 0.0
    %1432 = vmatprep.subr.mxu0 0.0
    %1433 = vmatpush1.msra.mxu0 %v880
    %1434 = vmatprep.subr.mxu0 0.0
    %1435 = vmatpush1.msra.mxu0 %v878
    %1436 = vmatprep.subr.mxu0 0.0
    %1437 = vmatpush2.msra.mxu0 0.0
    %1438 = vmatprep.subr.mxu0 0.0
    %1439 = vmatpush2.msra.mxu0 0.0
    %1440 = vmatprep.subr.mxu0 0.0
    %1441 = vmatpush2.msra.mxu0 0.0
    %1442 = vmatprep.subr.mxu0 0.0
    %1443 = vmatpush2.msra.mxu0 0.0
    %1444 = vmatprep.subr.mxu0 0.0
    %1445 = vmatpush2.msra.mxu0 0.0
    %1446 = vmatprep.subr.mxu0 0.0
    %1447 = vmatpush2.msra.mxu0 0.0
    %1448 = vmatprep.subr.mxu0 0.0
    %1449 = vmatpush2.msra.mxu0 0.0
    %1450 = vmatprep.subr.mxu0 0.0
    %1451 = vmatpush2.msra.mxu0 0.0
    %1452 = vmatprep.subr.mxu0 0.0
    %1453 = vmatpush2.msra.mxu0 0.0
    %1454 = vmatprep.subr.mxu0 0.0
    %1455 = vmatpush2.msra.mxu0 0.0
    %1456 = vmatprep.subr.mxu0 0.0
    %1457 = vmatpush2.msra.mxu0 0.0
    %1458 = vmatprep.subr.mxu0 0.0
    %1459 = vmatpush2.msra.mxu0 0.0
    %1460 = vmatprep.subr.mxu0 0.0
    %1461 = vmatpush2.msra.mxu0 0.0
    %1462 = vmatprep.subr.mxu0 0.0
    %1463 = vmatpush2.msra.mxu0 0.0
    %1464 = vmatprep.subr.mxu0 0.0
    %1465 = vmatpush2.msra.mxu0 0.0
    %1466 = vmatprep.subr.mxu0 0.0
    %1467 = vmatpush2.msra.mxu0 0.0
    %1468 = vmatprep.mubr.f32.mxu0 0.0
    %1469 = vmatmul.mubr.f32.gmra.mxu0 %v1399
    %v1470 = vpop.f32.mrf.mxu0
    %v1471 = vadd.f32 0.0, %v1470
    %v1472 = vpop.f32.mrf.mxu0
    %1473 = vmatprep.mubr.f32.mxu0 0.0
    %1474 = vmatmul.mubr.f32.gmra.mxu0 %v1402
    %v1475 = vpop.f32.mrf.mxu0
    %v1476 = vadd.f32 0.0, %v1475
    %v1477 = vpop.f32.mrf.mxu0
    %1478 = vdwg.mxu0
    %v1480 = vsel %vm1228, %v1310, 0
    %v1483 = vsel %vm1228, %v1312, 0
    %1485 = vmatprep.subr.mxu0 0.0
    %1486 = vmatpush1.msra.mxu0 0.0
    %1487 = vmatprep.subr.mxu0 0.0
    %1488 = vmatpush1.msra.mxu0 0.0
    %1489 = vmatprep.subr.mxu0 0.0
    %1490 = vmatpush1.msra.mxu0 0.0
    %1491 = vmatprep.subr.mxu0 0.0
    %1492 = vmatpush1.msra.mxu0 0.0
    %1493 = vmatprep.subr.mxu0 0.0
    %1494 = vmatpush1.msra.mxu0 0.0
    %1495 = vmatprep.subr.mxu0 0.0
    %1496 = vmatpush1.msra.mxu0 0.0
    %1497 = vmatprep.subr.mxu0 0.0
    %1498 = vmatpush1.msra.mxu0 0.0
    %1499 = vmatprep.subr.mxu0 0.0
    %1500 = vmatpush1.msra.mxu0 0.0
    %1501 = vmatprep.subr.mxu0 0.0
    %1502 = vmatpush1.msra.mxu0 0.0
    %1503 = vmatprep.subr.mxu0 0.0
    %1504 = vmatpush1.msra.mxu0 0.0
    %1505 = vmatprep.subr.mxu0 0.0
    %1506 = vmatpush1.msra.mxu0 0.0
    %1507 = vmatprep.subr.mxu0 0.0
    %1508 = vmatpush1.msra.mxu0 0.0
    %1509 = vmatprep.subr.mxu0 0.0
    %1510 = vmatpush1.msra.mxu0 0.0
    %1511 = vmatprep.subr.mxu0 0.0
    %1512 = vmatpush1.msra.mxu0 0.0
    %1513 = vmatprep.subr.mxu0 0.0
    %1514 = vmatpush1.msra.mxu0 %v886
    %1515 = vmatprep.subr.mxu0 0.0
    %1516 = vmatpush1.msra.mxu0 %v884
    %1517 = vmatprep.subr.mxu0 0.0
    %1518 = vmatpush2.msra.mxu0 0.0
    %1519 = vmatprep.subr.mxu0 0.0
    %1520 = vmatpush2.msra.mxu0 0.0
    %1521 = vmatprep.subr.mxu0 0.0
    %1522 = vmatpush2.msra.mxu0 0.0
    %1523 = vmatprep.subr.mxu0 0.0
    %1524 = vmatpush2.msra.mxu0 0.0
    %1525 = vmatprep.subr.mxu0 0.0
    %1526 = vmatpush2.msra.mxu0 0.0
    %1527 = vmatprep.subr.mxu0 0.0
    %1528 = vmatpush2.msra.mxu0 0.0
    %1529 = vmatprep.subr.mxu0 0.0
    %1530 = vmatpush2.msra.mxu0 0.0
    %1531 = vmatprep.subr.mxu0 0.0
    %1532 = vmatpush2.msra.mxu0 0.0
    %1533 = vmatprep.subr.mxu0 0.0
    %1534 = vmatpush2.msra.mxu0 0.0
    %1535 = vmatprep.subr.mxu0 0.0
    %1536 = vmatpush2.msra.mxu0 0.0
    %1537 = vmatprep.subr.mxu0 0.0
    %1538 = vmatpush2.msra.mxu0 0.0
    %1539 = vmatprep.subr.mxu0 0.0
    %1540 = vmatpush2.msra.mxu0 0.0
    %1541 = vmatprep.subr.mxu0 0.0
    %1542 = vmatpush2.msra.mxu0 0.0
    %1543 = vmatprep.subr.mxu0 0.0
    %1544 = vmatpush2.msra.mxu0 0.0
    %1545 = vmatprep.subr.mxu0 0.0
    %1546 = vmatpush2.msra.mxu0 0.0
    %1547 = vmatprep.subr.mxu0 0.0
    %1548 = vmatpush2.msra.mxu0 0.0
    %1549 = vmatprep.mubr.f32.mxu0 0.0
    %1550 = vmatmul.mubr.f32.gmra.mxu0 %v1480
    %v1551 = vpop.f32.mrf.mxu0
    %v1552 = vadd.f32 0.0, %v1551
    %v1553 = vpop.f32.mrf.mxu0
    %1554 = vmatprep.mubr.f32.mxu0 0.0
    %1555 = vmatmul.mubr.f32.gmra.mxu0 %v1483
    %v1556 = vpop.f32.mrf.mxu0
    %v1557 = vadd.f32 0.0, %v1556
    %v1558 = vpop.f32.mrf.mxu0
    %1559 = vdwg.mxu0
    %v1561 = vsel %vm1228, %v1314, 0
    %v1564 = vsel %vm1228, %v1316, 0
    %1566 = vmatprep.subr.mxu0 0.0
    %1567 = vmatpush1.msra.mxu0 0.0
    %1568 = vmatprep.subr.mxu0 0.0
    %1569 = vmatpush1.msra.mxu0 0.0
    %1570 = vmatprep.subr.mxu0 0.0
    %1571 = vmatpush1.msra.mxu0 0.0
    %1572 = vmatprep.subr.mxu0 0.0
    %1573 = vmatpush1.msra.mxu0 0.0
    %1574 = vmatprep.subr.mxu0 0.0
    %1575 = vmatpush1.msra.mxu0 0.0
    %1576 = vmatprep.subr.mxu0 0.0
    %1577 = vmatpush1.msra.mxu0 0.0
    %1578 = vmatprep.subr.mxu0 0.0
    %1579 = vmatpush1.msra.mxu0 0.0
    %1580 = vmatprep.subr.mxu0 0.0
    %1581 = vmatpush1.msra.mxu0 0.0
    %1582 = vmatprep.subr.mxu0 0.0
    %1583 = vmatpush1.msra.mxu0 0.0
    %1584 = vmatprep.subr.mxu0 0.0
    %1585 = vmatpush1.msra.mxu0 0.0
    %1586 = vmatprep.subr.mxu0 0.0
    %1587 = vmatpush1.msra.mxu0 0.0
    %1588 = vmatprep.subr.mxu0 0.0
    %1589 = vmatpush1.msra.mxu0 0.0
    %1590 = vmatprep.subr.mxu0 0.0
    %1591 = vmatpush1.msra.mxu0 0.0
    %1592 = vmatprep.subr.mxu0 0.0
    %1593 = vmatpush1.msra.mxu0 0.0
    %1594 = vmatprep.subr.mxu0 0.0
    %1595 = vmatpush1.msra.mxu0 %v892
    %1596 = vmatprep.subr.mxu0 0.0
    %1597 = vmatpush1.msra.mxu0 %v890
    %1598 = vmatprep.subr.mxu0 0.0
    %1599 = vmatpush2.msra.mxu0 0.0
    %1600 = vmatprep.subr.mxu0 0.0
    %1601 = vmatpush2.msra.mxu0 0.0
    %1602 = vmatprep.subr.mxu0 0.0
    %1603 = vmatpush2.msra.mxu0 0.0
    %1604 = vmatprep.subr.mxu0 0.0
    %1605 = vmatpush2.msra.mxu0 0.0
    %1606 = vmatprep.subr.mxu0 0.0
    %1607 = vmatpush2.msra.mxu0 0.0
    %1608 = vmatprep.subr.mxu0 0.0
    %1609 = vmatpush2.msra.mxu0 0.0
    %1610 = vmatprep.subr.mxu0 0.0
    %1611 = vmatpush2.msra.mxu0 0.0
    %1612 = vmatprep.subr.mxu0 0.0
    %1613 = vmatpush2.msra.mxu0 0.0
    %1614 = vmatprep.subr.mxu0 0.0
    %1615 = vmatpush2.msra.mxu0 0.0
    %1616 = vmatprep.subr.mxu0 0.0
    %1617 = vmatpush2.msra.mxu0 0.0
    %1618 = vmatprep.subr.mxu0 0.0
    %1619 = vmatpush2.msra.mxu0 0.0
    %1620 = vmatprep.subr.mxu0 0.0
    %1621 = vmatpush2.msra.mxu0 0.0
    %1622 = vmatprep.subr.mxu0 0.0
    %1623 = vmatpush2.msra.mxu0 0.0
    %1624 = vmatprep.subr.mxu0 0.0
    %1625 = vmatpush2.msra.mxu0 0.0
    %1626 = vmatprep.subr.mxu0 0.0
    %1627 = vmatpush2.msra.mxu0 0.0
    %1628 = vmatprep.subr.mxu0 0.0
    %1629 = vmatpush2.msra.mxu0 0.0
    %1630 = vmatprep.mubr.f32.mxu0 0.0
    %1631 = vmatmul.mubr.f32.gmra.mxu0 %v1561
    %v1632 = vpop.f32.mrf.mxu0
    %v1633 = vadd.f32 0.0, %v1632
    %v1634 = vpop.f32.mrf.mxu0
    %1635 = vmatprep.mubr.f32.mxu0 0.0
    %1636 = vmatmul.mubr.f32.gmra.mxu0 %v1564
    %v1637 = vpop.f32.mrf.mxu0
    %v1638 = vadd.f32 0.0, %v1637
    %v1639 = vpop.f32.mrf.mxu0
    %1640 = vdwg.mxu0
    %1643 = vrot.lane.b32.xlu0 %v1471, 32
    %v1644 = vpop.permute.xlu0 %1643
    %1645 = vrot.lane.b32.xlu0 %v1476, 32
    %v1646 = vpop.permute.xlu0 %1645
    %1651 = vrot.lane.b32.xlu0 %v1552, 64
    %v1652 = vpop.permute.xlu0 %1651
    %1653 = vrot.lane.b32.xlu0 %v1557, 64
    %v1654 = vpop.permute.xlu0 %1653
    %1659 = vrot.lane.b32.xlu0 %v1633, 96
    %v1660 = vpop.permute.xlu0 %1659
    %1661 = vrot.lane.b32.xlu0 %v1638, 96
    %v1662 = vpop.permute.xlu0 %1661
    %v1665 = vsel %vm895, %v1390, %v1644
    %v1666 = vsel %vm895, %v1395, %v1646
    %vm1667 = vcmask 523264
    %v1668 = vsel %vm1667, %v1665, %v1652
    %v1669 = vsel %vm1667, %v1666, %v1654
    %vm1670 = vcmask 785408
    %v1671 = vsel %vm1670, %v1668, %v1660
    %v1672 = vsel %vm1670, %v1669, %v1662
    %v1673 = vld [vmem:[#allocation10] sm:$0xff]
    %v1674 = vld [vmem:[#allocation10 + $0x8] sm:$0xff]
    %v1675 = vld [vmem:[#allocation10 + $0x10] sm:$0xff]
    %v1676 = vld [vmem:[#allocation10 + $0x18] sm:$0xff]
    %v1677 = vld [vmem:[#allocation10 + $0x20] sm:$0xff]
    %v1678 = vld [vmem:[#allocation10 + $0x28] sm:$0xff]
    %v1679 = vld [vmem:[#allocation10 + $0x30] sm:$0xff]
    %v1680 = vld [vmem:[#allocation10 + $0x38] sm:$0xff]
    %v1681 = vld [vmem:[#allocation10 + $0x40] sm:$0xff]
    %v1682 = vld [vmem:[#allocation10 + $0x48] sm:$0xff]
    %v1683 = vld [vmem:[#allocation10 + $0x50] sm:$0xff]
    %v1684 = vld [vmem:[#allocation10 + $0x58] sm:$0xff]
    %v1685 = vld [vmem:[#allocation10 + $0x60] sm:$0xff]
    %v1686 = vld [vmem:[#allocation10 + $0x68] sm:$0xff]
    %v1687 = vld [vmem:[#allocation10 + $0x70] sm:$0xff]
    %v1688 = vld [vmem:[#allocation10 + $0x78] sm:$0xff]
    %v1689 = vld [vmem:[%s13] sm:$0x1]
    %v1691 = vlaneseq
    %v1692 = vshrl.u32 %v1691, 7
    %v1693 = vsub.s32 0, %v1692
    %v1694 = vrot.slane %v1689, %v1693
    %1696 = vmatprep.subr.mxu0 0.0
    %1697 = vmatpush1.msra.mxu0 %v1688
    %1698 = vmatprep.subr.mxu0 0.0
    %1699 = vmatpush1.msra.mxu0 %v1687
    %1700 = vmatprep.subr.mxu0 0.0
    %1701 = vmatpush1.msra.mxu0 %v1686
    %1702 = vmatprep.subr.mxu0 0.0
    %1703 = vmatpush1.msra.mxu0 %v1685
    %1704 = vmatprep.subr.mxu0 0.0
    %1705 = vmatpush1.msra.mxu0 %v1684
    %1706 = vmatprep.subr.mxu0 0.0
    %1707 = vmatpush1.msra.mxu0 %v1683
    %1708 = vmatprep.subr.mxu0 0.0
    %1709 = vmatpush1.msra.mxu0 %v1682
    %1710 = vmatprep.subr.mxu0 0.0
    %1711 = vmatpush1.msra.mxu0 %v1681
    %1712 = vmatprep.subr.mxu0 0.0
    %1713 = vmatpush1.msra.mxu0 %v1680
    %1714 = vmatprep.subr.mxu0 0.0
    %1715 = vmatpush1.msra.mxu0 %v1679
    %1716 = vmatprep.subr.mxu0 0.0
    %1717 = vmatpush1.msra.mxu0 %v1678
    %1718 = vmatprep.subr.mxu0 0.0
    %1719 = vmatpush1.msra.mxu0 %v1677
    %1720 = vmatprep.subr.mxu0 0.0
    %1721 = vmatpush1.msra.mxu0 %v1676
    %1722 = vmatprep.subr.mxu0 0.0
    %1723 = vmatpush1.msra.mxu0 %v1675
    %1724 = vmatprep.subr.mxu0 0.0
    %1725 = vmatpush1.msra.mxu0 %v1674
    %1726 = vmatprep.subr.mxu0 0.0
    %1727 = vmatpush1.msra.mxu0 %v1673
    %1728 = vmatprep.subr.mxu0 0.0
    %1729 = vmatpush2.msra.mxu0 0.0
    %1730 = vmatprep.subr.mxu0 0.0
    %1731 = vmatpush2.msra.mxu0 0.0
    %1732 = vmatprep.subr.mxu0 0.0
    %1733 = vmatpush2.msra.mxu0 0.0
    %1734 = vmatprep.subr.mxu0 0.0
    %1735 = vmatpush2.msra.mxu0 0.0
    %1736 = vmatprep.subr.mxu0 0.0
    %1737 = vmatpush2.msra.mxu0 0.0
    %1738 = vmatprep.subr.mxu0 0.0
    %1739 = vmatpush2.msra.mxu0 0.0
    %1740 = vmatprep.subr.mxu0 0.0
    %1741 = vmatpush2.msra.mxu0 0.0
    %1742 = vmatprep.subr.mxu0 0.0
    %1743 = vmatpush2.msra.mxu0 0.0
    %1744 = vmatprep.subr.mxu0 0.0
    %1745 = vmatpush2.msra.mxu0 0.0
    %1746 = vmatprep.subr.mxu0 0.0
    %1747 = vmatpush2.msra.mxu0 0.0
    %1748 = vmatprep.subr.mxu0 0.0
    %1749 = vmatpush2.msra.mxu0 0.0
    %1750 = vmatprep.subr.mxu0 0.0
    %1751 = vmatpush2.msra.mxu0 0.0
    %1752 = vmatprep.subr.mxu0 0.0
    %1753 = vmatpush2.msra.mxu0 0.0
    %1754 = vmatprep.subr.mxu0 0.0
    %1755 = vmatpush2.msra.mxu0 0.0
    %1756 = vmatprep.subr.mxu0 0.0
    %1757 = vmatpush2.msra.mxu0 0.0
    %1758 = vmatprep.subr.mxu0 0.0
    %1759 = vmatpush2.msra.mxu0 0.0
    %1760 = vmatprep.mubr.f32.mxu0 0.0
    %1761 = vmatmul.mubr.f32.gmra.mxu0 %v1671
    %v1762 = vpop.f32.mrf.mxu0
    %v1763 = vadd.f32 %v1694, %v1762
    %v1764 = vpop.f32.mrf.mxu0
    %1765 = vmatprep.mubr.f32.mxu0 0.0
    %1766 = vmatmul.mubr.f32.gmra.mxu0 %v1672
    %v1767 = vpop.f32.mrf.mxu0
    %v1768 = vadd.f32 %v1694, %v1767
    %v1769 = vpop.f32.mrf.mxu0
    %1770 = vdwg.mxu0
    %v1771 = vadd.f32 %v500, %v1763
    %v1772 = vadd.f32 %v505, %v1768
    %v1773 = vld [vmem:[%s14] sm:$0x1]
    %v1774 = vld [vmem:[%s15] sm:$0x1]
    %1775 = vadd.xlane.f32.xlu0 %v1771
    %v1776 = vpop.xlane.xlu0 %1775
    %1777 = vadd.xlane.f32.xlu0 %v1772
    %v1778 = vpop.xlane.xlu0 %1777
    %v1779 = vmul.f32 %v1776, %v516
    %v1780 = vmul.f32 %v1778, %v516
    %v1781 = vsub.f32 %v1771, %v1779
    %v1782 = vsub.f32 %v1772, %v1780
    %v1783 = vmul.f32 %v1781, %v1781
    %v1784 = vmul.f32 %v1782, %v1782
    %1785 = vadd.xlane.f32.xlu0 %v1783
    %v1786 = vpop.xlane.xlu0 %1785
    %1787 = vadd.xlane.f32.xlu0 %v1784
    %v1788 = vpop.xlane.xlu0 %1787
    %v1789 = vmul.f32 %v1786, %v516
    %v1790 = vmul.f32 %v1788, %v516
    %v1791 = vadd.f32 %v1789, 1e-12
    %v1792 = vadd.f32 %v1790, 1e-12
    %v1793 = vrsqrt.pop %v1791
    %v1794 = vrsqrt.pop %v1792
    %v1795 = vmul.f32 %v1781, %v1793
    %v1796 = vmul.f32 %v1782, %v1794
    %v1798 = vlaneseq
    %v1799 = vshrl.u32 %v1798, 7
    %v1800 = vsub.s32 0, %v1799
    %v1801 = vrot.slane %v1773, %v1800
    %v1803 = vmul.f32 %v1795, %v1801
    %v1804 = vmul.f32 %v1796, %v1801
    %v1806 = vlaneseq
    %v1807 = vshrl.u32 %v1806, 7
    %v1808 = vsub.s32 0, %v1807
    %v1809 = vrot.slane %v1774, %v1808
    %v1811 = vadd.f32 %v1803, %v1809
    %v1812 = vadd.f32 %v1804, %v1809
    %v1813 = vld [vmem:[#allocation11] sm:$0xff]
    %v1814 = vld [vmem:[#allocation11 + $0x8] sm:$0xff]
    %v1815 = vld [vmem:[#allocation11 + $0x10] sm:$0xff]
    %v1816 = vld [vmem:[#allocation11 + $0x18] sm:$0xff]
    %v1817 = vld [vmem:[#allocation11 + $0x20] sm:$0xff]
    %v1818 = vld [vmem:[#allocation11 + $0x28] sm:$0xff]
    %v1819 = vld [vmem:[#allocation11 + $0x30] sm:$0xff]
    %v1820 = vld [vmem:[#allocation11 + $0x38] sm:$0xff]
    %v1821 = vld [vmem:[#allocation11 + $0x40] sm:$0xff]
    %v1822 = vld [vmem:[#allocation11 + $0x48] sm:$0xff]
    %v1823 = vld [vmem:[#allocation11 + $0x50] sm:$0xff]
    %v1824 = vld [vmem:[#allocation11 + $0x58] sm:$0xff]
    %v1825 = vld [vmem:[#allocation11 + $0x60] sm:$0xff]
    %v1826 = vld [vmem:[#allocation11 + $0x68] sm:$0xff]
    %v1827 = vld [vmem:[#allocation11 + $0x70] sm:$0xff]
    %v1828 = vld [vmem:[#allocation11 + $0x78] sm:$0xff]
    %v1829 = vld [vmem:[#allocation11 + $0x80] sm:$0xff]
    %v1830 = vld [vmem:[#allocation11 + $0x88] sm:$0xff]
    %v1831 = vld [vmem:[#allocation11 + $0x90] sm:$0xff]
    %v1832 = vld [vmem:[#allocation11 + $0x98] sm:$0xff]
    %v1833 = vld [vmem:[#allocation11 + $0xa0] sm:$0xff]
    %v1834 = vld [vmem:[#allocation11 + $0xa8] sm:$0xff]
    %v1835 = vld [vmem:[#allocation11 + $0xb0] sm:$0xff]
    %v1836 = vld [vmem:[#allocation11 + $0xb8] sm:$0xff]
    %v1837 = vld [vmem:[#allocation11 + $0xc0] sm:$0xff]
    %v1838 = vld [vmem:[#allocation11 + $0xc8] sm:$0xff]
    %v1839 = vld [vmem:[#allocation11 + $0xd0] sm:$0xff]
    %v1840 = vld [vmem:[#allocation11 + $0xd8] sm:$0xff]
    %v1841 = vld [vmem:[#allocation11 + $0xe0] sm:$0xff]
    %v1842 = vld [vmem:[#allocation11 + $0xe8] sm:$0xff]
    %v1843 = vld [vmem:[#allocation11 + $0xf0] sm:$0xff]
    %v1844 = vld [vmem:[#allocation11 + $0xf8] sm:$0xff]
    %v1845 = vld [vmem:[%s17] sm:$0x3]
    %v1847 = vlaneseq
    %v1848 = vshrl.u32 %v1847, 7
    %v1849 = vsub.s32 0, %v1848
    %v1850 = vrot.slane %v1845, %v1849
    %v1851 = vlaneseq
    %v1852 = vshrl.u32 %v1851, 7
    %v1853 = vsub.s32 1, %v1852
    %v1854 = vrot.slane %v1845, %v1853
    %1857 = vmatprep.subr.mxu0 %v1844
    %1858 = vmatpush1.msra.mxu0 %v1843
    %1859 = vmatprep.subr.mxu0 %v1842
    %1860 = vmatpush1.msra.mxu0 %v1841
    %1861 = vmatprep.subr.mxu0 %v1840
    %1862 = vmatpush1.msra.mxu0 %v1839
    %1863 = vmatprep.subr.mxu0 %v1838
    %1864 = vmatpush1.msra.mxu0 %v1837
    %1865 = vmatprep.subr.mxu0 %v1836
    %1866 = vmatpush1.msra.mxu0 %v1835
    %1867 = vmatprep.subr.mxu0 %v1834
    %1868 = vmatpush1.msra.mxu0 %v1833
    %1869 = vmatprep.subr.mxu0 %v1832
    %1870 = vmatpush1.msra.mxu0 %v1831
    %1871 = vmatprep.subr.mxu0 %v1830
    %1872 = vmatpush1.msra.mxu0 %v1829
    %1873 = vmatprep.subr.mxu0 %v1828
    %1874 = vmatpush1.msra.mxu0 %v1827
    %1875 = vmatprep.subr.mxu0 %v1826
    %1876 = vmatpush1.msra.mxu0 %v1825
    %1877 = vmatprep.subr.mxu0 %v1824
    %1878 = vmatpush1.msra.mxu0 %v1823
    %1879 = vmatprep.subr.mxu0 %v1822
    %1880 = vmatpush1.msra.mxu0 %v1821
    %1881 = vmatprep.subr.mxu0 %v1820
    %1882 = vmatpush1.msra.mxu0 %v1819
    %1883 = vmatprep.subr.mxu0 %v1818
    %1884 = vmatpush1.msra.mxu0 %v1817
    %1885 = vmatprep.subr.mxu0 %v1816
    %1886 = vmatpush1.msra.mxu0 %v1815
    %1887 = vmatprep.subr.mxu0 %v1814
    %1888 = vmatpush1.msra.mxu0 %v1813
    %1889 = vmatprep.subr.mxu0 0.0
    %1890 = vmatpush2.msra.mxu0 0.0
    %1891 = vmatprep.subr.mxu0 0.0
    %1892 = vmatpush2.msra.mxu0 0.0
    %1893 = vmatprep.subr.mxu0 0.0
    %1894 = vmatpush2.msra.mxu0 0.0
    %1895 = vmatprep.subr.mxu0 0.0
    %1896 = vmatpush2.msra.mxu0 0.0
    %1897 = vmatprep.subr.mxu0 0.0
    %1898 = vmatpush2.msra.mxu0 0.0
    %1899 = vmatprep.subr.mxu0 0.0
    %1900 = vmatpush2.msra.mxu0 0.0
    %1901 = vmatprep.subr.mxu0 0.0
    %1902 = vmatpush2.msra.mxu0 0.0
    %1903 = vmatprep.subr.mxu0 0.0
    %1904 = vmatpush2.msra.mxu0 0.0
    %1905 = vmatprep.subr.mxu0 0.0
    %1906 = vmatpush2.msra.mxu0 0.0
    %1907 = vmatprep.subr.mxu0 0.0
    %1908 = vmatpush2.msra.mxu0 0.0
    %1909 = vmatprep.subr.mxu0 0.0
    %1910 = vmatpush2.msra.mxu0 0.0
    %1911 = vmatprep.subr.mxu0 0.0
    %1912 = vmatpush2.msra.mxu0 0.0
    %1913 = vmatprep.subr.mxu0 0.0
    %1914 = vmatpush2.msra.mxu0 0.0
    %1915 = vmatprep.subr.mxu0 0.0
    %1916 = vmatpush2.msra.mxu0 0.0
    %1917 = vmatprep.subr.mxu0 0.0
    %1918 = vmatpush2.msra.mxu0 0.0
    %1919 = vmatprep.subr.mxu0 0.0
    %1920 = vmatpush2.msra.mxu0 0.0
    %1921 = vmatprep.mubr.f32.mxu0 0.0
    %1922 = vmatmul.mubr.f32.gmra.mxu0 %v1811
    %v1923 = vpop.f32.mrf.mxu0
    %v1924 = vadd.f32 %v1850, %v1923
    %v1925 = vpop.f32.mrf.mxu0
    %v1926 = vadd.f32 %v1854, %v1925
    %1927 = vmatprep.mubr.f32.mxu0 0.0
    %1928 = vmatmul.mubr.f32.gmra.mxu0 %v1812
    %v1929 = vpop.f32.mrf.mxu0
    %v1930 = vadd.f32 %v1850, %v1929
    %v1931 = vpop.f32.mrf.mxu0
    %v1932 = vadd.f32 %v1854, %v1931
    %1933 = vdwg.mxu0
    %v1934 = vmul.f32 %v1924, 0.5
    %v1935 = vmul.f32 %v1926, 0.5
    %v1936 = vmul.f32 %v1930, 0.5
    %v1937 = vmul.f32 %v1932, 0.5
    %v1938 = vmul.f32 %v1924, 0.044715
    %v1939 = vmul.f32 %v1926, 0.044715
    %v1940 = vmul.f32 %v1930, 0.044715
    %v1941 = vmul.f32 %v1932, 0.044715
    %v1942 = vmul.f32 %v1938, %v1924
    %v1943 = vmul.f32 %v1939, %v1926
    %v1944 = vmul.f32 %v1940, %v1930
    %v1945 = vmul.f32 %v1941, %v1932
    %v1946 = vmul.f32 %v1942, %v1924
    %v1947 = vmul.f32 %v1943, %v1926
    %v1948 = vmul.f32 %v1944, %v1930
    %v1949 = vmul.f32 %v1945, %v1932
    %v1950 = vadd.f32 %v1924, %v1946
    %v1951 = vadd.f32 %v1926, %v1947
    %v1952 = vadd.f32 %v1930, %v1948
    %v1953 = vadd.f32 %v1932, %v1949
    %v1954 = vmul.f32 %v1950, 0.7978846
    %v1955 = vmul.f32 %v1951, 0.7978846
    %v1956 = vmul.f32 %v1952, 0.7978846
    %v1957 = vmul.f32 %v1953, 0.7978846
    %v1958 = vtanh.pop %v1954
    %v1959 = vtanh.pop %v1955
    %v1960 = vtanh.pop %v1956
    %v1961 = vtanh.pop %v1957
    %v1962 = vadd.f32 %v1958, 1.0
    %v1963 = vadd.f32 %v1959, 1.0
    %v1964 = vadd.f32 %v1960, 1.0
    %v1965 = vadd.f32 %v1961, 1.0
    %v1966 = vmul.f32 %v1934, %v1962
    %v1967 = vmul.f32 %v1935, %v1963
    %v1968 = vmul.f32 %v1936, %v1964
    %v1969 = vmul.f32 %v1937, %v1965
    %v1970 = vld [vmem:[#allocation13] sm:$0xff]
    %v1971 = vld [vmem:[#allocation13 + $0x8] sm:$0xff]
    %v1972 = vld [vmem:[#allocation13 + $0x10] sm:$0xff]
    %v1973 = vld [vmem:[#allocation13 + $0x18] sm:$0xff]
    %v1974 = vld [vmem:[#allocation13 + $0x20] sm:$0xff]
    %v1975 = vld [vmem:[#allocation13 + $0x28] sm:$0xff]
    %v1976 = vld [vmem:[#allocation13 + $0x30] sm:$0xff]
    %v1977 = vld [vmem:[#allocation13 + $0x38] sm:$0xff]
    %v1978 = vld [vmem:[#allocation13 + $0x40] sm:$0xff]
    %v1979 = vld [vmem:[#allocation13 + $0x48] sm:$0xff]
    %v1980 = vld [vmem:[#allocation13 + $0x50] sm:$0xff]
    %v1981 = vld [vmem:[#allocation13 + $0x58] sm:$0xff]
    %v1982 = vld [vmem:[#allocation13 + $0x60] sm:$0xff]
    %v1983 = vld [vmem:[#allocation13 + $0x68] sm:$0xff]
    %v1984 = vld [vmem:[#allocation13 + $0x70] sm:$0xff]
    %v1985 = vld [vmem:[#allocation13 + $0x78] sm:$0xff]
    %v1986 = vld [vmem:[#allocation13 + $0x80] sm:$0xff]
    %v1987 = vld [vmem:[#allocation13 + $0x88] sm:$0xff]
    %v1988 = vld [vmem:[#allocation13 + $0x90] sm:$0xff]
    %v1989 = vld [vmem:[#allocation13 + $0x98] sm:$0xff]
    %v1990 = vld [vmem:[#allocation13 + $0xa0] sm:$0xff]
    %v1991 = vld [vmem:[#allocation13 + $0xa8] sm:$0xff]
    %v1992 = vld [vmem:[#allocation13 + $0xb0] sm:$0xff]
    %v1993 = vld [vmem:[#allocation13 + $0xb8] sm:$0xff]
    %v1994 = vld [vmem:[#allocation13 + $0xc0] sm:$0xff]
    %v1995 = vld [vmem:[#allocation13 + $0xc8] sm:$0xff]
    %v1996 = vld [vmem:[#allocation13 + $0xd0] sm:$0xff]
    %v1997 = vld [vmem:[#allocation13 + $0xd8] sm:$0xff]
    %v1998 = vld [vmem:[#allocation13 + $0xe0] sm:$0xff]
    %v1999 = vld [vmem:[#allocation13 + $0xe8] sm:$0xff]
    %v2000 = vld [vmem:[#allocation13 + $0xf0] sm:$0xff]
    %v2001 = vld [vmem:[#allocation13 + $0xf8] sm:$0xff]
    %v2002 = vld [vmem:[%s19] sm:$0x1]
    %v2004 = vlaneseq
    %v2005 = vshrl.u32 %v2004, 7
    %v2006 = vsub.s32 0, %v2005
    %v2007 = vrot.slane %v2002, %v2006
    %2009 = vmatprep.subr.mxu0 0.0
    %2010 = vmatpush1.msra.mxu0 %v1985
    %2011 = vmatprep.subr.mxu0 0.0
    %2012 = vmatpush1.msra.mxu0 %v1984
    %2013 = vmatprep.subr.mxu0 0.0
    %2014 = vmatpush1.msra.mxu0 %v1983
    %2015 = vmatprep.subr.mxu0 0.0
    %2016 = vmatpush1.msra.mxu0 %v1982
    %2017 = vmatprep.subr.mxu0 0.0
    %2018 = vmatpush1.msra.mxu0 %v1981
    %2019 = vmatprep.subr.mxu0 0.0
    %2020 = vmatpush1.msra.mxu0 %v1980
    %2021 = vmatprep.subr.mxu0 0.0
    %2022 = vmatpush1.msra.mxu0 %v1979
    %2023 = vmatprep.subr.mxu0 0.0
    %2024 = vmatpush1.msra.mxu0 %v1978
    %2025 = vmatprep.subr.mxu0 0.0
    %2026 = vmatpush1.msra.mxu0 %v1977
    %2027 = vmatprep.subr.mxu0 0.0
    %2028 = vmatpush1.msra.mxu0 %v1976
    %2029 = vmatprep.subr.mxu0 0.0
    %2030 = vmatpush1.msra.mxu0 %v1975
    %2031 = vmatprep.subr.mxu0 0.0
    %2032 = vmatpush1.msra.mxu0 %v1974
    %2033 = vmatprep.subr.mxu0 0.0
    %2034 = vmatpush1.msra.mxu0 %v1973
    %2035 = vmatprep.subr.mxu0 0.0
    %2036 = vmatpush1.msra.mxu0 %v1972
    %2037 = vmatprep.subr.mxu0 0.0
    %2038 = vmatpush1.msra.mxu0 %v1971
    %2039 = vmatprep.subr.mxu0 0.0
    %2040 = vmatpush1.msra.mxu0 %v1970
    %2041 = vmatprep.subr.mxu0 0.0
    %2042 = vmatpush2.msra.mxu0 %v2001
    %2043 = vmatprep.subr.mxu0 0.0
    %2044 = vmatpush2.msra.mxu0 %v2000
    %2045 = vmatprep.subr.mxu0 0.0
    %2046 = vmatpush2.msra.mxu0 %v1999
    %2047 = vmatprep.subr.mxu0 0.0
    %2048 = vmatpush2.msra.mxu0 %v1998
    %2049 = vmatprep.subr.mxu0 0.0
    %2050 = vmatpush2.msra.mxu0 %v1997
    %2051 = vmatprep.subr.mxu0 0.0
    %2052 = vmatpush2.msra.mxu0 %v1996
    %2053 = vmatprep.subr.mxu0 0.0
    %2054 = vmatpush2.msra.mxu0 %v1995
    %2055 = vmatprep.subr.mxu0 0.0
    %2056 = vmatpush2.msra.mxu0 %v1994
    %2057 = vmatprep.subr.mxu0 0.0
    %2058 = vmatpush2.msra.mxu0 %v1993
    %2059 = vmatprep.subr.mxu0 0.0
    %2060 = vmatpush2.msra.mxu0 %v1992
    %2061 = vmatprep.subr.mxu0 0.0
    %2062 = vmatpush2.msra.mxu0 %v1991
    %2063 = vmatprep.subr.mxu0 0.0
    %2064 = vmatpush2.msra.mxu0 %v1990
    %2065 = vmatprep.subr.mxu0 0.0
    %2066 = vmatpush2.msra.mxu0 %v1989
    %2067 = vmatprep.subr.mxu0 0.0
    %2068 = vmatpush2.msra.mxu0 %v1988
    %2069 = vmatprep.subr.mxu0 0.0
    %2070 = vmatpush2.msra.mxu0 %v1987
    %2071 = vmatprep.subr.mxu0 0.0
    %2072 = vmatpush2.msra.mxu0 %v1986
    %2073 = vmatprep.mubr.f32.mxu0 %v1967
    %2074 = vmatmul.mubr.f32.gmra.mxu0 %v1966
    %v2075 = vpop.f32.mrf.mxu0
    %v2076 = vadd.f32 %v2007, %v2075
    %v2077 = vpop.f32.mrf.mxu0
    %2078 = vmatprep.mubr.f32.mxu0 %v1969
    %2079 = vmatmul.mubr.f32.gmra.mxu0 %v1968
    %v2080 = vpop.f32.mrf.mxu0
    %v2081 = vadd.f32 %v2007, %v2080
    %v2082 = vpop.f32.mrf.mxu0
    %2083 = vdwg.mxu0
    %v2084 = vadd.f32 %v1771, %v2076
    %v2085 = vadd.f32 %v1772, %v2081
    %s2086 = scalar_lea.vmem %s4, 1
    %v2087 = vld [vmem:[%s2086] sm:$0x1]
    %s2088 = scalar_lea.vmem %s5, 1
    %v2089 = vld [vmem:[%s2088] sm:$0x1]
    %2090 = vadd.xlane.f32.xlu0 %v2084
    %v2091 = vpop.xlane.xlu0 %2090
    %2092 = vadd.xlane.f32.xlu0 %v2085
    %v2093 = vpop.xlane.xlu0 %2092
    %v2094 = vmul.f32 %v2091, %v516
    %v2095 = vmul.f32 %v2093, %v516
    %v2096 = vsub.f32 %v2084, %v2094
    %v2097 = vsub.f32 %v2085, %v2095
    %v2098 = vmul.f32 %v2096, %v2096
    %v2099 = vmul.f32 %v2097, %v2097
    %2100 = vadd.xlane.f32.xlu0 %v2098
    %v2101 = vpop.xlane.xlu0 %2100
    %2102 = vadd.xlane.f32.xlu0 %v2099
    %v2103 = vpop.xlane.xlu0 %2102
    %v2104 = vmul.f32 %v2101, %v516
    %v2105 = vmul.f32 %v2103, %v516
    %v2106 = vadd.f32 %v2104, 1e-12
    %v2107 = vadd.f32 %v2105, 1e-12
    %v2108 = vrsqrt.pop %v2106
    %v2109 = vrsqrt.pop %v2107
    %v2110 = vmul.f32 %v2096, %v2108
    %v2111 = vmul.f32 %v2097, %v2109
    %v2113 = vlaneseq
    %v2114 = vshrl.u32 %v2113, 7
    %v2115 = vsub.s32 0, %v2114
    %v2116 = vrot.slane %v2087, %v2115
    %v2118 = vmul.f32 %v2110, %v2116
    %v2119 = vmul.f32 %v2111, %v2116
    %v2121 = vlaneseq
    %v2122 = vshrl.u32 %v2121, 7
    %v2123 = vsub.s32 0, %v2122
    %v2124 = vrot.slane %v2089, %v2123
    %v2126 = vadd.f32 %v2118, %v2124
    %v2127 = vadd.f32 %v2119, %v2124
    %s2128 = scalar_lea.vmem [#allocation5], 128
    %v2129 = vld [vmem:[%s2128] sm:$0xff]
    %v2130 = vld [vmem:[%s2128 + $0x8] sm:$0xff]
    %v2131 = vld [vmem:[%s2128 + $0x10] sm:$0xff]
    %v2132 = vld [vmem:[%s2128 + $0x18] sm:$0xff]
    %v2133 = vld [vmem:[%s2128 + $0x20] sm:$0xff]
    %v2134 = vld [vmem:[%s2128 + $0x28] sm:$0xff]
    %v2135 = vld [vmem:[%s2128 + $0x30] sm:$0xff]
    %v2136 = vld [vmem:[%s2128 + $0x38] sm:$0xff]
    %v2137 = vld [vmem:[%s2128 + $0x40] sm:$0xff]
    %v2138 = vld [vmem:[%s2128 + $0x48] sm:$0xff]
    %v2139 = vld [vmem:[%s2128 + $0x50] sm:$0xff]
    %v2140 = vld [vmem:[%s2128 + $0x58] sm:$0xff]
    %v2141 = vld [vmem:[%s2128 + $0x60] sm:$0xff]
    %v2142 = vld [vmem:[%s2128 + $0x68] sm:$0xff]
    %v2143 = vld [vmem:[%s2128 + $0x70] sm:$0xff]
    %v2144 = vld [vmem:[%s2128 + $0x78] sm:$0xff]
    %s2145 = scalar_lea.vmem %s7, 1
    %v2146 = vld [vmem:[%s2145] sm:$0x1]
    %v2148 = vlaneseq
    %v2149 = vshrl.u32 %v2148, 7
    %v2150 = vsub.s32 0, %v2149
    %v2151 = vrot.slane %v2146, %v2150
    %2153 = vmatprep.subr.mxu0 0.0
    %2154 = vmatpush1.msra.mxu0 %v2144
    %2155 = vmatprep.subr.mxu0 0.0
    %2156 = vmatpush1.msra.mxu0 %v2143
    %2157 = vmatprep.subr.mxu0 0.0
    %2158 = vmatpush1.msra.mxu0 %v2142
    %2159 = vmatprep.subr.mxu0 0.0
    %2160 = vmatpush1.msra.mxu0 %v2141
    %2161 = vmatprep.subr.mxu0 0.0
    %2162 = vmatpush1.msra.mxu0 %v2140
    %2163 = vmatprep.subr.mxu0 0.0
    %2164 = vmatpush1.msra.mxu0 %v2139
    %2165 = vmatprep.subr.mxu0 0.0
    %2166 = vmatpush1.msra.mxu0 %v2138
    %2167 = vmatprep.subr.mxu0 0.0
    %2168 = vmatpush1.msra.mxu0 %v2137
    %2169 = vmatprep.subr.mxu0 0.0
    %2170 = vmatpush1.msra.mxu0 %v2136
    %2171 = vmatprep.subr.mxu0 0.0
    %2172 = vmatpush1.msra.mxu0 %v2135
    %2173 = vmatprep.subr.mxu0 0.0
    %2174 = vmatpush1.msra.mxu0 %v2134
    %2175 = vmatprep.subr.mxu0 0.0
    %2176 = vmatpush1.msra.mxu0 %v2133
    %2177 = vmatprep.subr.mxu0 0.0
    %2178 = vmatpush1.msra.mxu0 %v2132
    %2179 = vmatprep.subr.mxu0 0.0
    %2180 = vmatpush1.msra.mxu0 %v2131
    %2181 = vmatprep.subr.mxu0 0.0
    %2182 = vmatpush1.msra.mxu0 %v2130
    %2183 = vmatprep.subr.mxu0 0.0
    %2184 = vmatpush1.msra.mxu0 %v2129
    %2185 = vmatprep.subr.mxu0 0.0
    %2186 = vmatpush2.msra.mxu0 0.0
    %2187 = vmatprep.subr.mxu0 0.0
    %2188 = vmatpush2.msra.mxu0 0.0
    %2189 = vmatprep.subr.mxu0 0.0
    %2190 = vmatpush2.msra.mxu0 0.0
    %2191 = vmatprep.subr.mxu0 0.0
    %2192 = vmatpush2.msra.mxu0 0.0
    %2193 = vmatprep.subr.mxu0 0.0
    %2194 = vmatpush2.msra.mxu0 0.0
    %2195 = vmatprep.subr.mxu0 0.0
    %2196 = vmatpush2.msra.mxu0 0.0
    %2197 = vmatprep.subr.mxu0 0.0
    %2198 = vmatpush2.msra.mxu0 0.0
    %2199 = vmatprep.subr.mxu0 0.0
    %2200 = vmatpush2.msra.mxu0 0.0
    %2201 = vmatprep.subr.mxu0 0.0
    %2202 = vmatpush2.msra.mxu0 0.0
    %2203 = vmatprep.subr.mxu0 0.0
    %2204 = vmatpush2.msra.mxu0 0.0
    %2205 = vmatprep.subr.mxu0 0.0
    %2206 = vmatpush2.msra.mxu0 0.0
    %2207 = vmatprep.subr.mxu0 0.0
    %2208 = vmatpush2.msra.mxu0 0.0
    %2209 = vmatprep.subr.mxu0 0.0
    %2210 = vmatpush2.msra.mxu0 0.0
    %2211 = vmatprep.subr.mxu0 0.0
    %2212 = vmatpush2.msra.mxu0 0.0
    %2213 = vmatprep.subr.mxu0 0.0
    %2214 = vmatpush2.msra.mxu0 0.0
    %2215 = vmatprep.subr.mxu0 0.0
    %2216 = vmatpush2.msra.mxu0 0.0
    %2217 = vmatprep.mubr.f32.mxu0 0.0
    %2218 = vmatmul.mubr.f32.gmra.mxu0 %v2126
    %v2219 = vpop.f32.mrf.mxu0
    %v2220 = vadd.f32 %v2151, %v2219
    %v2221 = vpop.f32.mrf.mxu0
    %2222 = vmatprep.mubr.f32.mxu0 0.0
    %2223 = vmatmul.mubr.f32.gmra.mxu0 %v2127
    %v2224 = vpop.f32.mrf.mxu0
    %v2225 = vadd.f32 %v2151, %v2224
    %v2226 = vpop.f32.mrf.mxu0
    %2227 = vdwg.mxu0
    %v2228 = vmul.f32 %v2220, 0.17677669
    %v2229 = vmul.f32 %v2225, 0.17677669
    %s2230 = scalar_lea.vmem [#allocation7], 128
    %v2231 = vld [vmem:[%s2230] sm:$0xff]
    %v2232 = vld [vmem:[%s2230 + $0x8] sm:$0xff]
    %v2233 = vld [vmem:[%s2230 + $0x10] sm:$0xff]
    %v2234 = vld [vmem:[%s2230 + $0x18] sm:$0xff]
    %v2235 = vld [vmem:[%s2230 + $0x20] sm:$0xff]
    %v2236 = vld [vmem:[%s2230 + $0x28] sm:$0xff]
    %v2237 = vld [vmem:[%s2230 + $0x30] sm:$0xff]
    %v2238 = vld [vmem:[%s2230 + $0x38] sm:$0xff]
    %v2239 = vld [vmem:[%s2230 + $0x40] sm:$0xff]
    %v2240 = vld [vmem:[%s2230 + $0x48] sm:$0xff]
    %v2241 = vld [vmem:[%s2230 + $0x50] sm:$0xff]
    %v2242 = vld [vmem:[%s2230 + $0x58] sm:$0xff]
    %v2243 = vld [vmem:[%s2230 + $0x60] sm:$0xff]
    %v2244 = vld [vmem:[%s2230 + $0x68] sm:$0xff]
    %v2245 = vld [vmem:[%s2230 + $0x70] sm:$0xff]
    %v2246 = vld [vmem:[%s2230 + $0x78] sm:$0xff]
    %s2247 = scalar_lea.vmem %s9, 1
    %v2248 = vld [vmem:[%s2247] sm:$0x1]
    %v2250 = vlaneseq
    %v2251 = vshrl.u32 %v2250, 7
    %v2252 = vsub.s32 0, %v2251
    %v2253 = vrot.slane %v2248, %v2252
    %2255 = vmatprep.subr.mxu0 0.0
    %2256 = vmatpush1.msra.mxu0 %v2246
    %2257 = vmatprep.subr.mxu0 0.0
    %2258 = vmatpush1.msra.mxu0 %v2245
    %2259 = vmatprep.subr.mxu0 0.0
    %2260 = vmatpush1.msra.mxu0 %v2244
    %2261 = vmatprep.subr.mxu0 0.0
    %2262 = vmatpush1.msra.mxu0 %v2243
    %2263 = vmatprep.subr.mxu0 0.0
    %2264 = vmatpush1.msra.mxu0 %v2242
    %2265 = vmatprep.subr.mxu0 0.0
    %2266 = vmatpush1.msra.mxu0 %v2241
    %2267 = vmatprep.subr.mxu0 0.0
    %2268 = vmatpush1.msra.mxu0 %v2240
    %2269 = vmatprep.subr.mxu0 0.0
    %2270 = vmatpush1.msra.mxu0 %v2239
    %2271 = vmatprep.subr.mxu0 0.0
    %2272 = vmatpush1.msra.mxu0 %v2238
    %2273 = vmatprep.subr.mxu0 0.0
    %2274 = vmatpush1.msra.mxu0 %v2237
    %2275 = vmatprep.subr.mxu0 0.0
    %2276 = vmatpush1.msra.mxu0 %v2236
    %2277 = vmatprep.subr.mxu0 0.0
    %2278 = vmatpush1.msra.mxu0 %v2235
    %2279 = vmatprep.subr.mxu0 0.0
    %2280 = vmatpush1.msra.mxu0 %v2234
    %2281 = vmatprep.subr.mxu0 0.0
    %2282 = vmatpush1.msra.mxu0 %v2233
    %2283 = vmatprep.subr.mxu0 0.0
    %2284 = vmatpush1.msra.mxu0 %v2232
    %2285 = vmatprep.subr.mxu0 0.0
    %2286 = vmatpush1.msra.mxu0 %v2231
    %2287 = vmatprep.subr.mxu0 0.0
    %2288 = vmatpush2.msra.mxu0 0.0
    %2289 = vmatprep.subr.mxu0 0.0
    %2290 = vmatpush2.msra.mxu0 0.0
    %2291 = vmatprep.subr.mxu0 0.0
    %2292 = vmatpush2.msra.mxu0 0.0
    %2293 = vmatprep.subr.mxu0 0.0
    %2294 = vmatpush2.msra.mxu0 0.0
    %2295 = vmatprep.subr.mxu0 0.0
    %2296 = vmatpush2.msra.mxu0 0.0
    %2297 = vmatprep.subr.mxu0 0.0
    %2298 = vmatpush2.msra.mxu0 0.0
    %2299 = vmatprep.subr.mxu0 0.0
    %2300 = vmatpush2.msra.mxu0 0.0
    %2301 = vmatprep.subr.mxu0 0.0
    %2302 = vmatpush2.msra.mxu0 0.0
    %2303 = vmatprep.subr.mxu0 0.0
    %2304 = vmatpush2.msra.mxu0 0.0
    %2305 = vmatprep.subr.mxu0 0.0
    %2306 = vmatpush2.msra.mxu0 0.0
    %2307 = vmatprep.subr.mxu0 0.0
    %2308 = vmatpush2.msra.mxu0 0.0
    %2309 = vmatprep.subr.mxu0 0.0
    %2310 = vmatpush2.msra.mxu0 0.0
    %2311 = vmatprep.subr.mxu0 0.0
    %2312 = vmatpush2.msra.mxu0 0.0
    %2313 = vmatprep.subr.mxu0 0.0
    %2314 = vmatpush2.msra.mxu0 0.0
    %2315 = vmatprep.subr.mxu0 0.0
    %2316 = vmatpush2.msra.mxu0 0.0
    %2317 = vmatprep.subr.mxu0 0.0
    %2318 = vmatpush2.msra.mxu0 0.0
    %2319 = vmatprep.mubr.f32.mxu0 0.0
    %2320 = vmatmul.mubr.f32.gmra.mxu0 %v2126
    %v2321 = vpop.f32.mrf.mxu0
    %v2322 = vadd.f32 %v2253, %v2321
    %v2323 = vpop.f32.mrf.mxu0
    %2324 = vmatprep.mubr.f32.mxu0 0.0
    %2325 = vmatmul.mubr.f32.gmra.mxu0 %v2127
    %v2326 = vpop.f32.mrf.mxu0
    %v2327 = vadd.f32 %v2253, %v2326
    %v2328 = vpop.f32.mrf.mxu0
    %2329 = vdwg.mxu0
    %s2330 = scalar_lea.vmem [#allocation8], 128
    %v2331 = vld [vmem:[%s2330] sm:$0xff]
    %v2332 = vld [vmem:[%s2330 + $0x8] sm:$0xff]
    %v2333 = vld [vmem:[%s2330 + $0x10] sm:$0xff]
    %v2334 = vld [vmem:[%s2330 + $0x18] sm:$0xff]
    %v2335 = vld [vmem:[%s2330 + $0x20] sm:$0xff]
    %v2336 = vld [vmem:[%s2330 + $0x28] sm:$0xff]
    %v2337 = vld [vmem:[%s2330 + $0x30] sm:$0xff]
    %v2338 = vld [vmem:[%s2330 + $0x38] sm:$0xff]
    %v2339 = vld [vmem:[%s2330 + $0x40] sm:$0xff]
    %v2340 = vld [vmem:[%s2330 + $0x48] sm:$0xff]
    %v2341 = vld [vmem:[%s2330 + $0x50] sm:$0xff]
    %v2342 = vld [vmem:[%s2330 + $0x58] sm:$0xff]
    %v2343 = vld [vmem:[%s2330 + $0x60] sm:$0xff]
    %v2344 = vld [vmem:[%s2330 + $0x68] sm:$0xff]
    %v2345 = vld [vmem:[%s2330 + $0x70] sm:$0xff]
    %v2346 = vld [vmem:[%s2330 + $0x78] sm:$0xff]
    %s2347 = scalar_lea.vmem %s11, 1
    %v2348 = vld [vmem:[%s2347] sm:$0x1]
    %v2350 = vlaneseq
    %v2351 = vshrl.u32 %v2350, 7
    %v2352 = vsub.s32 0, %v2351
    %v2353 = vrot.slane %v2348, %v2352
    %2355 = vmatprep.subr.mxu0 0.0
    %2356 = vmatpush1.msra.mxu0 %v2346
    %2357 = vmatprep.subr.mxu0 0.0
    %2358 = vmatpush1.msra.mxu0 %v2345
    %2359 = vmatprep.subr.mxu0 0.0
    %2360 = vmatpush1.msra.mxu0 %v2344
    %2361 = vmatprep.subr.mxu0 0.0
    %2362 = vmatpush1.msra.mxu0 %v2343
    %2363 = vmatprep.subr.mxu0 0.0
    %2364 = vmatpush1.msra.mxu0 %v2342
    %2365 = vmatprep.subr.mxu0 0.0
    %2366 = vmatpush1.msra.mxu0 %v2341
    %2367 = vmatprep.subr.mxu0 0.0
    %2368 = vmatpush1.msra.mxu0 %v2340
    %2369 = vmatprep.subr.mxu0 0.0
    %2370 = vmatpush1.msra.mxu0 %v2339
    %2371 = vmatprep.subr.mxu0 0.0
    %2372 = vmatpush1.msra.mxu0 %v2338
    %2373 = vmatprep.subr.mxu0 0.0
    %2374 = vmatpush1.msra.mxu0 %v2337
    %2375 = vmatprep.subr.mxu0 0.0
    %2376 = vmatpush1.msra.mxu0 %v2336
    %2377 = vmatprep.subr.mxu0 0.0
    %2378 = vmatpush1.msra.mxu0 %v2335
    %2379 = vmatprep.subr.mxu0 0.0
    %2380 = vmatpush1.msra.mxu0 %v2334
    %2381 = vmatprep.subr.mxu0 0.0
    %2382 = vmatpush1.msra.mxu0 %v2333
    %2383 = vmatprep.subr.mxu0 0.0
    %2384 = vmatpush1.msra.mxu0 %v2332
    %2385 = vmatprep.subr.mxu0 0.0
    %2386 = vmatpush1.msra.mxu0 %v2331
    %2387 = vmatprep.subr.mxu0 0.0
    %2388 = vmatpush2.msra.mxu0 0.0
    %2389 = vmatprep.subr.mxu0 0.0
    %2390 = vmatpush2.msra.mxu0 0.0
    %2391 = vmatprep.subr.mxu0 0.0
    %2392 = vmatpush2.msra.mxu0 0.0
    %2393 = vmatprep.subr.mxu0 0.0
    %2394 = vmatpush2.msra.mxu0 0.0
    %2395 = vmatprep.subr.mxu0 0.0
    %2396 = vmatpush2.msra.mxu0 0.0
    %2397 = vmatprep.subr.mxu0 0.0
    %2398 = vmatpush2.msra.mxu0 0.0
    %2399 = vmatprep.subr.mxu0 0.0
    %2400 = vmatpush2.msra.mxu0 0.0
    %2401 = vmatprep.subr.mxu0 0.0
    %2402 = vmatpush2.msra.mxu0 0.0
    %2403 = vmatprep.subr.mxu0 0.0
    %2404 = vmatpush2.msra.mxu0 0.0
    %2405 = vmatprep.subr.mxu0 0.0
    %2406 = vmatpush2.msra.mxu0 0.0
    %2407 = vmatprep.subr.mxu0 0.0
    %2408 = vmatpush2.msra.mxu0 0.0
    %2409 = vmatprep.subr.mxu0 0.0
    %2410 = vmatpush2.msra.mxu0 0.0
    %2411 = vmatprep.subr.mxu0 0.0
    %2412 = vmatpush2.msra.mxu0 0.0
    %2413 = vmatprep.subr.mxu0 0.0
    %2414 = vmatpush2.msra.mxu0 0.0
    %2415 = vmatprep.subr.mxu0 0.0
    %2416 = vmatpush2.msra.mxu0 0.0
    %2417 = vmatprep.subr.mxu0 0.0
    %2418 = vmatpush2.msra.mxu0 0.0
    %2419 = vmatprep.mubr.f32.mxu0 0.0
    %2420 = vmatmul.mubr.f32.gmra.mxu0 %v2126
    %v2421 = vpop.f32.mrf.mxu0
    %v2422 = vadd.f32 %v2353, %v2421
    %v2423 = vpop.f32.mrf.mxu0
    %2424 = vmatprep.mubr.f32.mxu0 0.0
    %2425 = vmatmul.mubr.f32.gmra.mxu0 %v2127
    %v2426 = vpop.f32.mrf.mxu0
    %v2427 = vadd.f32 %v2353, %v2426
    %v2428 = vpop.f32.mrf.mxu0
    %2429 = vdwg.mxu0
    %2432 = vrot.lane.b32.xlu0 %v2228, 96
    %v2433 = vpop.permute.xlu0 %2432
    %2434 = vrot.lane.b32.xlu0 %v2229, 96
    %v2435 = vpop.permute.xlu0 %2434
    %2436 = vrot.lane.b32.xlu0 %v2228, 64
    %v2437 = vpop.permute.xlu0 %2436
    %2438 = vrot.lane.b32.xlu0 %v2229, 64
    %v2439 = vpop.permute.xlu0 %2438
    %2440 = vrot.lane.b32.xlu0 %v2228, 32
    %v2441 = vpop.permute.xlu0 %2440
    %2442 = vrot.lane.b32.xlu0 %v2229, 32
    %v2443 = vpop.permute.xlu0 %2442
    %2446 = vrot.lane.b32.xlu0 %v2322, 96
    %v2447 = vpop.permute.xlu0 %2446
    %2448 = vrot.lane.b32.xlu0 %v2327, 96
    %v2449 = vpop.permute.xlu0 %2448
    %2450 = vrot.lane.b32.xlu0 %v2322, 64
    %v2451 = vpop.permute.xlu0 %2450
    %2452 = vrot.lane.b32.xlu0 %v2327, 64
    %v2453 = vpop.permute.xlu0 %2452
    %2454 = vrot.lane.b32.xlu0 %v2322, 32
    %v2455 = vpop.permute.xlu0 %2454
    %2456 = vrot.lane.b32.xlu0 %v2327, 32
    %v2457 = vpop.permute.xlu0 %2456
    %2460 = vrot.lane.b32.xlu0 %v2422, 96
    %v2461 = vpop.permute.xlu0 %2460
    %2462 = vrot.lane.b32.xlu0 %v2427, 96
    %v2463 = vpop.permute.xlu0 %2462
    %2466 = vrot.lane.b32.xlu0 %v2422, 64
    %v2467 = vpop.permute.xlu0 %2466
    %2468 = vrot.lane.b32.xlu0 %v2427, 64
    %v2469 = vpop.permute.xlu0 %2468
    %2472 = vrot.lane.b32.xlu0 %v2422, 32
    %v2473 = vpop.permute.xlu0 %2472
    %2474 = vrot.lane.b32.xlu0 %v2427, 32
    %v2475 = vpop.permute.xlu0 %2474
    %v2478 = vsel %vm895, %v2228, 0
    %v2480 = vsel %vm895, %v2229, 0
    %v2482 = vsel %vm895, %v2322, 0
    %v2484 = vsel %vm895, %v2327, 0
    %2486 = vmatprep.subr.mxu0 0.0
    %2487 = vmatpush1.xpose.msra.mxu0 0.0
    %2488 = vmatprep.subr.mxu0 0.0
    %2489 = vmatpush1.xpose.msra.mxu0 0.0
    %2490 = vmatprep.subr.mxu0 0.0
    %2491 = vmatpush1.xpose.msra.mxu0 0.0
    %2492 = vmatprep.subr.mxu0 0.0
    %2493 = vmatpush1.xpose.msra.mxu0 0.0
    %2494 = vmatprep.subr.mxu0 0.0
    %2495 = vmatpush1.xpose.msra.mxu0 0.0
    %2496 = vmatprep.subr.mxu0 0.0
    %2497 = vmatpush1.xpose.msra.mxu0 0.0
    %2498 = vmatprep.subr.mxu0 0.0
    %2499 = vmatpush1.xpose.msra.mxu0 0.0
    %2500 = vmatprep.subr.mxu0 0.0
    %2501 = vmatpush1.xpose.msra.mxu0 0.0
    %2502 = vmatprep.subr.mxu0 0.0
    %2503 = vmatpush1.xpose.msra.mxu0 0.0
    %2504 = vmatprep.subr.mxu0 0.0
    %2505 = vmatpush1.xpose.msra.mxu0 0.0
    %2506 = vmatprep.subr.mxu0 0.0
    %2507 = vmatpush1.xpose.msra.mxu0 0.0
    %2508 = vmatprep.subr.mxu0 0.0
    %2509 = vmatpush1.xpose.msra.mxu0 0.0
    %2510 = vmatprep.subr.mxu0 0.0
    %2511 = vmatpush1.xpose.msra.mxu0 0.0
    %2512 = vmatprep.subr.mxu0 0.0
    %2513 = vmatpush1.xpose.msra.mxu0 0.0
    %2514 = vmatprep.subr.mxu0 0.0
    %2515 = vmatpush1.xpose.msra.mxu0 %v2484
    %2516 = vmatprep.subr.mxu0 0.0
    %2517 = vmatpush1.xpose.msra.mxu0 %v2482
    %2518 = vmatprep.subr.mxu0 0.0
    %2519 = vmatpush2.xpose.msra.mxu0 0.0
    %2520 = vmatprep.subr.mxu0 0.0
    %2521 = vmatpush2.xpose.msra.mxu0 0.0
    %2522 = vmatprep.subr.mxu0 0.0
    %2523 = vmatpush2.xpose.msra.mxu0 0.0
    %2524 = vmatprep.subr.mxu0 0.0
    %2525 = vmatpush2.xpose.msra.mxu0 0.0
    %2526 = vmatprep.subr.mxu0 0.0
    %2527 = vmatpush2.xpose.msra.mxu0 0.0
    %2528 = vmatprep.subr.mxu0 0.0
    %2529 = vmatpush2.xpose.msra.mxu0 0.0
    %2530 = vmatprep.subr.mxu0 0.0
    %2531 = vmatpush2.xpose.msra.mxu0 0.0
    %2532 = vmatprep.subr.mxu0 0.0
    %2533 = vmatpush2.xpose.msra.mxu0 0.0
    %2534 = vmatprep.subr.mxu0 0.0
    %2535 = vmatpush2.xpose.msra.mxu0 0.0
    %2536 = vmatprep.subr.mxu0 0.0
    %2537 = vmatpush2.xpose.msra.mxu0 0.0
    %2538 = vmatprep.subr.mxu0 0.0
    %2539 = vmatpush2.xpose.msra.mxu0 0.0
    %2540 = vmatprep.subr.mxu0 0.0
    %2541 = vmatpush2.xpose.msra.mxu0 0.0
    %2542 = vmatprep.subr.mxu0 0.0
    %2543 = vmatpush2.xpose.msra.mxu0 0.0
    %2544 = vmatprep.subr.mxu0 0.0
    %2545 = vmatpush2.xpose.msra.mxu0 0.0
    %2546 = vmatprep.subr.mxu0 0.0
    %2547 = vmatpush2.xpose.msra.mxu0 0.0
    %2548 = vmatprep.subr.mxu0 0.0
    %2549 = vmatpush2.xpose.msra.mxu0 0.0
    %2550 = vmatprep.mubr.f32.mxu0 0.0
    %2551 = vmatmul.mubr.f32.gmra.mxu0 %v2478
    %v2552 = vpop.f32.mrf.mxu0
    %v2553 = vadd.f32 %v508, %v2552
    %v2554 = vpop.f32.mrf.mxu0
    %2555 = vmatprep.mubr.f32.mxu0 0.0
    %2556 = vmatmul.mubr.f32.gmra.mxu0 %v2480
    %v2557 = vpop.f32.mrf.mxu0
    %v2558 = vadd.f32 %v509, %v2557
    %v2559 = vpop.f32.mrf.mxu0
    %2560 = vdwg.mxu0
    %v2561 = vsel %vm895, %v2433, 0
    %v2563 = vsel %vm895, %v2435, 0
    %v2565 = vsel %vm895, %v2447, 0
    %v2567 = vsel %vm895, %v2449, 0
    %2569 = vmatprep.subr.mxu0 0.0
    %2570 = vmatpush1.xpose.msra.mxu0 0.0
    %2571 = vmatprep.subr.mxu0 0.0
    %2572 = vmatpush1.xpose.msra.mxu0 0.0
    %2573 = vmatprep.subr.mxu0 0.0
    %2574 = vmatpush1.xpose.msra.mxu0 0.0
    %2575 = vmatprep.subr.mxu0 0.0
    %2576 = vmatpush1.xpose.msra.mxu0 0.0
    %2577 = vmatprep.subr.mxu0 0.0
    %2578 = vmatpush1.xpose.msra.mxu0 0.0
    %2579 = vmatprep.subr.mxu0 0.0
    %2580 = vmatpush1.xpose.msra.mxu0 0.0
    %2581 = vmatprep.subr.mxu0 0.0
    %2582 = vmatpush1.xpose.msra.mxu0 0.0
    %2583 = vmatprep.subr.mxu0 0.0
    %2584 = vmatpush1.xpose.msra.mxu0 0.0
    %2585 = vmatprep.subr.mxu0 0.0
    %2586 = vmatpush1.xpose.msra.mxu0 0.0
    %2587 = vmatprep.subr.mxu0 0.0
    %2588 = vmatpush1.xpose.msra.mxu0 0.0
    %2589 = vmatprep.subr.mxu0 0.0
    %2590 = vmatpush1.xpose.msra.mxu0 0.0
    %2591 = vmatprep.subr.mxu0 0.0
    %2592 = vmatpush1.xpose.msra.mxu0 0.0
    %2593 = vmatprep.subr.mxu0 0.0
    %2594 = vmatpush1.xpose.msra.mxu0 0.0
    %2595 = vmatprep.subr.mxu0 0.0
    %2596 = vmatpush1.xpose.msra.mxu0 0.0
    %2597 = vmatprep.subr.mxu0 0.0
    %2598 = vmatpush1.xpose.msra.mxu0 %v2567
    %2599 = vmatprep.subr.mxu0 0.0
    %2600 = vmatpush1.xpose.msra.mxu0 %v2565
    %2601 = vmatprep.subr.mxu0 0.0
    %2602 = vmatpush2.xpose.msra.mxu0 0.0
    %2603 = vmatprep.subr.mxu0 0.0
    %2604 = vmatpush2.xpose.msra.mxu0 0.0
    %2605 = vmatprep.subr.mxu0 0.0
    %2606 = vmatpush2.xpose.msra.mxu0 0.0
    %2607 = vmatprep.subr.mxu0 0.0
    %2608 = vmatpush2.xpose.msra.mxu0 0.0
    %2609 = vmatprep.subr.mxu0 0.0
    %2610 = vmatpush2.xpose.msra.mxu0 0.0
    %2611 = vmatprep.subr.mxu0 0.0
    %2612 = vmatpush2.xpose.msra.mxu0 0.0
    %2613 = vmatprep.subr.mxu0 0.0
    %2614 = vmatpush2.xpose.msra.mxu0 0.0
    %2615 = vmatprep.subr.mxu0 0.0
    %2616 = vmatpush2.xpose.msra.mxu0 0.0
    %2617 = vmatprep.subr.mxu0 0.0
    %2618 = vmatpush2.xpose.msra.mxu0 0.0
    %2619 = vmatprep.subr.mxu0 0.0
    %2620 = vmatpush2.xpose.msra.mxu0 0.0
    %2621 = vmatprep.subr.mxu0 0.0
    %2622 = vmatpush2.xpose.msra.mxu0 0.0
    %2623 = vmatprep.subr.mxu0 0.0
    %2624 = vmatpush2.xpose.msra.mxu0 0.0
    %2625 = vmatprep.subr.mxu0 0.0
    %2626 = vmatpush2.xpose.msra.mxu0 0.0
    %2627 = vmatprep.subr.mxu0 0.0
    %2628 = vmatpush2.xpose.msra.mxu0 0.0
    %2629 = vmatprep.subr.mxu0 0.0
    %2630 = vmatpush2.xpose.msra.mxu0 0.0
    %2631 = vmatprep.subr.mxu0 0.0
    %2632 = vmatpush2.xpose.msra.mxu0 0.0
    %2633 = vmatprep.mubr.f32.mxu0 0.0
    %2634 = vmatmul.mubr.f32.gmra.mxu0 %v2561
    %v2635 = vpop.f32.mrf.mxu0
    %v2636 = vadd.f32 %v508, %v2635
    %v2637 = vpop.f32.mrf.mxu0
    %2638 = vmatprep.mubr.f32.mxu0 0.0
    %2639 = vmatmul.mubr.f32.gmra.mxu0 %v2563
    %v2640 = vpop.f32.mrf.mxu0
    %v2641 = vadd.f32 %v509, %v2640
    %v2642 = vpop.f32.mrf.mxu0
    %2643 = vdwg.mxu0
    %v2644 = vsel %vm895, %v2437, 0
    %v2646 = vsel %vm895, %v2439, 0
    %v2648 = vsel %vm895, %v2451, 0
    %v2650 = vsel %vm895, %v2453, 0
    %2652 = vmatprep.subr.mxu0 0.0
    %2653 = vmatpush1.xpose.msra.mxu0 0.0
    %2654 = vmatprep.subr.mxu0 0.0
    %2655 = vmatpush1.xpose.msra.mxu0 0.0
    %2656 = vmatprep.subr.mxu0 0.0
    %2657 = vmatpush1.xpose.msra.mxu0 0.0
    %2658 = vmatprep.subr.mxu0 0.0
    %2659 = vmatpush1.xpose.msra.mxu0 0.0
    %2660 = vmatprep.subr.mxu0 0.0
    %2661 = vmatpush1.xpose.msra.mxu0 0.0
    %2662 = vmatprep.subr.mxu0 0.0
    %2663 = vmatpush1.xpose.msra.mxu0 0.0
    %2664 = vmatprep.subr.mxu0 0.0
    %2665 = vmatpush1.xpose.msra.mxu0 0.0
    %2666 = vmatprep.subr.mxu0 0.0
    %2667 = vmatpush1.xpose.msra.mxu0 0.0
    %2668 = vmatprep.subr.mxu0 0.0
    %2669 = vmatpush1.xpose.msra.mxu0 0.0
    %2670 = vmatprep.subr.mxu0 0.0
    %2671 = vmatpush1.xpose.msra.mxu0 0.0
    %2672 = vmatprep.subr.mxu0 0.0
    %2673 = vmatpush1.xpose.msra.mxu0 0.0
    %2674 = vmatprep.subr.mxu0 0.0
    %2675 = vmatpush1.xpose.msra.mxu0 0.0
    %2676 = vmatprep.subr.mxu0 0.0
    %2677 = vmatpush1.xpose.msra.mxu0 0.0
    %2678 = vmatprep.subr.mxu0 0.0
    %2679 = vmatpush1.xpose.msra.mxu0 0.0
    %2680 = vmatprep.subr.mxu0 0.0
    %2681 = vmatpush1.xpose.msra.mxu0 %v2650
    %2682 = vmatprep.subr.mxu0 0.0
    %2683 = vmatpush1.xpose.msra.mxu0 %v2648
    %2684 = vmatprep.subr.mxu0 0.0
    %2685 = vmatpush2.xpose.msra.mxu0 0.0
    %2686 = vmatprep.subr.mxu0 0.0
    %2687 = vmatpush2.xpose.msra.mxu0 0.0
    %2688 = vmatprep.subr.mxu0 0.0
    %2689 = vmatpush2.xpose.msra.mxu0 0.0
    %2690 = vmatprep.subr.mxu0 0.0
    %2691 = vmatpush2.xpose.msra.mxu0 0.0
    %2692 = vmatprep.subr.mxu0 0.0
    %2693 = vmatpush2.xpose.msra.mxu0 0.0
    %2694 = vmatprep.subr.mxu0 0.0
    %2695 = vmatpush2.xpose.msra.mxu0 0.0
    %2696 = vmatprep.subr.mxu0 0.0
    %2697 = vmatpush2.xpose.msra.mxu0 0.0
    %2698 = vmatprep.subr.mxu0 0.0
    %2699 = vmatpush2.xpose.msra.mxu0 0.0
    %2700 = vmatprep.subr.mxu0 0.0
    %2701 = vmatpush2.xpose.msra.mxu0 0.0
    %2702 = vmatprep.subr.mxu0 0.0
    %2703 = vmatpush2.xpose.msra.mxu0 0.0
    %2704 = vmatprep.subr.mxu0 0.0
    %2705 = vmatpush2.xpose.msra.mxu0 0.0
    %2706 = vmatprep.subr.mxu0 0.0
    %2707 = vmatpush2.xpose.msra.mxu0 0.0
    %2708 = vmatprep.subr.mxu0 0.0
    %2709 = vmatpush2.xpose.msra.mxu0 0.0
    %2710 = vmatprep.subr.mxu0 0.0
    %2711 = vmatpush2.xpose.msra.mxu0 0.0
    %2712 = vmatprep.subr.mxu0 0.0
    %2713 = vmatpush2.xpose.msra.mxu0 0.0
    %2714 = vmatprep.subr.mxu0 0.0
    %2715 = vmatpush2.xpose.msra.mxu0 0.0
    %2716 = vmatprep.mubr.f32.mxu0 0.0
    %2717 = vmatmul.mubr.f32.gmra.mxu0 %v2644
    %v2718 = vpop.f32.mrf.mxu0
    %v2719 = vadd.f32 %v508, %v2718
    %v2720 = vpop.f32.mrf.mxu0
    %2721 = vmatprep.mubr.f32.mxu0 0.0
    %2722 = vmatmul.mubr.f32.gmra.mxu0 %v2646
    %v2723 = vpop.f32.mrf.mxu0
    %v2724 = vadd.f32 %v509, %v2723
    %v2725 = vpop.f32.mrf.mxu0
    %2726 = vdwg.mxu0
    %v2727 = vsel %vm895, %v2441, 0
    %v2729 = vsel %vm895, %v2443, 0
    %v2731 = vsel %vm895, %v2455, 0
    %v2733 = vsel %vm895, %v2457, 0
    %2735 = vmatprep.subr.mxu0 0.0
    %2736 = vmatpush1.xpose.msra.mxu0 0.0
    %2737 = vmatprep.subr.mxu0 0.0
    %2738 = vmatpush1.xpose.msra.mxu0 0.0
    %2739 = vmatprep.subr.mxu0 0.0
    %2740 = vmatpush1.xpose.msra.mxu0 0.0
    %2741 = vmatprep.subr.mxu0 0.0
    %2742 = vmatpush1.xpose.msra.mxu0 0.0
    %2743 = vmatprep.subr.mxu0 0.0
    %2744 = vmatpush1.xpose.msra.mxu0 0.0
    %2745 = vmatprep.subr.mxu0 0.0
    %2746 = vmatpush1.xpose.msra.mxu0 0.0
    %2747 = vmatprep.subr.mxu0 0.0
    %2748 = vmatpush1.xpose.msra.mxu0 0.0
    %2749 = vmatprep.subr.mxu0 0.0
    %2750 = vmatpush1.xpose.msra.mxu0 0.0
    %2751 = vmatprep.subr.mxu0 0.0
    %2752 = vmatpush1.xpose.msra.mxu0 0.0
    %2753 = vmatprep.subr.mxu0 0.0
    %2754 = vmatpush1.xpose.msra.mxu0 0.0
    %2755 = vmatprep.subr.mxu0 0.0
    %2756 = vmatpush1.xpose.msra.mxu0 0.0
    %2757 = vmatprep.subr.mxu0 0.0
    %2758 = vmatpush1.xpose.msra.mxu0 0.0
    %2759 = vmatprep.subr.mxu0 0.0
    %2760 = vmatpush1.xpose.msra.mxu0 0.0
    %2761 = vmatprep.subr.mxu0 0.0
    %2762 = vmatpush1.xpose.msra.mxu0 0.0
    %2763 = vmatprep.subr.mxu0 0.0
    %2764 = vmatpush1.xpose.msra.mxu0 %v2733
    %2765 = vmatprep.subr.mxu0 0.0
    %2766 = vmatpush1.xpose.msra.mxu0 %v2731
    %2767 = vmatprep.subr.mxu0 0.0
    %2768 = vmatpush2.xpose.msra.mxu0 0.0
    %2769 = vmatprep.subr.mxu0 0.0
    %2770 = vmatpush2.xpose.msra.mxu0 0.0
    %2771 = vmatprep.subr.mxu0 0.0
    %2772 = vmatpush2.xpose.msra.mxu0 0.0
    %2773 = vmatprep.subr.mxu0 0.0
    %2774 = vmatpush2.xpose.msra.mxu0 0.0
    %2775 = vmatprep.subr.mxu0 0.0
    %2776 = vmatpush2.xpose.msra.mxu0 0.0
    %2777 = vmatprep.subr.mxu0 0.0
    %2778 = vmatpush2.xpose.msra.mxu0 0.0
    %2779 = vmatprep.subr.mxu0 0.0
    %2780 = vmatpush2.xpose.msra.mxu0 0.0
    %2781 = vmatprep.subr.mxu0 0.0
    %2782 = vmatpush2.xpose.msra.mxu0 0.0
    %2783 = vmatprep.subr.mxu0 0.0
    %2784 = vmatpush2.xpose.msra.mxu0 0.0
    %2785 = vmatprep.subr.mxu0 0.0
    %2786 = vmatpush2.xpose.msra.mxu0 0.0
    %2787 = vmatprep.subr.mxu0 0.0
    %2788 = vmatpush2.xpose.msra.mxu0 0.0
    %2789 = vmatprep.subr.mxu0 0.0
    %2790 = vmatpush2.xpose.msra.mxu0 0.0
    %2791 = vmatprep.subr.mxu0 0.0
    %2792 = vmatpush2.xpose.msra.mxu0 0.0
    %2793 = vmatprep.subr.mxu0 0.0
    %2794 = vmatpush2.xpose.msra.mxu0 0.0
    %2795 = vmatprep.subr.mxu0 0.0
    %2796 = vmatpush2.xpose.msra.mxu0 0.0
    %2797 = vmatprep.subr.mxu0 0.0
    %2798 = vmatpush2.xpose.msra.mxu0 0.0
    %2799 = vmatprep.mubr.f32.mxu0 0.0
    %2800 = vmatmul.mubr.f32.gmra.mxu0 %v2727
    %v2801 = vpop.f32.mrf.mxu0
    %v2802 = vadd.f32 %v508, %v2801
    %v2803 = vpop.f32.mrf.mxu0
    %2804 = vmatprep.mubr.f32.mxu0 0.0
    %2805 = vmatmul.mubr.f32.gmra.mxu0 %v2729
    %v2806 = vpop.f32.mrf.mxu0
    %v2807 = vadd.f32 %v509, %v2806
    %v2808 = vpop.f32.mrf.mxu0
    %2809 = vdwg.mxu0
    %v2810 = vsel %vm1228, %v2553, -inf
    %2811 = vmax.xlane.f32.xlu0 %v2810
    %v2812 = vpop.xlane.xlu0 %2811
    %v2813 = vsel %vm1228, %v2558, -inf
    %2814 = vmax.xlane.f32.xlu0 %v2813
    %v2815 = vpop.xlane.xlu0 %2814
    %v2816 = vsel %vm1228, %v2636, -inf
    %2817 = vmax.xlane.f32.xlu0 %v2816
    %v2818 = vpop.xlane.xlu0 %2817
    %v2819 = vsel %vm1228, %v2641, -inf
    %2820 = vmax.xlane.f32.xlu0 %v2819
    %v2821 = vpop.xlane.xlu0 %2820
    %v2822 = vsel %vm1228, %v2719, -inf
    %2823 = vmax.xlane.f32.xlu0 %v2822
    %v2824 = vpop.xlane.xlu0 %2823
    %v2825 = vsel %vm1228, %v2724, -inf
    %2826 = vmax.xlane.f32.xlu0 %v2825
    %v2827 = vpop.xlane.xlu0 %2826
    %v2828 = vsel %vm1228, %v2802, -inf
    %2829 = vmax.xlane.f32.xlu0 %v2828
    %v2830 = vpop.xlane.xlu0 %2829
    %v2831 = vsel %vm1228, %v2807, -inf
    %2832 = vmax.xlane.f32.xlu0 %v2831
    %v2833 = vpop.xlane.xlu0 %2832
    %v2834 = vsub.f32 %v2553, %v2812
    %v2835 = vsub.f32 %v2558, %v2815
    %v2836 = vsub.f32 %v2636, %v2818
    %v2837 = vsub.f32 %v2641, %v2821
    %v2838 = vsub.f32 %v2719, %v2824
    %v2839 = vsub.f32 %v2724, %v2827
    %v2840 = vsub.f32 %v2802, %v2830
    %v2841 = vsub.f32 %v2807, %v2833
    %v2842 = vmul.f32 %v2834, 1.442695
    %v2843 = vpow.pop %v2842
    %v2844 = vmul.f32 %v2835, 1.442695
    %v2845 = vpow.pop %v2844
    %v2846 = vmul.f32 %v2836, 1.442695
    %v2847 = vpow.pop %v2846
    %v2848 = vmul.f32 %v2837, 1.442695
    %v2849 = vpow.pop %v2848
    %v2850 = vmul.f32 %v2838, 1.442695
    %v2851 = vpow.pop %v2850
    %v2852 = vmul.f32 %v2839, 1.442695
    %v2853 = vpow.pop %v2852
    %v2854 = vmul.f32 %v2840, 1.442695
    %v2855 = vpow.pop %v2854
    %v2856 = vmul.f32 %v2841, 1.442695
    %v2857 = vpow.pop %v2856
    %v2858 = vsel %vm1228, %v2843, 0.0
    %2859 = vadd.xlane.f32.xlu0 %v2858
    %v2860 = vpop.xlane.xlu0 %2859
    %v2861 = vsel %vm1228, %v2845, 0.0
    %2862 = vadd.xlane.f32.xlu0 %v2861
    %v2863 = vpop.xlane.xlu0 %2862
    %v2864 = vsel %vm1228, %v2847, 0.0
    %2865 = vadd.xlane.f32.xlu0 %v2864
    %v2866 = vpop.xlane.xlu0 %2865
    %v2867 = vsel %vm1228, %v2849, 0.0
    %2868 = vadd.xlane.f32.xlu0 %v2867
    %v2869 = vpop.xlane.xlu0 %2868
    %v2870 = vsel %vm1228, %v2851, 0.0
    %2871 = vadd.xlane.f32.xlu0 %v2870
    %v2872 = vpop.xlane.xlu0 %2871
    %v2873 = vsel %vm1228, %v2853, 0.0
    %2874 = vadd.xlane.f32.xlu0 %v2873
    %v2875 = vpop.xlane.xlu0 %2874
    %v2876 = vsel %vm1228, %v2855, 0.0
    %2877 = vadd.xlane.f32.xlu0 %v2876
    %v2878 = vpop.xlane.xlu0 %2877
    %v2879 = vsel %vm1228, %v2857, 0.0
    %2880 = vadd.xlane.f32.xlu0 %v2879
    %v2881 = vpop.xlane.xlu0 %2880
    %v2882 = vrcp.pop %v2860
    %v2883 = vmul.f32 %v2843, %v2882
    %v2884 = vrcp.pop %v2863
    %v2885 = vmul.f32 %v2845, %v2884
    %v2886 = vrcp.pop %v2866
    %v2887 = vmul.f32 %v2847, %v2886
    %v2888 = vrcp.pop %v2869
    %v2889 = vmul.f32 %v2849, %v2888
    %v2890 = vrcp.pop %v2872
    %v2891 = vmul.f32 %v2851, %v2890
    %v2892 = vrcp.pop %v2875
    %v2893 = vmul.f32 %v2853, %v2892
    %v2894 = vrcp.pop %v2878
    %v2895 = vmul.f32 %v2855, %v2894
    %v2896 = vrcp.pop %v2881
    %v2897 = vmul.f32 %v2857, %v2896
    %v2899 = vsel %vm1228, %v2883, 0
    %v2902 = vsel %vm1228, %v2885, 0
    %2904 = vmatprep.subr.mxu0 0.0
    %2905 = vmatpush1.msra.mxu0 0.0
    %2906 = vmatprep.subr.mxu0 0.0
    %2907 = vmatpush1.msra.mxu0 0.0
    %2908 = vmatprep.subr.mxu0 0.0
    %2909 = vmatpush1.msra.mxu0 0.0
    %2910 = vmatprep.subr.mxu0 0.0
    %2911 = vmatpush1.msra.mxu0 0.0
    %2912 = vmatprep.subr.mxu0 0.0
    %2913 = vmatpush1.msra.mxu0 0.0
    %2914 = vmatprep.subr.mxu0 0.0
    %2915 = vmatpush1.msra.mxu0 0.0
    %2916 = vmatprep.subr.mxu0 0.0
    %2917 = vmatpush1.msra.mxu0 0.0
    %2918 = vmatprep.subr.mxu0 0.0
    %2919 = vmatpush1.msra.mxu0 0.0
    %2920 = vmatprep.subr.mxu0 0.0
    %2921 = vmatpush1.msra.mxu0 0.0
    %2922 = vmatprep.subr.mxu0 0.0
    %2923 = vmatpush1.msra.mxu0 0.0
    %2924 = vmatprep.subr.mxu0 0.0
    %2925 = vmatpush1.msra.mxu0 0.0
    %2926 = vmatprep.subr.mxu0 0.0
    %2927 = vmatpush1.msra.mxu0 0.0
    %2928 = vmatprep.subr.mxu0 0.0
    %2929 = vmatpush1.msra.mxu0 0.0
    %2930 = vmatprep.subr.mxu0 0.0
    %2931 = vmatpush1.msra.mxu0 0.0
    %2932 = vmatprep.subr.mxu0 0.0
    %2933 = vmatpush1.msra.mxu0 %v2427
    %2934 = vmatprep.subr.mxu0 0.0
    %2935 = vmatpush1.msra.mxu0 %v2422
    %2936 = vmatprep.subr.mxu0 0.0
    %2937 = vmatpush2.msra.mxu0 0.0
    %2938 = vmatprep.subr.mxu0 0.0
    %2939 = vmatpush2.msra.mxu0 0.0
    %2940 = vmatprep.subr.mxu0 0.0
    %2941 = vmatpush2.msra.mxu0 0.0
    %2942 = vmatprep.subr.mxu0 0.0
    %2943 = vmatpush2.msra.mxu0 0.0
    %2944 = vmatprep.subr.mxu0 0.0
    %2945 = vmatpush2.msra.mxu0 0.0
    %2946 = vmatprep.subr.mxu0 0.0
    %2947 = vmatpush2.msra.mxu0 0.0
    %2948 = vmatprep.subr.mxu0 0.0
    %2949 = vmatpush2.msra.mxu0 0.0
    %2950 = vmatprep.subr.mxu0 0.0
    %2951 = vmatpush2.msra.mxu0 0.0
    %2952 = vmatprep.subr.mxu0 0.0
    %2953 = vmatpush2.msra.mxu0 0.0
    %2954 = vmatprep.subr.mxu0 0.0
    %2955 = vmatpush2.msra.mxu0 0.0
    %2956 = vmatprep.subr.mxu0 0.0
    %2957 = vmatpush2.msra.mxu0 0.0
    %2958 = vmatprep.subr.mxu0 0.0
    %2959 = vmatpush2.msra.mxu0 0.0
    %2960 = vmatprep.subr.mxu0 0.0
    %2961 = vmatpush2.msra.mxu0 0.0
    %2962 = vmatprep.subr.mxu0 0.0
    %2963 = vmatpush2.msra.mxu0 0.0
    %2964 = vmatprep.subr.mxu0 0.0
    %2965 = vmatpush2.msra.mxu0 0.0
    %2966 = vmatprep.subr.mxu0 0.0
    %2967 = vmatpush2.msra.mxu0 0.0
    %2968 = vmatprep.mubr.f32.mxu0 0.0
    %2969 = vmatmul.mubr.f32.gmra.mxu0 %v2899
    %v2970 = vpop.f32.mrf.mxu0
    %v2971 = vadd.f32 0.0, %v2970
    %v2972 = vpop.f32.mrf.mxu0
    %2973 = vmatprep.mubr.f32.mxu0 0.0
    %2974 = vmatmul.mubr.f32.gmra.mxu0 %v2902
    %v2975 = vpop.f32.mrf.mxu0
    %v2976 = vadd.f32 0.0, %v2975
    %v2977 = vpop.f32.mrf.mxu0
    %2978 = vdwg.mxu0
    %v2980 = vsel %vm1228, %v2887, 0
    %v2983 = vsel %vm1228, %v2889, 0
    %2985 = vmatprep.subr.mxu0 0.0
    %2986 = vmatpush1.msra.mxu0 0.0
    %2987 = vmatprep.subr.mxu0 0.0
    %2988 = vmatpush1.msra.mxu0 0.0
    %2989 = vmatprep.subr.mxu0 0.0
    %2990 = vmatpush1.msra.mxu0 0.0
    %2991 = vmatprep.subr.mxu0 0.0
    %2992 = vmatpush1.msra.mxu0 0.0
    %2993 = vmatprep.subr.mxu0 0.0
    %2994 = vmatpush1.msra.mxu0 0.0
    %2995 = vmatprep.subr.mxu0 0.0
    %2996 = vmatpush1.msra.mxu0 0.0
    %2997 = vmatprep.subr.mxu0 0.0
    %2998 = vmatpush1.msra.mxu0 0.0
    %2999 = vmatprep.subr.mxu0 0.0
    %3000 = vmatpush1.msra.mxu0 0.0
    %3001 = vmatprep.subr.mxu0 0.0
    %3002 = vmatpush1.msra.mxu0 0.0
    %3003 = vmatprep.subr.mxu0 0.0
    %3004 = vmatpush1.msra.mxu0 0.0
    %3005 = vmatprep.subr.mxu0 0.0
    %3006 = vmatpush1.msra.mxu0 0.0
    %3007 = vmatprep.subr.mxu0 0.0
    %3008 = vmatpush1.msra.mxu0 0.0
    %3009 = vmatprep.subr.mxu0 0.0
    %3010 = vmatpush1.msra.mxu0 0.0
    %3011 = vmatprep.subr.mxu0 0.0
    %3012 = vmatpush1.msra.mxu0 0.0
    %3013 = vmatprep.subr.mxu0 0.0
    %3014 = vmatpush1.msra.mxu0 %v2463
    %3015 = vmatprep.subr.mxu0 0.0
    %3016 = vmatpush1.msra.mxu0 %v2461
    %3017 = vmatprep.subr.mxu0 0.0
    %3018 = vmatpush2.msra.mxu0 0.0
    %3019 = vmatprep.subr.mxu0 0.0
    %3020 = vmatpush2.msra.mxu0 0.0
    %3021 = vmatprep.subr.mxu0 0.0
    %3022 = vmatpush2.msra.mxu0 0.0
    %3023 = vmatprep.subr.mxu0 0.0
    %3024 = vmatpush2.msra.mxu0 0.0
    %3025 = vmatprep.subr.mxu0 0.0
    %3026 = vmatpush2.msra.mxu0 0.0
    %3027 = vmatprep.subr.mxu0 0.0
    %3028 = vmatpush2.msra.mxu0 0.0
    %3029 = vmatprep.subr.mxu0 0.0
    %3030 = vmatpush2.msra.mxu0 0.0
    %3031 = vmatprep.subr.mxu0 0.0
    %3032 = vmatpush2.msra.mxu0 0.0
    %3033 = vmatprep.subr.mxu0 0.0
    %3034 = vmatpush2.msra.mxu0 0.0
    %3035 = vmatprep.subr.mxu0 0.0
    %3036 = vmatpush2.msra.mxu0 0.0
    %3037 = vmatprep.subr.mxu0 0.0
    %3038 = vmatpush2.msra.mxu0 0.0
    %3039 = vmatprep.subr.mxu0 0.0
    %3040 = vmatpush2.msra.mxu0 0.0
    %3041 = vmatprep.subr.mxu0 0.0
    %3042 = vmatpush2.msra.mxu0 0.0
    %3043 = vmatprep.subr.mxu0 0.0
    %3044 = vmatpush2.msra.mxu0 0.0
    %3045 = vmatprep.subr.mxu0 0.0
    %3046 = vmatpush2.msra.mxu0 0.0
    %3047 = vmatprep.subr.mxu0 0.0
    %3048 = vmatpush2.msra.mxu0 0.0
    %3049 = vmatprep.mubr.f32.mxu0 0.0
    %3050 = vmatmul.mubr.f32.gmra.mxu0 %v2980
    %v3051 = vpop.f32.mrf.mxu0
    %v3052 = vadd.f32 0.0, %v3051
    %v3053 = vpop.f32.mrf.mxu0
    %3054 = vmatprep.mubr.f32.mxu0 0.0
    %3055 = vmatmul.mubr.f32.gmra.mxu0 %v2983
    %v3056 = vpop.f32.mrf.mxu0
    %v3057 = vadd.f32 0.0, %v3056
    %v3058 = vpop.f32.mrf.mxu0
    %3059 = vdwg.mxu0
    %v3061 = vsel %vm1228, %v2891, 0
    %v3064 = vsel %vm1228, %v2893, 0
    %3066 = vmatprep.subr.mxu0 0.0
    %3067 = vmatpush1.msra.mxu0 0.0
    %3068 = vmatprep.subr.mxu0 0.0
    %3069 = vmatpush1.msra.mxu0 0.0
    %3070 = vmatprep.subr.mxu0 0.0
    %3071 = vmatpush1.msra.mxu0 0.0
    %3072 = vmatprep.subr.mxu0 0.0
    %3073 = vmatpush1.msra.mxu0 0.0
    %3074 = vmatprep.subr.mxu0 0.0
    %3075 = vmatpush1.msra.mxu0 0.0
    %3076 = vmatprep.subr.mxu0 0.0
    %3077 = vmatpush1.msra.mxu0 0.0
    %3078 = vmatprep.subr.mxu0 0.0
    %3079 = vmatpush1.msra.mxu0 0.0
    %3080 = vmatprep.subr.mxu0 0.0
    %3081 = vmatpush1.msra.mxu0 0.0
    %3082 = vmatprep.subr.mxu0 0.0
    %3083 = vmatpush1.msra.mxu0 0.0
    %3084 = vmatprep.subr.mxu0 0.0
    %3085 = vmatpush1.msra.mxu0 0.0
    %3086 = vmatprep.subr.mxu0 0.0
    %3087 = vmatpush1.msra.mxu0 0.0
    %3088 = vmatprep.subr.mxu0 0.0
    %3089 = vmatpush1.msra.mxu0 0.0
    %3090 = vmatprep.subr.mxu0 0.0
    %3091 = vmatpush1.msra.mxu0 0.0
    %3092 = vmatprep.subr.mxu0 0.0
    %3093 = vmatpush1.msra.mxu0 0.0
    %3094 = vmatprep.subr.mxu0 0.0
    %3095 = vmatpush1.msra.mxu0 %v2469
    %3096 = vmatprep.subr.mxu0 0.0
    %3097 = vmatpush1.msra.mxu0 %v2467
    %3098 = vmatprep.subr.mxu0 0.0
    %3099 = vmatpush2.msra.mxu0 0.0
    %3100 = vmatprep.subr.mxu0 0.0
    %3101 = vmatpush2.msra.mxu0 0.0
    %3102 = vmatprep.subr.mxu0 0.0
    %3103 = vmatpush2.msra.mxu0 0.0
    %3104 = vmatprep.subr.mxu0 0.0
    %3105 = vmatpush2.msra.mxu0 0.0
    %3106 = vmatprep.subr.mxu0 0.0
    %3107 = vmatpush2.msra.mxu0 0.0
    %3108 = vmatprep.subr.mxu0 0.0
    %3109 = vmatpush2.msra.mxu0 0.0
    %3110 = vmatprep.subr.mxu0 0.0
    %3111 = vmatpush2.msra.mxu0 0.0
    %3112 = vmatprep.subr.mxu0 0.0
    %3113 = vmatpush2.msra.mxu0 0.0
    %3114 = vmatprep.subr.mxu0 0.0
    %3115 = vmatpush2.msra.mxu0 0.0
    %3116 = vmatprep.subr.mxu0 0.0
    %3117 = vmatpush2.msra.mxu0 0.0
    %3118 = vmatprep.subr.mxu0 0.0
    %3119 = vmatpush2.msra.mxu0 0.0
    %3120 = vmatprep.subr.mxu0 0.0
    %3121 = vmatpush2.msra.mxu0 0.0
    %3122 = vmatprep.subr.mxu0 0.0
    %3123 = vmatpush2.msra.mxu0 0.0
    %3124 = vmatprep.subr.mxu0 0.0
    %3125 = vmatpush2.msra.mxu0 0.0
    %3126 = vmatprep.subr.mxu0 0.0
    %3127 = vmatpush2.msra.mxu0 0.0
    %3128 = vmatprep.subr.mxu0 0.0
    %3129 = vmatpush2.msra.mxu0 0.0
    %3130 = vmatprep.mubr.f32.mxu0 0.0
    %3131 = vmatmul.mubr.f32.gmra.mxu0 %v3061
    %v3132 = vpop.f32.mrf.mxu0
    %v3133 = vadd.f32 0.0, %v3132
    %v3134 = vpop.f32.mrf.mxu0
    %3135 = vmatprep.mubr.f32.mxu0 0.0
    %3136 = vmatmul.mubr.f32.gmra.mxu0 %v3064
    %v3137 = vpop.f32.mrf.mxu0
    %v3138 = vadd.f32 0.0, %v3137
    %v3139 = vpop.f32.mrf.mxu0
    %3140 = vdwg.mxu0
    %v3142 = vsel %vm1228, %v2895, 0
    %v3145 = vsel %vm1228, %v2897, 0
    %3147 = vmatprep.subr.mxu0 0.0
    %3148 = vmatpush1.msra.mxu0 0.0
    %3149 = vmatprep.subr.mxu0 0.0
    %3150 = vmatpush1.msra.mxu0 0.0
    %3151 = vmatprep.subr.mxu0 0.0
    %3152 = vmatpush1.msra.mxu0 0.0
    %3153 = vmatprep.subr.mxu0 0.0
    %3154 = vmatpush1.msra.mxu0 0.0
    %3155 = vmatprep.subr.mxu0 0.0
    %3156 = vmatpush1.msra.mxu0 0.0
    %3157 = vmatprep.subr.mxu0 0.0
    %3158 = vmatpush1.msra.mxu0 0.0
    %3159 = vmatprep.subr.mxu0 0.0
    %3160 = vmatpush1.msra.mxu0 0.0
    %3161 = vmatprep.subr.mxu0 0.0
    %3162 = vmatpush1.msra.mxu0 0.0
    %3163 = vmatprep.subr.mxu0 0.0
    %3164 = vmatpush1.msra.mxu0 0.0
    %3165 = vmatprep.subr.mxu0 0.0
    %3166 = vmatpush1.msra.mxu0 0.0
    %3167 = vmatprep.subr.mxu0 0.0
    %3168 = vmatpush1.msra.mxu0 0.0
    %3169 = vmatprep.subr.mxu0 0.0
    %3170 = vmatpush1.msra.mxu0 0.0
    %3171 = vmatprep.subr.mxu0 0.0
    %3172 = vmatpush1.msra.mxu0 0.0
    %3173 = vmatprep.subr.mxu0 0.0
    %3174 = vmatpush1.msra.mxu0 0.0
    %3175 = vmatprep.subr.mxu0 0.0
    %3176 = vmatpush1.msra.mxu0 %v2475
    %3177 = vmatprep.subr.mxu0 0.0
    %3178 = vmatpush1.msra.mxu0 %v2473
    %3179 = vmatprep.subr.mxu0 0.0
    %3180 = vmatpush2.msra.mxu0 0.0
    %3181 = vmatprep.subr.mxu0 0.0
    %3182 = vmatpush2.msra.mxu0 0.0
    %3183 = vmatprep.subr.mxu0 0.0
    %3184 = vmatpush2.msra.mxu0 0.0
    %3185 = vmatprep.subr.mxu0 0.0
    %3186 = vmatpush2.msra.mxu0 0.0
    %3187 = vmatprep.subr.mxu0 0.0
    %3188 = vmatpush2.msra.mxu0 0.0
    %3189 = vmatprep.subr.mxu0 0.0
    %3190 = vmatpush2.msra.mxu0 0.0
    %3191 = vmatprep.subr.mxu0 0.0
    %3192 = vmatpush2.msra.mxu0 0.0
    %3193 = vmatprep.subr.mxu0 0.0
    %3194 = vmatpush2.msra.mxu0 0.0
    %3195 = vmatprep.subr.mxu0 0.0
    %3196 = vmatpush2.msra.mxu0 0.0
    %3197 = vmatprep.subr.mxu0 0.0
    %3198 = vmatpush2.msra.mxu0 0.0
    %3199 = vmatprep.subr.mxu0 0.0
    %3200 = vmatpush2.msra.mxu0 0.0
    %3201 = vmatprep.subr.mxu0 0.0
    %3202 = vmatpush2.msra.mxu0 0.0
    %3203 = vmatprep.subr.mxu0 0.0
    %3204 = vmatpush2.msra.mxu0 0.0
    %3205 = vmatprep.subr.mxu0 0.0
    %3206 = vmatpush2.msra.mxu0 0.0
    %3207 = vmatprep.subr.mxu0 0.0
    %3208 = vmatpush2.msra.mxu0 0.0
    %3209 = vmatprep.subr.mxu0 0.0
    %3210 = vmatpush2.msra.mxu0 0.0
    %3211 = vmatprep.mubr.f32.mxu0 0.0
    %3212 = vmatmul.mubr.f32.gmra.mxu0 %v3142
    %v3213 = vpop.f32.mrf.mxu0
    %v3214 = vadd.f32 0.0, %v3213
    %v3215 = vpop.f32.mrf.mxu0
    %3216 = vmatprep.mubr.f32.mxu0 0.0
    %3217 = vmatmul.mubr.f32.gmra.mxu0 %v3145
    %v3218 = vpop.f32.mrf.mxu0
    %v3219 = vadd.f32 0.0, %v3218
    %v3220 = vpop.f32.mrf.mxu0
    %3221 = vdwg.mxu0
    %3224 = vrot.lane.b32.xlu0 %v3052, 32
    %v3225 = vpop.permute.xlu0 %3224
    %3226 = vrot.lane.b32.xlu0 %v3057, 32
    %v3227 = vpop.permute.xlu0 %3226
    %3232 = vrot.lane.b32.xlu0 %v3133, 64
    %v3233 = vpop.permute.xlu0 %3232
    %3234 = vrot.lane.b32.xlu0 %v3138, 64
    %v3235 = vpop.permute.xlu0 %3234
    %3240 = vrot.lane.b32.xlu0 %v3214, 96
    %v3241 = vpop.permute.xlu0 %3240
    %3242 = vrot.lane.b32.xlu0 %v3219, 96
    %v3243 = vpop.permute.xlu0 %3242
    %v3246 = vsel %vm895, %v2971, %v3225
    %v3247 = vsel %vm895, %v2976, %v3227
    %v3248 = vsel %vm1667, %v3246, %v3233
    %v3249 = vsel %vm1667, %v3247, %v3235
    %v3250 = vsel %vm1670, %v3248, %v3241
    %v3251 = vsel %vm1670, %v3249, %v3243
    %s3252 = scalar_lea.vmem [#allocation10], 128
    %v3253 = vld [vmem:[%s3252] sm:$0xff]
    %v3254 = vld [vmem:[%s3252 + $0x8] sm:$0xff]
    %v3255 = vld [vmem:[%s3252 + $0x10] sm:$0xff]
    %v3256 = vld [vmem:[%s3252 + $0x18] sm:$0xff]
    %v3257 = vld [vmem:[%s3252 + $0x20] sm:$0xff]
    %v3258 = vld [vmem:[%s3252 + $0x28] sm:$0xff]
    %v3259 = vld [vmem:[%s3252 + $0x30] sm:$0xff]
    %v3260 = vld [vmem:[%s3252 + $0x38] sm:$0xff]
    %v3261 = vld [vmem:[%s3252 + $0x40] sm:$0xff]
    %v3262 = vld [vmem:[%s3252 + $0x48] sm:$0xff]
    %v3263 = vld [vmem:[%s3252 + $0x50] sm:$0xff]
    %v3264 = vld [vmem:[%s3252 + $0x58] sm:$0xff]
    %v3265 = vld [vmem:[%s3252 + $0x60] sm:$0xff]
    %v3266 = vld [vmem:[%s3252 + $0x68] sm:$0xff]
    %v3267 = vld [vmem:[%s3252 + $0x70] sm:$0xff]
    %v3268 = vld [vmem:[%s3252 + $0x78] sm:$0xff]
    %s3269 = scalar_lea.vmem %s13, 1
    %v3270 = vld [vmem:[%s3269] sm:$0x1]
    %v3272 = vlaneseq
    %v3273 = vshrl.u32 %v3272, 7
    %v3274 = vsub.s32 0, %v3273
    %v3275 = vrot.slane %v3270, %v3274
    %3277 = vmatprep.subr.mxu0 0.0
    %3278 = vmatpush1.msra.mxu0 %v3268
    %3279 = vmatprep.subr.mxu0 0.0
    %3280 = vmatpush1.msra.mxu0 %v3267
    %3281 = vmatprep.subr.mxu0 0.0
    %3282 = vmatpush1.msra.mxu0 %v3266
    %3283 = vmatprep.subr.mxu0 0.0
    %3284 = vmatpush1.msra.mxu0 %v3265
    %3285 = vmatprep.subr.mxu0 0.0
    %3286 = vmatpush1.msra.mxu0 %v3264
    %3287 = vmatprep.subr.mxu0 0.0
    %3288 = vmatpush1.msra.mxu0 %v3263
    %3289 = vmatprep.subr.mxu0 0.0
    %3290 = vmatpush1.msra.mxu0 %v3262
    %3291 = vmatprep.subr.mxu0 0.0
    %3292 = vmatpush1.msra.mxu0 %v3261
    %3293 = vmatprep.subr.mxu0 0.0
    %3294 = vmatpush1.msra.mxu0 %v3260
    %3295 = vmatprep.subr.mxu0 0.0
    %3296 = vmatpush1.msra.mxu0 %v3259
    %3297 = vmatprep.subr.mxu0 0.0
    %3298 = vmatpush1.msra.mxu0 %v3258
    %3299 = vmatprep.subr.mxu0 0.0
    %3300 = vmatpush1.msra.mxu0 %v3257
    %3301 = vmatprep.subr.mxu0 0.0
    %3302 = vmatpush1.msra.mxu0 %v3256
    %3303 = vmatprep.subr.mxu0 0.0
    %3304 = vmatpush1.msra.mxu0 %v3255
    %3305 = vmatprep.subr.mxu0 0.0
    %3306 = vmatpush1.msra.mxu0 %v3254
    %3307 = vmatprep.subr.mxu0 0.0
    %3308 = vmatpush1.msra.mxu0 %v3253
    %3309 = vmatprep.subr.mxu0 0.0
    %3310 = vmatpush2.msra.mxu0 0.0
    %3311 = vmatprep.subr.mxu0 0.0
    %3312 = vmatpush2.msra.mxu0 0.0
    %3313 = vmatprep.subr.mxu0 0.0
    %3314 = vmatpush2.msra.mxu0 0.0
    %3315 = vmatprep.subr.mxu0 0.0
    %3316 = vmatpush2.msra.mxu0 0.0
    %3317 = vmatprep.subr.mxu0 0.0
    %3318 = vmatpush2.msra.mxu0 0.0
    %3319 = vmatprep.subr.mxu0 0.0
    %3320 = vmatpush2.msra.mxu0 0.0
    %3321 = vmatprep.subr.mxu0 0.0
    %3322 = vmatpush2.msra.mxu0 0.0
    %3323 = vmatprep.subr.mxu0 0.0
    %3324 = vmatpush2.msra.mxu0 0.0
    %3325 = vmatprep.subr.mxu0 0.0
    %3326 = vmatpush2.msra.mxu0 0.0
    %3327 = vmatprep.subr.mxu0 0.0
    %3328 = vmatpush2.msra.mxu0 0.0
    %3329 = vmatprep.subr.mxu0 0.0
    %3330 = vmatpush2.msra.mxu0 0.0
    %3331 = vmatprep.subr.mxu0 0.0
    %3332 = vmatpush2.msra.mxu0 0.0
    %3333 = vmatprep.subr.mxu0 0.0
    %3334 = vmatpush2.msra.mxu0 0.0
    %3335 = vmatprep.subr.mxu0 0.0
    %3336 = vmatpush2.msra.mxu0 0.0
    %3337 = vmatprep.subr.mxu0 0.0
    %3338 = vmatpush2.msra.mxu0 0.0
    %3339 = vmatprep.subr.mxu0 0.0
    %3340 = vmatpush2.msra.mxu0 0.0
    %3341 = vmatprep.mubr.f32.mxu0 0.0
    %3342 = vmatmul.mubr.f32.gmra.mxu0 %v3250
    %v3343 = vpop.f32.mrf.mxu0
    %v3344 = vadd.f32 %v3275, %v3343
    %v3345 = vpop.f32.mrf.mxu0
    %3346 = vmatprep.mubr.f32.mxu0 0.0
    %3347 = vmatmul.mubr.f32.gmra.mxu0 %v3251
    %v3348 = vpop.f32.mrf.mxu0
    %v3349 = vadd.f32 %v3275, %v3348
    %v3350 = vpop.f32.mrf.mxu0
    %3351 = vdwg.mxu0
    %v3352 = vadd.f32 %v2084, %v3344
    %v3353 = vadd.f32 %v2085, %v3349
    %s3354 = scalar_lea.vmem %s14, 1
    %v3355 = vld [vmem:[%s3354] sm:$0x1]
    %s3356 = scalar_lea.vmem %s15, 1
    %v3357 = vld [vmem:[%s3356] sm:$0x1]
    %3358 = vadd.xlane.f32.xlu0 %v3352
    %v3359 = vpop.xlane.xlu0 %3358
    %3360 = vadd.xlane.f32.xlu0 %v3353
    %v3361 = vpop.xlane.xlu0 %3360
    %v3362 = vmul.f32 %v3359, %v516
    %v3363 = vmul.f32 %v3361, %v516
    %v3364 = vsub.f32 %v3352, %v3362
    %v3365 = vsub.f32 %v3353, %v3363
    %v3366 = vmul.f32 %v3364, %v3364
    %v3367 = vmul.f32 %v3365, %v3365
    %3368 = vadd.xlane.f32.xlu0 %v3366
    %v3369 = vpop.xlane.xlu0 %3368
    %3370 = vadd.xlane.f32.xlu0 %v3367
    %v3371 = vpop.xlane.xlu0 %3370
    %v3372 = vmul.f32 %v3369, %v516
    %v3373 = vmul.f32 %v3371, %v516
    %v3374 = vadd.f32 %v3372, 1e-12
    %v3375 = vadd.f32 %v3373, 1e-12
    %v3376 = vrsqrt.pop %v3374
    %v3377 = vrsqrt.pop %v3375
    %v3378 = vmul.f32 %v3364, %v3376
    %v3379 = vmul.f32 %v3365, %v3377
    %v3381 = vlaneseq
    %v3382 = vshrl.u32 %v3381, 7
    %v3383 = vsub.s32 0, %v3382
    %v3384 = vrot.slane %v3355, %v3383
    %v3386 = vmul.f32 %v3378, %v3384
    %v3387 = vmul.f32 %v3379, %v3384
    %v3389 = vlaneseq
    %v3390 = vshrl.u32 %v3389, 7
    %v3391 = vsub.s32 0, %v3390
    %v3392 = vrot.slane %v3357, %v3391
    %v3394 = vadd.f32 %v3386, %v3392
    %v3395 = vadd.f32 %v3387, %v3392
    %s3396 = scalar_lea.vmem [#allocation11], 256
    %v3397 = vld [vmem:[%s3396] sm:$0xff]
    %v3398 = vld [vmem:[%s3396 + $0x8] sm:$0xff]
    %v3399 = vld [vmem:[%s3396 + $0x10] sm:$0xff]
    %v3400 = vld [vmem:[%s3396 + $0x18] sm:$0xff]
    %v3401 = vld [vmem:[%s3396 + $0x20] sm:$0xff]
    %v3402 = vld [vmem:[%s3396 + $0x28] sm:$0xff]
    %v3403 = vld [vmem:[%s3396 + $0x30] sm:$0xff]
    %v3404 = vld [vmem:[%s3396 + $0x38] sm:$0xff]
    %v3405 = vld [vmem:[%s3396 + $0x40] sm:$0xff]
    %v3406 = vld [vmem:[%s3396 + $0x48] sm:$0xff]
    %v3407 = vld [vmem:[%s3396 + $0x50] sm:$0xff]
    %v3408 = vld [vmem:[%s3396 + $0x58] sm:$0xff]
    %v3409 = vld [vmem:[%s3396 + $0x60] sm:$0xff]
    %v3410 = vld [vmem:[%s3396 + $0x68] sm:$0xff]
    %v3411 = vld [vmem:[%s3396 + $0x70] sm:$0xff]
    %v3412 = vld [vmem:[%s3396 + $0x78] sm:$0xff]
    %v3413 = vld [vmem:[%s3396 + $0x80] sm:$0xff]
    %v3414 = vld [vmem:[%s3396 + $0x88] sm:$0xff]
    %v3415 = vld [vmem:[%s3396 + $0x90] sm:$0xff]
    %v3416 = vld [vmem:[%s3396 + $0x98] sm:$0xff]
    %v3417 = vld [vmem:[%s3396 + $0xa0] sm:$0xff]
    %v3418 = vld [vmem:[%s3396 + $0xa8] sm:$0xff]
    %v3419 = vld [vmem:[%s3396 + $0xb0] sm:$0xff]
    %v3420 = vld [vmem:[%s3396 + $0xb8] sm:$0xff]
    %v3421 = vld [vmem:[%s3396 + $0xc0] sm:$0xff]
    %v3422 = vld [vmem:[%s3396 + $0xc8] sm:$0xff]
    %v3423 = vld [vmem:[%s3396 + $0xd0] sm:$0xff]
    %v3424 = vld [vmem:[%s3396 + $0xd8] sm:$0xff]
    %v3425 = vld [vmem:[%s3396 + $0xe0] sm:$0xff]
    %v3426 = vld [vmem:[%s3396 + $0xe8] sm:$0xff]
    %v3427 = vld [vmem:[%s3396 + $0xf0] sm:$0xff]
    %v3428 = vld [vmem:[%s3396 + $0xf8] sm:$0xff]
    %s3429 = scalar_lea.vmem %s17, 2
    %v3430 = vld [vmem:[%s3429] sm:$0x3]
    %v3432 = vlaneseq
    %v3433 = vshrl.u32 %v3432, 7
    %v3434 = vsub.s32 0, %v3433
    %v3435 = vrot.slane %v3430, %v3434
    %v3436 = vlaneseq
    %v3437 = vshrl.u32 %v3436, 7
    %v3438 = vsub.s32 1, %v3437
    %v3439 = vrot.slane %v3430, %v3438
    %3442 = vmatprep.subr.mxu0 %v3428
    %3443 = vmatpush1.msra.mxu0 %v3427
    %3444 = vmatprep.subr.mxu0 %v3426
    %3445 = vmatpush1.msra.mxu0 %v3425
    %3446 = vmatprep.subr.mxu0 %v3424
    %3447 = vmatpush1.msra.mxu0 %v3423
    %3448 = vmatprep.subr.mxu0 %v3422
    %3449 = vmatpush1.msra.mxu0 %v3421
    %3450 = vmatprep.subr.mxu0 %v3420
    %3451 = vmatpush1.msra.mxu0 %v3419
    %3452 = vmatprep.subr.mxu0 %v3418
    %3453 = vmatpush1.msra.mxu0 %v3417
    %3454 = vmatprep.subr.mxu0 %v3416
    %3455 = vmatpush1.msra.mxu0 %v3415
    %3456 = vmatprep.subr.mxu0 %v3414
    %3457 = vmatpush1.msra.mxu0 %v3413
    %3458 = vmatprep.subr.mxu0 %v3412
    %3459 = vmatpush1.msra.mxu0 %v3411
    %3460 = vmatprep.subr.mxu0 %v3410
    %3461 = vmatpush1.msra.mxu0 %v3409
    %3462 = vmatprep.subr.mxu0 %v3408
    %3463 = vmatpush1.msra.mxu0 %v3407
    %3464 = vmatprep.subr.mxu0 %v3406
    %3465 = vmatpush1.msra.mxu0 %v3405
    %3466 = vmatprep.subr.mxu0 %v3404
    %3467 = vmatpush1.msra.mxu0 %v3403
    %3468 = vmatprep.subr.mxu0 %v3402
    %3469 = vmatpush1.msra.mxu0 %v3401
    %3470 = vmatprep.subr.mxu0 %v3400
    %3471 = vmatpush1.msra.mxu0 %v3399
    %3472 = vmatprep.subr.mxu0 %v3398
    %3473 = vmatpush1.msra.mxu0 %v3397
    %3474 = vmatprep.subr.mxu0 0.0
    %3475 = vmatpush2.msra.mxu0 0.0
    %3476 = vmatprep.subr.mxu0 0.0
    %3477 = vmatpush2.msra.mxu0 0.0
    %3478 = vmatprep.subr.mxu0 0.0
    %3479 = vmatpush2.msra.mxu0 0.0
    %3480 = vmatprep.subr.mxu0 0.0
    %3481 = vmatpush2.msra.mxu0 0.0
    %3482 = vmatprep.subr.mxu0 0.0
    %3483 = vmatpush2.msra.mxu0 0.0
    %3484 = vmatprep.subr.mxu0 0.0
    %3485 = vmatpush2.msra.mxu0 0.0
    %3486 = vmatprep.subr.mxu0 0.0
    %3487 = vmatpush2.msra.mxu0 0.0
    %3488 = vmatprep.subr.mxu0 0.0
    %3489 = vmatpush2.msra.mxu0 0.0
    %3490 = vmatprep.subr.mxu0 0.0
    %3491 = vmatpush2.msra.mxu0 0.0
    %3492 = vmatprep.subr.mxu0 0.0
    %3493 = vmatpush2.msra.mxu0 0.0
    %3494 = vmatprep.subr.mxu0 0.0
    %3495 = vmatpush2.msra.mxu0 0.0
    %3496 = vmatprep.subr.mxu0 0.0
    %3497 = vmatpush2.msra.mxu0 0.0
    %3498 = vmatprep.subr.mxu0 0.0
    %3499 = vmatpush2.msra.mxu0 0.0
    %3500 = vmatprep.subr.mxu0 0.0
    %3501 = vmatpush2.msra.mxu0 0.0
    %3502 = vmatprep.subr.mxu0 0.0
    %3503 = vmatpush2.msra.mxu0 0.0
    %3504 = vmatprep.subr.mxu0 0.0
    %3505 = vmatpush2.msra.mxu0 0.0
    %3506 = vmatprep.mubr.f32.mxu0 0.0
    %3507 = vmatmul.mubr.f32.gmra.mxu0 %v3394
    %v3508 = vpop.f32.mrf.mxu0
    %v3509 = vadd.f32 %v3435, %v3508
    %v3510 = vpop.f32.mrf.mxu0
    %v3511 = vadd.f32 %v3439, %v3510
    %3512 = vmatprep.mubr.f32.mxu0 0.0
    %3513 = vmatmul.mubr.f32.gmra.mxu0 %v3395
    %v3514 = vpop.f32.mrf.mxu0
    %v3515 = vadd.f32 %v3435, %v3514
    %v3516 = vpop.f32.mrf.mxu0
    %v3517 = vadd.f32 %v3439, %v3516
    %3518 = vdwg.mxu0
    %v3519 = vmul.f32 %v3509, 0.5
    %v3520 = vmul.f32 %v3511, 0.5
    %v3521 = vmul.f32 %v3515, 0.5
    %v3522 = vmul.f32 %v3517, 0.5
    %v3523 = vmul.f32 %v3509, 0.044715
    %v3524 = vmul.f32 %v3511, 0.044715
    %v3525 = vmul.f32 %v3515, 0.044715
    %v3526 = vmul.f32 %v3517, 0.044715
    %v3527 = vmul.f32 %v3523, %v3509
    %v3528 = vmul.f32 %v3524, %v3511
    %v3529 = vmul.f32 %v3525, %v3515
    %v3530 = vmul.f32 %v3526, %v3517
    %v3531 = vmul.f32 %v3527, %v3509
    %v3532 = vmul.f32 %v3528, %v3511
    %v3533 = vmul.f32 %v3529, %v3515
    %v3534 = vmul.f32 %v3530, %v3517
    %v3535 = vadd.f32 %v3509, %v3531
    %v3536 = vadd.f32 %v3511, %v3532
    %v3537 = vadd.f32 %v3515, %v3533
    %v3538 = vadd.f32 %v3517, %v3534
    %v3539 = vmul.f32 %v3535, 0.7978846
    %v3540 = vmul.f32 %v3536, 0.7978846
    %v3541 = vmul.f32 %v3537, 0.7978846
    %v3542 = vmul.f32 %v3538, 0.7978846
    %v3543 = vtanh.pop %v3539
    %v3544 = vtanh.pop %v3540
    %v3545 = vtanh.pop %v3541
    %v3546 = vtanh.pop %v3542
    %v3547 = vadd.f32 %v3543, 1.0
    %v3548 = vadd.f32 %v3544, 1.0
    %v3549 = vadd.f32 %v3545, 1.0
    %v3550 = vadd.f32 %v3546, 1.0
    %v3551 = vmul.f32 %v3519, %v3547
    %v3552 = vmul.f32 %v3520, %v3548
    %v3553 = vmul.f32 %v3521, %v3549
    %v3554 = vmul.f32 %v3522, %v3550
    %s3555 = scalar_lea.vmem [#allocation13], 256
    %v3556 = vld [vmem:[%s3555] sm:$0xff]
    %v3557 = vld [vmem:[%s3555 + $0x8] sm:$0xff]
    %v3558 = vld [vmem:[%s3555 + $0x10] sm:$0xff]
    %v3559 = vld [vmem:[%s3555 + $0x18] sm:$0xff]
    %v3560 = vld [vmem:[%s3555 + $0x20] sm:$0xff]
    %v3561 = vld [vmem:[%s3555 + $0x28] sm:$0xff]
    %v3562 = vld [vmem:[%s3555 + $0x30] sm:$0xff]
    %v3563 = vld [vmem:[%s3555 + $0x38] sm:$0xff]
    %v3564 = vld [vmem:[%s3555 + $0x40] sm:$0xff]
    %v3565 = vld [vmem:[%s3555 + $0x48] sm:$0xff]
    %v3566 = vld [vmem:[%s3555 + $0x50] sm:$0xff]
    %v3567 = vld [vmem:[%s3555 + $0x58] sm:$0xff]
    %v3568 = vld [vmem:[%s3555 + $0x60] sm:$0xff]
    %v3569 = vld [vmem:[%s3555 + $0x68] sm:$0xff]
    %v3570 = vld [vmem:[%s3555 + $0x70] sm:$0xff]
    %v3571 = vld [vmem:[%s3555 + $0x78] sm:$0xff]
    %v3572 = vld [vmem:[%s3555 + $0x80] sm:$0xff]
    %v3573 = vld [vmem:[%s3555 + $0x88] sm:$0xff]
    %v3574 = vld [vmem:[%s3555 + $0x90] sm:$0xff]
    %v3575 = vld [vmem:[%s3555 + $0x98] sm:$0xff]
    %v3576 = vld [vmem:[%s3555 + $0xa0] sm:$0xff]
    %v3577 = vld [vmem:[%s3555 + $0xa8] sm:$0xff]
    %v3578 = vld [vmem:[%s3555 + $0xb0] sm:$0xff]
    %v3579 = vld [vmem:[%s3555 + $0xb8] sm:$0xff]
    %v3580 = vld [vmem:[%s3555 + $0xc0] sm:$0xff]
    %v3581 = vld [vmem:[%s3555 + $0xc8] sm:$0xff]
    %v3582 = vld [vmem:[%s3555 + $0xd0] sm:$0xff]
    %v3583 = vld [vmem:[%s3555 + $0xd8] sm:$0xff]
    %v3584 = vld [vmem:[%s3555 + $0xe0] sm:$0xff]
    %v3585 = vld [vmem:[%s3555 + $0xe8] sm:$0xff]
    %v3586 = vld [vmem:[%s3555 + $0xf0] sm:$0xff]
    %v3587 = vld [vmem:[%s3555 + $0xf8] sm:$0xff]
    %s3588 = scalar_lea.vmem %s19, 1
    %v3589 = vld [vmem:[%s3588] sm:$0x1]
    %v3591 = vlaneseq
    %v3592 = vshrl.u32 %v3591, 7
    %v3593 = vsub.s32 0, %v3592
    %v3594 = vrot.slane %v3589, %v3593
    %3596 = vmatprep.subr.mxu0 0.0
    %3597 = vmatpush1.msra.mxu0 %v3571
    %3598 = vmatprep.subr.mxu0 0.0
    %3599 = vmatpush1.msra.mxu0 %v3570
    %3600 = vmatprep.subr.mxu0 0.0
    %3601 = vmatpush1.msra.mxu0 %v3569
    %3602 = vmatprep.subr.mxu0 0.0
    %3603 = vmatpush1.msra.mxu0 %v3568
    %3604 = vmatprep.subr.mxu0 0.0
    %3605 = vmatpush1.msra.mxu0 %v3567
    %3606 = vmatprep.subr.mxu0 0.0
    %3607 = vmatpush1.msra.mxu0 %v3566
    %3608 = vmatprep.subr.mxu0 0.0
    %3609 = vmatpush1.msra.mxu0 %v3565
    %3610 = vmatprep.subr.mxu0 0.0
    %3611 = vmatpush1.msra.mxu0 %v3564
    %3612 = vmatprep.subr.mxu0 0.0
    %3613 = vmatpush1.msra.mxu0 %v3563
    %3614 = vmatprep.subr.mxu0 0.0
    %3615 = vmatpush1.msra.mxu0 %v3562
    %3616 = vmatprep.subr.mxu0 0.0
    %3617 = vmatpush1.msra.mxu0 %v3561
    %3618 = vmatprep.subr.mxu0 0.0
    %3619 = vmatpush1.msra.mxu0 %v3560
    %3620 = vmatprep.subr.mxu0 0.0
    %3621 = vmatpush1.msra.mxu0 %v3559
    %3622 = vmatprep.subr.mxu0 0.0
    %3623 = vmatpush1.msra.mxu0 %v3558
    %3624 = vmatprep.subr.mxu0 0.0
    %3625 = vmatpush1.msra.mxu0 %v3557
    %3626 = vmatprep.subr.mxu0 0.0
    %3627 = vmatpush1.msra.mxu0 %v3556
    %3628 = vmatprep.subr.mxu0 0.0
    %3629 = vmatpush2.msra.mxu0 %v3587
    %3630 = vmatprep.subr.mxu0 0.0
    %3631 = vmatpush2.msra.mxu0 %v3586
    %3632 = vmatprep.subr.mxu0 0.0
    %3633 = vmatpush2.msra.mxu0 %v3585
    %3634 = vmatprep.subr.mxu0 0.0
    %3635 = vmatpush2.msra.mxu0 %v3584
    %3636 = vmatprep.subr.mxu0 0.0
    %3637 = vmatpush2.msra.mxu0 %v3583
    %3638 = vmatprep.subr.mxu0 0.0
    %3639 = vmatpush2.msra.mxu0 %v3582
    %3640 = vmatprep.subr.mxu0 0.0
    %3641 = vmatpush2.msra.mxu0 %v3581
    %3642 = vmatprep.subr.mxu0 0.0
    %3643 = vmatpush2.msra.mxu0 %v3580
    %3644 = vmatprep.subr.mxu0 0.0
    %3645 = vmatpush2.msra.mxu0 %v3579
    %3646 = vmatprep.subr.mxu0 0.0
    %3647 = vmatpush2.msra.mxu0 %v3578
    %3648 = vmatprep.subr.mxu0 0.0
    %3649 = vmatpush2.msra.mxu0 %v3577
    %3650 = vmatprep.subr.mxu0 0.0
    %3651 = vmatpush2.msra.mxu0 %v3576
    %3652 = vmatprep.subr.mxu0 0.0
    %3653 = vmatpush2.msra.mxu0 %v3575
    %3654 = vmatprep.subr.mxu0 0.0
    %3655 = vmatpush2.msra.mxu0 %v3574
    %3656 = vmatprep.subr.mxu0 0.0
    %3657 = vmatpush2.msra.mxu0 %v3573
    %3658 = vmatprep.subr.mxu0 0.0
    %3659 = vmatpush2.msra.mxu0 %v3572
    %3660 = vmatprep.mubr.f32.mxu0 %v3552
    %3661 = vmatmul.mubr.f32.gmra.mxu0 %v3551
    %v3662 = vpop.f32.mrf.mxu0
    %v3663 = vadd.f32 %v3594, %v3662
    %v3664 = vpop.f32.mrf.mxu0
    %3665 = vmatprep.mubr.f32.mxu0 %v3554
    %3666 = vmatmul.mubr.f32.gmra.mxu0 %v3553
    %v3667 = vpop.f32.mrf.mxu0
    %v3668 = vadd.f32 %v3594, %v3667
    %v3669 = vpop.f32.mrf.mxu0
    %3670 = vdwg.mxu0
    %v3671 = vadd.f32 %v3352, %v3663
    %v3672 = vadd.f32 %v3353, %v3668
    %v3674 = vrot.slane %v3672, 7
    %vm3676 = vcmask 1040384
    %v3677 = vsel %vm3676, %v3671, %v3674
    %v3678 = vld [vmem:[%s20] sm:$0x1]
    %v3679 = vld [vmem:[%s21] sm:$0x1]
    %vm3680 = vcmask 1041408
    %v3681 = vsel %vm3680, %v3677, 0.0
    %3682 = vadd.xlane.f32.xlu0 %v3681
    %v3683 = vpop.xlane.xlu0 %3682
    %v3684 = vmul.f32 %v3683, %v516
    %v3685 = vsub.f32 %v3677, %v3684
    %v3686 = vmul.f32 %v3685, %v3685
    %v3687 = vsel %vm3680, %v3686, 0.0
    %3688 = vadd.xlane.f32.xlu0 %v3687
    %v3689 = vpop.xlane.xlu0 %3688
    %v3690 = vmul.f32 %v3689, %v516
    %v3691 = vadd.f32 %v3690, 1e-12
    %v3692 = vrsqrt.pop %v3691
    %v3693 = vmul.f32 %v3685, %v3692
    %v3695 = vlaneseq
    %v3696 = vshrl.u32 %v3695, 7
    %v3697 = vsub.s32 0, %v3696
    %v3698 = vrot.slane %v3678, %v3697
    %v3700 = vmul.f32 %v3693, %v3698
    %v3702 = vlaneseq
    %v3703 = vshrl.u32 %v3702, 7
    %v3704 = vsub.s32 0, %v3703
    %v3705 = vrot.slane %v3679, %v3704
    %v3707 = vadd.f32 %v3700, %v3705
    %v3708 = vld [vmem:[%s22] sm:$0xff]
    %v3709 = vld [vmem:[%s22 + $0x8] sm:$0xff]
    %v3710 = vld [vmem:[%s22 + $0x10] sm:$0xff]
    %v3711 = vld [vmem:[%s22 + $0x18] sm:$0xff]
    %v3712 = vld [vmem:[%s22 + $0x20] sm:$0xff]
    %v3713 = vld [vmem:[%s22 + $0x28] sm:$0xff]
    %v3714 = vld [vmem:[%s22 + $0x30] sm:$0xff]
    %v3715 = vld [vmem:[%s22 + $0x38] sm:$0xff]
    %v3716 = vld [vmem:[%s22 + $0x40] sm:$0xff]
    %v3717 = vld [vmem:[%s22 + $0x48] sm:$0xff]
    %v3718 = vld [vmem:[%s22 + $0x50] sm:$0xff]
    %v3719 = vld [vmem:[%s22 + $0x58] sm:$0xff]
    %v3720 = vld [vmem:[%s22 + $0x60] sm:$0xff]
    %v3721 = vld [vmem:[%s22 + $0x68] sm:$0xff]
    %v3722 = vld [vmem:[%s22 + $0x70] sm:$0xff]
    %v3723 = vld [vmem:[%s22 + $0x78] sm:$0xff]
    %v3724 = vld [vmem:[%s23] sm:$0x1]
    %v3726 = vlaneseq
    %v3727 = vshrl.u32 %v3726, 7
    %v3728 = vsub.s32 0, %v3727
    %v3729 = vrot.slane %v3724, %v3728
    %3731 = vmatprep.subr.mxu0 0.0
    %3732 = vmatpush1.msra.mxu0 %v3723
    %3733 = vmatprep.subr.mxu0 0.0
    %3734 = vmatpush1.msra.mxu0 %v3722
    %3735 = vmatprep.subr.mxu0 0.0
    %3736 = vmatpush1.msra.mxu0 %v3721
    %3737 = vmatprep.subr.mxu0 0.0
    %3738 = vmatpush1.msra.mxu0 %v3720
    %3739 = vmatprep.subr.mxu0 0.0
    %3740 = vmatpush1.msra.mxu0 %v3719
    %3741 = vmatprep.subr.mxu0 0.0
    %3742 = vmatpush1.msra.mxu0 %v3718
    %3743 = vmatprep.subr.mxu0 0.0
    %3744 = vmatpush1.msra.mxu0 %v3717
    %3745 = vmatprep.subr.mxu0 0.0
    %3746 = vmatpush1.msra.mxu0 %v3716
    %3747 = vmatprep.subr.mxu0 0.0
    %3748 = vmatpush1.msra.mxu0 %v3715
    %3749 = vmatprep.subr.mxu0 0.0
    %3750 = vmatpush1.msra.mxu0 %v3714
    %3751 = vmatprep.subr.mxu0 0.0
    %3752 = vmatpush1.msra.mxu0 %v3713
    %3753 = vmatprep.subr.mxu0 0.0
    %3754 = vmatpush1.msra.mxu0 %v3712
    %3755 = vmatprep.subr.mxu0 0.0
    %3756 = vmatpush1.msra.mxu0 %v3711
    %3757 = vmatprep.subr.mxu0 0.0
    %3758 = vmatpush1.msra.mxu0 %v3710
    %3759 = vmatprep.subr.mxu0 0.0
    %3760 = vmatpush1.msra.mxu0 %v3709
    %3761 = vmatprep.subr.mxu0 0.0
    %3762 = vmatpush1.msra.mxu0 %v3708
    %3763 = vmatprep.subr.mxu0 0.0
    %3764 = vmatpush2.msra.mxu0 0.0
    %3765 = vmatprep.subr.mxu0 0.0
    %3766 = vmatpush2.msra.mxu0 0.0
    %3767 = vmatprep.subr.mxu0 0.0
    %3768 = vmatpush2.msra.mxu0 0.0
    %3769 = vmatprep.subr.mxu0 0.0
    %3770 = vmatpush2.msra.mxu0 0.0
    %3771 = vmatprep.subr.mxu0 0.0
    %3772 = vmatpush2.msra.mxu0 0.0
    %3773 = vmatprep.subr.mxu0 0.0
    %3774 = vmatpush2.msra.mxu0 0.0
    %3775 = vmatprep.subr.mxu0 0.0
    %3776 = vmatpush2.msra.mxu0 0.0
    %3777 = vmatprep.subr.mxu0 0.0
    %3778 = vmatpush2.msra.mxu0 0.0
    %3779 = vmatprep.subr.mxu0 0.0
    %3780 = vmatpush2.msra.mxu0 0.0
    %3781 = vmatprep.subr.mxu0 0.0
    %3782 = vmatpush2.msra.mxu0 0.0
    %3783 = vmatprep.subr.mxu0 0.0
    %3784 = vmatpush2.msra.mxu0 0.0
    %3785 = vmatprep.subr.mxu0 0.0
    %3786 = vmatpush2.msra.mxu0 0.0
    %3787 = vmatprep.subr.mxu0 0.0
    %3788 = vmatpush2.msra.mxu0 0.0
    %3789 = vmatprep.subr.mxu0 0.0
    %3790 = vmatpush2.msra.mxu0 0.0
    %3791 = vmatprep.subr.mxu0 0.0
    %3792 = vmatpush2.msra.mxu0 0.0
    %3793 = vmatprep.subr.mxu0 0.0
    %3794 = vmatpush2.msra.mxu0 0.0
    %3795 = vmatprep.mubr.f32.mxu0 0.0
    %3796 = vmatmul.mubr.f32.gmra.mxu0 %v3707
    %v3797 = vpop.f32.mrf.mxu0
    %v3798 = vadd.f32 %v3729, %v3797
    %v3799 = vpop.f32.mrf.mxu0
    %3800 = vdwg.mxu0
    %vm3801 = vcmask 123904
    %3802 = vst.msk [vmem:[#allocation14] sm:$0x3] %vm3801, %v3798
    // Predicated region
    $region126: #{tpu_custom_call.1} parent=1 // pred_check
      _
    $region127: #{tpu_custom_call.1} parent=1 // pred_check_branch
      %3804 = sbr.rel (0) target = $region129
    $region128: #{tpu_custom_call.1} parent=1 // pred_region
      %s3806 = ssub.s32 32, 32
      %3807 = vsyncadd [#allocation4], %s3806
      %s3809 = sshll.u32 [#allocation14], 4
      %s3810 = int_to_ptr.vmem [resolvable:$true] %s3809
      %3812 = dma.vmem_to_hbm [thread:$0]  %s3810, 32, %s24, [#allocation4]
    $region129: #{tpu_custom_call.1} parent=1 // pred_fallthru
      _
    // Predicated region
    $region130: #{tpu_custom_call.1} parent=1 // pred_check
      _
    $region131: #{tpu_custom_call.1} parent=1 // pred_check_branch
      %3814 = sbr.rel (0) target = $region133
    $region132: #{tpu_custom_call.1} parent=1 // pred_region
      %3815 = dma.done [#allocation4], 32
    $region133: #{tpu_custom_call.1} parent=1 // pred_fallthru
      _
    %3816 = vsyncpa [#allocation3], 1
    %3817 = vsyncpa [#allocation6], 1
    %3818 = vsyncpa [#allocation9], 1
    %3819 = vsyncpa [#allocation12], 1
    %3820 = vsyncpa [#allocation4], 1

</llo_original>
